<compile_context>
chip_gen: v5e
topology: v5e:2x2
jax: 0.10.0
libtpu: 0.0.40
codegen_flags: <defaults>
</compile_context>

<pallas_src>
import numpy as np
import jax
import jax.numpy as jnp
from jax import lax
from jax.experimental import pallas as pl
from jax.experimental.pallas import tpu as pltpu

KSIZE = 7
PAD = 3
LANES = 128
VMEM_LIMIT = 48 * 1024 * 1024


def _round_up(x, m):
    return (x + m - 1) // m * m


def _pad_last(a, n):
    """Zero-pad the last dim of `a` up to size n."""
    p = n - a.shape[-1]
    if p == 0:
        return a
    cfg = [(0, 0)] * (a.ndim - 1) + [(0, p)]
    return jnp.pad(a, cfg)


# ---------------------------------------------------------------------------
# im2col glue (XLA side).
# TODO(synk): move im2col into the Pallas kernel (build the 49 taps from a
# VMEM-resident padded input tile) to remove the remaining HBM amplification;
# patches are materialized in bf16 today to halve that traffic.
# ---------------------------------------------------------------------------
def _im2col_pooled(x_nhwc, ksize=KSIZE, pad=PAD):
    """Returns (4, N*Ho*Wo, ksize*ksize*C) pooled-offset im2col patches.

    Leading axis enumerates the 2x2 max-pool offsets (a, b); rows are ordered
    (n, i, j); the K index is (dy, dx, ci) -- matching a conv weight flattened
    from (kH, kW, Cin, Cout).
    """
    N, H, W, C = x_nhwc.shape
    Ho, Wo = H // 2, W // 2
    xp = jnp.pad(x_nhwc, ((0, 0), (pad, pad), (pad, pad), (0, 0)))
    blocks = []
    for a in range(2):
        for b in range(2):
            taps = []
            for dy in range(ksize):
                for dx in range(ksize):
                    sl = xp[:, a + dy: a + dy + H: 2, b + dx: b + dx + W: 2, :]
                    taps.append(sl)                          # (N, Ho, Wo, C)
            p = jnp.stack(taps, axis=3)                      # (N, Ho, Wo, k*k, C)
            blocks.append(p.reshape(N * Ho * Wo, ksize * ksize * C))
    return jnp.stack(blocks, axis=0)


# ---------------------------------------------------------------------------
# Kernel 1: conv-as-matmul + 2x2 max-pool + bias + ReLU (gridded over rows)
# ---------------------------------------------------------------------------
def _conv_pool_relu_kernel(patches_ref, w_ref, b_ref, out_ref):
    # patches_ref: (4, TR, K) bf16 ; w_ref: (K, 128) bf16 ; b_ref: (1, 128) f32
    # out_ref: (TR, 128) bf16
    P, TR, K = patches_ref.shape
    Cout = out_ref.shape[-1]
    p = patches_ref[...].reshape(P * TR, K)          # 4 pool offsets stacked on M
    y = jnp.dot(p, w_ref[...], preferred_element_type=jnp.float32)
    y = jnp.max(y.reshape(P, TR, Cout), axis=0)      # 2x2 max-pool over offsets
    y = y + b_ref[...]                               # shared bias after max (==)
    out_ref[...] = jnp.maximum(y, 0.0).astype(out_ref.dtype)   # ReLU


def conv_pool_relu(patches, w_mat, b, *, tile_r=1024):
    P, R, K = patches.shape
    Cp = w_mat.shape[1]
    tile_r = min(tile_r, _round_up(R, 16))           # 16-aligned (bf16 packing)
    r_pad = _round_up(R, tile_r)
    if r_pad != R:
        patches = jnp.pad(patches, ((0, 0), (0, r_pad - R), (0, 0)))
    out = pl.pallas_call(
        _conv_pool_relu_kernel,
        out_shape=jax.ShapeDtypeStruct((r_pad, Cp), jnp.bfloat16),
        grid_spec=pltpu.PrefetchScalarGridSpec(
            num_scalar_prefetch=0,
            grid=(r_pad // tile_r,),
            in_specs=[
                pl.BlockSpec((P, tile_r, K), lambda i: (0, i, 0)),
                pl.BlockSpec((K, Cp), lambda i: (0, 0)),   # weights stay resident
                pl.BlockSpec((1, Cp), lambda i: (0, 0)),
            ],
            out_specs=pl.BlockSpec((tile_r, Cp), lambda i: (i, 0)),
        ),
        compiler_params=pltpu.CompilerParams(
            dimension_semantics=("parallel",),
            vmem_limit_bytes=VMEM_LIMIT),
    )(patches, w_mat, b)
    return out[:R]


# ---------------------------------------------------------------------------
# Kernel 2: fc1 + ReLU + fc2 + log_softmax (gridded over batch)
# ---------------------------------------------------------------------------
def _mlp_logsoftmax_kernel(x_ref, w1_ref, b1_ref, w2_ref, b2_ref, out_ref):
    h = jnp.dot(x_ref[...], w1_ref[...], preferred_element_type=jnp.float32)
    h = jnp.maximum(h + b1_ref[...], 0.0).astype(w2_ref.dtype)      # relu(fc1)
    logits = jnp.dot(h, w2_ref[...],
                     preferred_element_type=jnp.float32) + b2_ref[...]
    m = jnp.max(logits, axis=-1, keepdims=True)                     # log_softmax
    z = logits - m
    lse = jnp.log(jnp.sum(jnp.exp(z), axis=-1, keepdims=True))
    out_ref[...] = z - lse


def mlp_logsoftmax(x, w1, b1, w2, b2, *, tile_n=256):
    N, K1 = x.shape
    H = w1.shape[1]
    C = w2.shape[1]
    tile_n = min(tile_n, _round_up(N, 16))
    n_pad = _round_up(N, tile_n)
    if n_pad != N:
        x = jnp.pad(x, ((0, n_pad - N), (0, 0)))
    out = pl.pallas_call(
        _mlp_logsoftmax_kernel,
        out_shape=jax.ShapeDtypeStruct((n_pad, C), jnp.float32),
        grid_spec=pltpu.PrefetchScalarGridSpec(
            num_scalar_prefetch=0,
            grid=(n_pad // tile_n,),
            in_specs=[
                pl.BlockSpec((tile_n, K1), lambda i: (i, 0)),
                pl.BlockSpec((K1, H), lambda i: (0, 0)),   # weights stay resident
                pl.BlockSpec((1, H), lambda i: (0, 0)),
                pl.BlockSpec((H, C), lambda i: (0, 0)),
                pl.BlockSpec((1, C), lambda i: (0, 0)),
            ],
            out_specs=pl.BlockSpec((tile_n, C), lambda i: (i, 0)),
        ),
        compiler_params=pltpu.CompilerParams(
            dimension_semantics=("parallel",),
            vmem_limit_bytes=VMEM_LIMIT),
    )(x, w1, b1, w2, b2)
    return out[:N]


# ---------------------------------------------------------------------------
# Params / forward
# ---------------------------------------------------------------------------
def init_params(key):
    ks = jax.random.split(key, 8)
    s = 0.05
    p = {}
    p["conv1_w"] = s * jax.random.normal(ks[0], (KSIZE, KSIZE, 1, 10), jnp.float32)
    p["conv1_b"] = s * jax.random.normal(ks[1], (1, 10), jnp.float32)
    p["conv2_w"] = s * jax.random.normal(ks[2], (KSIZE, KSIZE, 10, 20), jnp.float32)
    p["conv2_b"] = s * jax.random.normal(ks[3], (1, 20), jnp.float32)
    # fc1_w rows are stored in NHWC (h, w, c) flatten order: this is PyTorch's
    # fc1.weight.T with its rows permuted by the fixed NCHW->NHWC flatten
    # permutation (same forward-pass family, permutation folded into the weight
    # once at init so no activation transpose is needed at run time).
    p["fc1_w"] = s * jax.random.normal(ks[4], (7 * 7 * 20, 400), jnp.float32)
    p["fc1_b"] = s * jax.random.normal(ks[5], (1, 400), jnp.float32)
    p["fc2_w"] = s * jax.random.normal(ks[6], (400, 10), jnp.float32)
    p["fc2_b"] = s * jax.random.normal(ks[7], (1, 10), jnp.float32)
    return p


@jax.jit
def net_forward(params, x_nchw):
    # bn1/bn2 are unused in the PyTorch forward().
    # TODO(synk): training-mode Dropout2d (per-channel mask via pltpu PRNG) not
    # implemented; eval-mode (identity) semantics are used.
    N = x_nchw.shape[0]
    x = jnp.transpose(x_nchw, (0, 2, 3, 1)).astype(jnp.bfloat16)    # NCHW -> NHWC

    # stage 1: relu(max_pool2(conv1(x)))
    p1 = _im2col_pooled(x)                                          # (4, N*196, 49) bf16
    w1m = _pad_last(params["conv1_w"].reshape(KSIZE * KSIZE * 1, 10),
                    LANES).astype(jnp.bfloat16)                     # (49, 128)
    b1m = _pad_last(params["conv1_b"], LANES)                       # (1, 128) f32
    y1 = conv_pool_relu(p1, w1m, b1m)                               # (N*196, 128) bf16
    y1 = y1[:, :10].reshape(N, 14, 14, 10)

    # stage 2: relu(max_pool2(dropout2d(conv2(x))))   (dropout = identity, eval)
    p2 = _im2col_pooled(y1)                                         # (4, N*49, 490) bf16
    w2m = _pad_last(params["conv2_w"].reshape(KSIZE * KSIZE * 10, 20),
                    LANES).astype(jnp.bfloat16)                     # (490, 128)
    b2m = _pad_last(params["conv2_b"], LANES)                       # (1, 128) f32
    y2 = conv_pool_relu(p2, w2m, b2m)                               # (N*49, 128) bf16
    # NHWC flatten; the NCHW-order permutation is already folded into fc1_w.
    y2 = y2[:, :20].reshape(N, 7 * 7 * 20)

    # stage 3: log_softmax(fc2(relu(fc1(x))))
    fc1w = _pad_last(params["fc1_w"], 512).astype(jnp.bfloat16)     # (980, 512)
    fc1b = _pad_last(params["fc1_b"], 512)                          # (1, 512) f32
    fc2w = jnp.zeros((512, LANES), jnp.bfloat16).at[:400, :10].set(
        params["fc2_w"].astype(jnp.bfloat16))                       # (512, 128)
    fc2b = jnp.full((1, LANES), -1e30, jnp.float32).at[:, :10].set(
        params["fc2_b"])                                            # (1, 128)
    out = mlp_logsoftmax(y2, fc1w, fc1b, fc2w, fc2b)                # (N, 128) f32
    return out[:, :10]


def reference_forward(params, x_nchw):
    """Pure-JAX (XLA) reference reproducing the PyTorch forward."""
    w1 = jnp.transpose(params["conv1_w"], (3, 2, 0, 1))             # OIHW
    w2 = jnp.transpose(params["conv2_w"], (3, 2, 0, 1))
    dn = ("NCHW", "OIHW", "NCHW")

    def conv(x, w, b):
        y = lax.conv_general_dilated(x, w, (1, 1), ((PAD, PAD), (PAD, PAD)),
                                     dimension_numbers=dn)
        return y + b.reshape(1, -1, 1, 1)

    def maxpool2(x):
        return lax.reduce_window(x, -jnp.inf, lax.max,
                                 (1, 1, 2, 2), (1, 1, 2, 2), "VALID")

    x = jax.nn.relu(maxpool2(conv(x_nchw, w1, params["conv1_b"])))
    x = jax.nn.relu(maxpool2(conv(x, w2, params["conv2_b"])))
    # fc1_w rows are stored in NHWC flatten order.
    x = jnp.transpose(x, (0, 2, 3, 1)).reshape(x.shape[0], -1)
    x = jax.nn.relu(x @ params["fc1_w"] + params["fc1_b"])
    x = x @ params["fc2_w"] + params["fc2_b"]
    return jax.nn.log_softmax(x, axis=-1)


if __name__ == "__main__":
    key = jax.random.PRNGKey(0)
    pkey, xkey = jax.random.split(key)
    params = init_params(pkey)

    for batch in (2, 20):   # batch=20 exercises multi-tile grids + row padding
        x = jax.random.normal(jax.random.fold_in(xkey, batch),
                              (batch, 1, 28, 28), jnp.float32)      # NCHW
        out = jax.block_until_ready(net_forward(params, x))
        assert out.shape == (batch, 10)
        ref = reference_forward(params, x)
        np.testing.assert_allclose(np.asarray(out), np.asarray(ref),
                                   rtol=2e-2, atol=3e-2)

    print("KERNEL_OK")
</pallas_src>

<mosaic_0001>
module attributes {stable_mosaic.version = 11 : i64} {
  func.func @_conv_pool_relu_kernel(%arg0: i32, %arg1: memref<4x400x49xbf16, #tpu.memory_space<vmem>>, %arg2: memref<49x128xbf16, #tpu.memory_space<vmem>>, %arg3: memref<1x128xf32, #tpu.memory_space<vmem>>, %arg4: memref<400x128xbf16, #tpu.memory_space<vmem>>) attributes {dimension_semantics = [#tpu.dimension_semantics<parallel>], iteration_bounds = array<i64: 1>, scalar_prefetch = 0 : i64, scratch_operands = 0 : i64, tpu.core_type = #tpu.core_type<tc>, window_params = [{transform_indices = @transform_0, window_bounds = array<i64: 4, 400, 49>}, {pipeline_mode = #tpu.pipeline_mode<synchronous>, transform_indices = @transform_1, window_bounds = array<i64: 49, 128>}, {pipeline_mode = #tpu.pipeline_mode<synchronous>, transform_indices = @transform_2, window_bounds = array<i64: 1, 128>}, {transform_indices = @transform_3, window_bounds = array<i64: 400, 128>}]} {
    %c0 = arith.constant 0 : index
    %c0_0 = arith.constant 0 : index
    %c0_1 = arith.constant 0 : index
    %0 = vector.load %arg1[%c0, %c0_0, %c0_1] : memref<4x400x49xbf16, #tpu.memory_space<vmem>>, vector<4x400x49xbf16>
    %1 = vector.shape_cast %0 : vector<4x400x49xbf16> to vector<1600x49xbf16>
    %c0_2 = arith.constant 0 : index
    %c0_3 = arith.constant 0 : index
    %2 = vector.load %arg2[%c0_2, %c0_3] : memref<49x128xbf16, #tpu.memory_space<vmem>>, vector<49x128xbf16>
    %cst = arith.constant dense<0.000000e+00> : vector<1600x128xf32>
    %3 = tpu.matmul %1, %2, %cst {dimension_numbers = #tpu.dot_dimension_numbers<[1], [0], [0], [1], [0, 0, 1, 1], [], []>} : vector<1600x49xbf16>, vector<49x128xbf16>, vector<1600x128xf32> -> vector<1600x128xf32>
    %4 = vector.shape_cast %3 : vector<1600x128xf32> to vector<4x400x128xf32>
    %cst_4 = arith.constant dense<0xFF800000> : vector<400x128xf32>
    %5 = vector.multi_reduction <maximumf>, %4, %cst_4 [0] : vector<4x400x128xf32> to vector<400x128xf32>
    %c0_5 = arith.constant 0 : index
    %c0_6 = arith.constant 0 : index
    %6 = vector.load %arg3[%c0_5, %c0_6] : memref<1x128xf32, #tpu.memory_space<vmem>>, vector<1x128xf32>
    %7 = vector.broadcast %6 : vector<1x128xf32> to vector<400x128xf32>
    %8 = arith.addf %5, %7 : vector<400x128xf32>
    %cst_7 = arith.constant 0.000000e+00 : f32
    %9 = vector.broadcast %cst_7 : f32 to vector<400x128xf32>
    %10 = arith.maximumf %8, %9 : vector<400x128xf32>
    %11 = arith.truncf %10 : vector<400x128xf32> to vector<400x128xbf16>
    %c0_8 = arith.constant 0 : index
    %c0_9 = arith.constant 0 : index
    %12 = vector.load %arg4[%c0_8, %c0_9] : memref<400x128xbf16, #tpu.memory_space<vmem>>, vector<400x128xbf16>
    tpu.vector_store %arg4[%c0_8, %c0_9], %11 {strides = array<i32>} : memref<400x128xbf16, #tpu.memory_space<vmem>>, vector<400x128xbf16>,
    return
  }
  func.func @transform_0(%arg0: i32) -> (i32, i32, i32) {
    %c0_i32 = arith.constant 0 : i32
    %c0_i32_0 = arith.constant 0 : i32
    %c0_i32_1 = arith.constant 0 : i32
    return %c0_i32, %arg0, %c0_i32_0 : i32, i32, i32
  }
  func.func @transform_1(%arg0: i32) -> (i32, i32) {
    %c0_i32 = arith.constant 0 : i32
    %c0_i32_0 = arith.constant 0 : i32
    %c0_i32_1 = arith.constant 0 : i32
    return %c0_i32, %c0_i32_0 : i32, i32
  }
  func.func @transform_2(%arg0: i32) -> (i32, i32) {
    %c0_i32 = arith.constant 0 : i32
    %c0_i32_0 = arith.constant 0 : i32
    %c0_i32_1 = arith.constant 0 : i32
    return %c0_i32, %c0_i32_0 : i32, i32
  }
  func.func @transform_3(%arg0: i32) -> (i32, i32) {
    %c0_i32 = arith.constant 0 : i32
    %c0_i32_0 = arith.constant 0 : i32
    return %arg0, %c0_i32 : i32, i32
  }
}

module attributes {stable_mosaic.version = 11 : i64} {
  func.func @_conv_pool_relu_kernel(%arg0: i32, %arg1: memref<4x112x490xbf16, #tpu.memory_space<vmem>>, %arg2: memref<490x128xbf16, #tpu.memory_space<vmem>>, %arg3: memref<1x128xf32, #tpu.memory_space<vmem>>, %arg4: memref<112x128xbf16, #tpu.memory_space<vmem>>) attributes {dimension_semantics = [#tpu.dimension_semantics<parallel>], iteration_bounds = array<i64: 1>, scalar_prefetch = 0 : i64, scratch_operands = 0 : i64, tpu.core_type = #tpu.core_type<tc>, window_params = [{transform_indices = @transform_0, window_bounds = array<i64: 4, 112, 490>}, {pipeline_mode = #tpu.pipeline_mode<synchronous>, transform_indices = @transform_1, window_bounds = array<i64: 490, 128>}, {pipeline_mode = #tpu.pipeline_mode<synchronous>, transform_indices = @transform_2, window_bounds = array<i64: 1, 128>}, {transform_indices = @transform_3, window_bounds = array<i64: 112, 128>}]} {
    %c0 = arith.constant 0 : index
    %c0_0 = arith.constant 0 : index
    %c0_1 = arith.constant 0 : index
    %0 = vector.load %arg1[%c0, %c0_0, %c0_1] : memref<4x112x490xbf16, #tpu.memory_space<vmem>>, vector<4x112x490xbf16>
    %1 = vector.shape_cast %0 : vector<4x112x490xbf16> to vector<448x490xbf16>
    %c0_2 = arith.constant 0 : index
    %c0_3 = arith.constant 0 : index
    %2 = vector.load %arg2[%c0_2, %c0_3] : memref<490x128xbf16, #tpu.memory_space<vmem>>, vector<490x128xbf16>
    %cst = arith.constant dense<0.000000e+00> : vector<448x128xf32>
    %3 = tpu.matmul %1, %2, %cst {dimension_numbers = #tpu.dot_dimension_numbers<[1], [0], [0], [1], [0, 0, 1, 1], [], []>} : vector<448x490xbf16>, vector<490x128xbf16>, vector<448x128xf32> -> vector<448x128xf32>
    %4 = vector.shape_cast %3 : vector<448x128xf32> to vector<4x112x128xf32>
    %cst_4 = arith.constant dense<0xFF800000> : vector<112x128xf32>
    %5 = vector.multi_reduction <maximumf>, %4, %cst_4 [0] : vector<4x112x128xf32> to vector<112x128xf32>
    %c0_5 = arith.constant 0 : index
    %c0_6 = arith.constant 0 : index
    %6 = vector.load %arg3[%c0_5, %c0_6] : memref<1x128xf32, #tpu.memory_space<vmem>>, vector<1x128xf32>
    %7 = vector.broadcast %6 : vector<1x128xf32> to vector<112x128xf32>
    %8 = arith.addf %5, %7 : vector<112x128xf32>
    %cst_7 = arith.constant 0.000000e+00 : f32
    %9 = vector.broadcast %cst_7 : f32 to vector<112x128xf32>
    %10 = arith.maximumf %8, %9 : vector<112x128xf32>
    %11 = arith.truncf %10 : vector<112x128xf32> to vector<112x128xbf16>
    %c0_8 = arith.constant 0 : index
    %c0_9 = arith.constant 0 : index
    %12 = vector.load %arg4[%c0_8, %c0_9] : memref<112x128xbf16, #tpu.memory_space<vmem>>, vector<112x128xbf16>
    tpu.vector_store %arg4[%c0_8, %c0_9], %11 {strides = array<i32>} : memref<112x128xbf16, #tpu.memory_space<vmem>>, vector<112x128xbf16>,
    return
  }
  func.func @transform_0(%arg0: i32) -> (i32, i32, i32) {
    %c0_i32 = arith.constant 0 : i32
    %c0_i32_0 = arith.constant 0 : i32
    %c0_i32_1 = arith.constant 0 : i32
    return %c0_i32, %arg0, %c0_i32_0 : i32, i32, i32
  }
  func.func @transform_1(%arg0: i32) -> (i32, i32) {
    %c0_i32 = arith.constant 0 : i32
    %c0_i32_0 = arith.constant 0 : i32
    %c0_i32_1 = arith.constant 0 : i32
    return %c0_i32, %c0_i32_0 : i32, i32
  }
  func.func @transform_2(%arg0: i32) -> (i32, i32) {
    %c0_i32 = arith.constant 0 : i32
    %c0_i32_0 = arith.constant 0 : i32
    %c0_i32_1 = arith.constant 0 : i32
    return %c0_i32, %c0_i32_0 : i32, i32
  }
  func.func @transform_3(%arg0: i32) -> (i32, i32) {
    %c0_i32 = arith.constant 0 : i32
    %c0_i32_0 = arith.constant 0 : i32
    return %arg0, %c0_i32 : i32, i32
  }
}

module attributes {stable_mosaic.version = 11 : i64} {
  func.func @_mlp_logsoftmax_kernel(%arg0: i32, %arg1: memref<16x980xbf16, #tpu.memory_space<vmem>>, %arg2: memref<980x512xbf16, #tpu.memory_space<vmem>>, %arg3: memref<1x512xf32, #tpu.memory_space<vmem>>, %arg4: memref<512x128xbf16, #tpu.memory_space<vmem>>, %arg5: memref<1x128xf32, #tpu.memory_space<vmem>>, %arg6: memref<16x128xf32, #tpu.memory_space<vmem>>) attributes {dimension_semantics = [#tpu.dimension_semantics<parallel>], iteration_bounds = array<i64: 1>, scalar_prefetch = 0 : i64, scratch_operands = 0 : i64, tpu.core_type = #tpu.core_type<tc>, window_params = [{transform_indices = @transform_0, window_bounds = array<i64: 16, 980>}, {pipeline_mode = #tpu.pipeline_mode<synchronous>, transform_indices = @transform_1, window_bounds = array<i64: 980, 512>}, {pipeline_mode = #tpu.pipeline_mode<synchronous>, transform_indices = @transform_2, window_bounds = array<i64: 1, 512>}, {pipeline_mode = #tpu.pipeline_mode<synchronous>, transform_indices = @transform_3, window_bounds = array<i64: 512, 128>}, {pipeline_mode = #tpu.pipeline_mode<synchronous>, transform_indices = @transform_4, window_bounds = array<i64: 1, 128>}, {transform_indices = @transform_5, window_bounds = array<i64: 16, 128>}]} {
    %c0 = arith.constant 0 : index
    %c0_0 = arith.constant 0 : index
    %0 = vector.load %arg1[%c0, %c0_0] : memref<16x980xbf16, #tpu.memory_space<vmem>>, vector<16x980xbf16>
    %c0_1 = arith.constant 0 : index
    %c0_2 = arith.constant 0 : index
    %1 = vector.load %arg2[%c0_1, %c0_2] : memref<980x512xbf16, #tpu.memory_space<vmem>>, vector<980x512xbf16>
    %cst = arith.constant dense<0.000000e+00> : vector<16x512xf32>
    %2 = tpu.matmul %0, %1, %cst {dimension_numbers = #tpu.dot_dimension_numbers<[1], [0], [0], [1], [0, 0, 1, 1], [], []>} : vector<16x980xbf16>, vector<980x512xbf16>, vector<16x512xf32> -> vector<16x512xf32>
    %c0_3 = arith.constant 0 : index
    %c0_4 = arith.constant 0 : index
    %3 = vector.load %arg3[%c0_3, %c0_4] : memref<1x512xf32, #tpu.memory_space<vmem>>, vector<1x512xf32>
    %4 = vector.broadcast %3 : vector<1x512xf32> to vector<16x512xf32>
    %5 = arith.addf %2, %4 : vector<16x512xf32>
    %cst_5 = arith.constant 0.000000e+00 : f32
    %6 = vector.broadcast %cst_5 : f32 to vector<16x512xf32>
    %7 = arith.maximumf %5, %6 : vector<16x512xf32>
    %8 = arith.truncf %7 : vector<16x512xf32> to vector<16x512xbf16>
    %c0_6 = arith.constant 0 : index
    %c0_7 = arith.constant 0 : index
    %9 = vector.load %arg4[%c0_6, %c0_7] : memref<512x128xbf16, #tpu.memory_space<vmem>>, vector<512x128xbf16>
    %cst_8 = arith.constant dense<0.000000e+00> : vector<16x128xf32>
    %10 = tpu.matmul %8, %9, %cst_8 {dimension_numbers = #tpu.dot_dimension_numbers<[1], [0], [0], [1], [0, 0, 1, 1], [], []>} : vector<16x512xbf16>, vector<512x128xbf16>, vector<16x128xf32> -> vector<16x128xf32>
    %c0_9 = arith.constant 0 : index
    %c0_10 = arith.constant 0 : index
    %11 = vector.load %arg5[%c0_9, %c0_10] : memref<1x128xf32, #tpu.memory_space<vmem>>, vector<1x128xf32>
    %12 = vector.broadcast %11 : vector<1x128xf32> to vector<16x128xf32>
    %13 = arith.addf %10, %12 : vector<16x128xf32>
    %cst_11 = arith.constant dense<0xFF800000> : vector<16xf32>
    %14 = vector.multi_reduction <maximumf>, %13, %cst_11 [1] : vector<16x128xf32> to vector<16xf32>
    %15 = vector.shape_cast %14 : vector<16xf32> to vector<16x1xf32>
    %16 = vector.broadcast %15 : vector<16x1xf32> to vector<16x128xf32>
    %17 = arith.subf %13, %16 : vector<16x128xf32>
    %18 = math.exp %17 : vector<16x128xf32>
    %cst_12 = arith.constant dense<0.000000e+00> : vector<16xf32>
    %19 = vector.multi_reduction <add>, %18, %cst_12 [1] : vector<16x128xf32> to vector<16xf32>
    %20 = vector.shape_cast %19 : vector<16xf32> to vector<16x1xf32>
    %21 = math.log %20 : vector<16x1xf32>
    %22 = vector.broadcast %21 : vector<16x1xf32> to vector<16x128xf32>
    %23 = arith.subf %17, %22 : vector<16x128xf32>
    %c0_13 = arith.constant 0 : index
    %c0_14 = arith.constant 0 : index
    %24 = vector.load %arg6[%c0_13, %c0_14] : memref<16x128xf32, #tpu.memory_space<vmem>>, vector<16x128xf32>
    tpu.vector_store %arg6[%c0_13, %c0_14], %23 {strides = array<i32>} : memref<16x128xf32, #tpu.memory_space<vmem>>, vector<16x128xf32>,
    return
  }
  func.func @transform_0(%arg0: i32) -> (i32, i32) {
    %c0_i32 = arith.constant 0 : i32
    %c0_i32_0 = arith.constant 0 : i32
    return %arg0, %c0_i32 : i32, i32
  }
  func.func @transform_1(%arg0: i32) -> (i32, i32) {
    %c0_i32 = arith.constant 0 : i32
    %c0_i32_0 = arith.constant 0 : i32
    %c0_i32_1 = arith.constant 0 : i32
    return %c0_i32, %c0_i32_0 : i32, i32
  }
  func.func @transform_2(%arg0: i32) -> (i32, i32) {
    %c0_i32 = arith.constant 0 : i32
    %c0_i32_0 = arith.constant 0 : i32
    %c0_i32_1 = arith.constant 0 : i32
    return %c0_i32, %c0_i32_0 : i32, i32
  }
  func.func @transform_3(%arg0: i32) -> (i32, i32) {
    %c0_i32 = arith.constant 0 : i32
    %c0_i32_0 = arith.constant 0 : i32
    %c0_i32_1 = arith.constant 0 : i32
    return %c0_i32, %c0_i32_0 : i32, i32
  }
  func.func @transform_4(%arg0: i32) -> (i32, i32) {
    %c0_i32 = arith.constant 0 : i32
    %c0_i32_0 = arith.constant 0 : i32
    %c0_i32_1 = arith.constant 0 : i32
    return %c0_i32, %c0_i32_0 : i32, i32
  }
  func.func @transform_5(%arg0: i32) -> (i32, i32) {
    %c0_i32 = arith.constant 0 : i32
    %c0_i32_0 = arith.constant 0 : i32
    return %arg0, %c0_i32 : i32, i32
  }
}

</mosaic_0001>

<llo_original>
// kernel: net_forward.3
$region0: #{net_forward.3}
  #allocation0 [shape = 'u32[]', space=smem, size = 0x4, offset = 0x4, fixed_abs, tag = 'smem constant byte address 0x4 - core index']
  #allocation1 [shape = 'u32[72,128]{1,0:T(1,128)}', space=vmem, size = 0x9000, scoped, tag = 'internal scratch']
  %s0 = inlined_call_operand.vmem [shape: bf16[4,400,49], index: 0, kind: input, shape index: {}]
  %s1 = inlined_call_operand.vmem [shape: bf16[49,128], index: 1, kind: input, shape index: {}]
  %s2 = inlined_call_operand.vmem [shape: f32[1,128], index: 2, kind: input, shape index: {}]
  %s3 = inlined_call_operand.vmem [shape: bf16[400,128], index: 3, kind: output, shape index: {}]
  %s4 = sld [smem:[#allocation0]]
  $region22: #{net_forward.3} parent=0
    _
  %s6 = ssub.s32 1, %s4
  %s7 = scalar_select 0, %s6, %s4
  // Predicated region
  $region2: #{net_forward.3} parent=0 // pred_check
    _
  $region3: #{net_forward.3} parent=0 // pred_check_branch
    %9 = sbr.rel (0) target = $region5
  $region4: #{net_forward.3} parent=0 // pred_region
    _
  $region5: #{net_forward.3} parent=0 // pred_fallthru
    _
  // Predicated region
  $region6: #{net_forward.3} parent=0 // pred_check
    _
  $region7: #{net_forward.3} parent=0 // pred_check_branch
    %11 = sbr.rel (0) target = $region9
  $region8: #{net_forward.3} parent=0 // pred_region
    _
  $region9: #{net_forward.3} parent=0 // pred_fallthru
    _
  // Predicated region
  $region10: #{net_forward.3} parent=0 // pred_check
    _
  $region11: #{net_forward.3} parent=0 // pred_check_branch
    %13 = sbr.rel (0) target = $region13
  $region12: #{net_forward.3} parent=0 // pred_region
    _
  $region13: #{net_forward.3} parent=0 // pred_fallthru
    _
  %v15 = vld [vmem:[%s0] sm:$0xf]
  %v16 = vld [vmem:[%s0 + $0x4] sm:$0xf]
  %v17 = vld [vmem:[%s0 + $0x8] sm:$0xf]
  %v18 = vld [vmem:[%s0 + $0xc] sm:$0xf]
  %v19 = vld [vmem:[%s0 + $0x10] sm:$0xf]
  %v20 = vld [vmem:[%s0 + $0x14] sm:$0xf]
  %v21 = vld [vmem:[%s0 + $0x18] sm:$0xf]
  %v22 = vld [vmem:[%s0 + $0x1c] sm:$0xf]
  %v23 = vld [vmem:[%s0 + $0x20] sm:$0xf]
  %v24 = vld [vmem:[%s0 + $0x24] sm:$0xf]
  %v25 = vld [vmem:[%s0 + $0x28] sm:$0xf]
  %v26 = vld [vmem:[%s0 + $0x2c] sm:$0xf]
  %v27 = vld [vmem:[%s0 + $0x30] sm:$0xf]
  %v28 = vld [vmem:[%s0 + $0x34] sm:$0xf]
  %v29 = vld [vmem:[%s0 + $0x38] sm:$0xf]
  %v30 = vld [vmem:[%s0 + $0x3c] sm:$0xf]
  %v31 = vld [vmem:[%s0 + $0x40] sm:$0xf]
  %v32 = vld [vmem:[%s0 + $0x44] sm:$0xf]
  %v33 = vld [vmem:[%s0 + $0x48] sm:$0xf]
  %v34 = vld [vmem:[%s0 + $0x4c] sm:$0xf]
  %v35 = vld [vmem:[%s0 + $0x50] sm:$0xf]
  %v36 = vld [vmem:[%s0 + $0x54] sm:$0xf]
  %v37 = vld [vmem:[%s0 + $0x58] sm:$0xf]
  %v38 = vld [vmem:[%s0 + $0x5c] sm:$0xf]
  %v39 = vld [vmem:[%s0 + $0x60] sm:$0xf]
  %v40 = vld [vmem:[%s0 + $0x64] sm:$0xf]
  %v41 = vld [vmem:[%s0 + $0x68] sm:$0xf]
  %v42 = vld [vmem:[%s0 + $0x6c] sm:$0xf]
  %v43 = vld [vmem:[%s0 + $0x70] sm:$0xf]
  %v44 = vld [vmem:[%s0 + $0x74] sm:$0xf]
  %v45 = vld [vmem:[%s0 + $0x78] sm:$0xf]
  %v46 = vld [vmem:[%s0 + $0x7c] sm:$0xf]
  %v47 = vld [vmem:[%s0 + $0x80] sm:$0xf]
  %v48 = vld [vmem:[%s0 + $0x84] sm:$0xf]
  %v49 = vld [vmem:[%s0 + $0x88] sm:$0xf]
  %v50 = vld [vmem:[%s0 + $0x8c] sm:$0xf]
  %v51 = vld [vmem:[%s0 + $0x90] sm:$0xf]
  %v52 = vld [vmem:[%s0 + $0x94] sm:$0xf]
  %v53 = vld [vmem:[%s0 + $0x98] sm:$0xf]
  %v54 = vld [vmem:[%s0 + $0x9c] sm:$0xf]
  %v55 = vld [vmem:[%s0 + $0xa0] sm:$0xf]
  %v56 = vld [vmem:[%s0 + $0xa4] sm:$0xf]
  %v57 = vld [vmem:[%s0 + $0xa8] sm:$0xf]
  %v58 = vld [vmem:[%s0 + $0xac] sm:$0xf]
  %v59 = vld [vmem:[%s0 + $0xb0] sm:$0xf]
  %v60 = vld [vmem:[%s0 + $0xb4] sm:$0xf]
  %v61 = vld [vmem:[%s0 + $0xb8] sm:$0xf]
  %v62 = vld [vmem:[%s0 + $0xbc] sm:$0xf]
  %v63 = vld [vmem:[%s0 + $0xc0] sm:$0xf]
  %v64 = vld [vmem:[%s0 + $0xc4] sm:$0xf]
  %v65 = vld [vmem:[%s0 + $0xc8] sm:$0xf]
  %v66 = vld [vmem:[%s0 + $0xcc] sm:$0xf]
  %v67 = vld [vmem:[%s0 + $0xd0] sm:$0xf]
  %v68 = vld [vmem:[%s0 + $0xd4] sm:$0xf]
  %v69 = vld [vmem:[%s0 + $0xd8] sm:$0xf]
  %v70 = vld [vmem:[%s0 + $0xdc] sm:$0xf]
  %v71 = vld [vmem:[%s0 + $0xe0] sm:$0xf]
  %v72 = vld [vmem:[%s0 + $0xe4] sm:$0xf]
  %v73 = vld [vmem:[%s0 + $0xe8] sm:$0xf]
  %v74 = vld [vmem:[%s0 + $0xec] sm:$0xf]
  %v75 = vld [vmem:[%s0 + $0xf0] sm:$0xf]
  %v76 = vld [vmem:[%s0 + $0xf4] sm:$0xf]
  %v77 = vld [vmem:[%s0 + $0xf8] sm:$0xf]
  %v78 = vld [vmem:[%s0 + $0xfc] sm:$0xf]
  %v79 = vld [vmem:[%s0 + $0x100] sm:$0xf]
  %v80 = vld [vmem:[%s0 + $0x104] sm:$0xf]
  %v81 = vld [vmem:[%s0 + $0x108] sm:$0xf]
  %v82 = vld [vmem:[%s0 + $0x10c] sm:$0xf]
  %v83 = vld [vmem:[%s0 + $0x110] sm:$0xf]
  %v84 = vld [vmem:[%s0 + $0x114] sm:$0xf]
  %v85 = vld [vmem:[%s0 + $0x118] sm:$0xf]
  %v86 = vld [vmem:[%s0 + $0x11c] sm:$0xf]
  %v87 = vld [vmem:[%s0 + $0x120] sm:$0xf]
  %v88 = vld [vmem:[%s0 + $0x124] sm:$0xf]
  %v89 = vld [vmem:[%s0 + $0x128] sm:$0xf]
  %v90 = vld [vmem:[%s0 + $0x12c] sm:$0xf]
  %v91 = vld [vmem:[%s0 + $0x130] sm:$0xf]
  %v92 = vld [vmem:[%s0 + $0x134] sm:$0xf]
  %v93 = vld [vmem:[%s0 + $0x138] sm:$0xf]
  %v94 = vld [vmem:[%s0 + $0x13c] sm:$0xf]
  %v95 = vld [vmem:[%s0 + $0x140] sm:$0xf]
  %v96 = vld [vmem:[%s0 + $0x144] sm:$0xf]
  %v97 = vld [vmem:[%s0 + $0x148] sm:$0xf]
  %v98 = vld [vmem:[%s0 + $0x14c] sm:$0xf]
  %v99 = vld [vmem:[%s0 + $0x150] sm:$0xf]
  %v100 = vld [vmem:[%s0 + $0x154] sm:$0xf]
  %v101 = vld [vmem:[%s0 + $0x158] sm:$0xf]
  %v102 = vld [vmem:[%s0 + $0x15c] sm:$0xf]
  %v103 = vld [vmem:[%s0 + $0x160] sm:$0xf]
  %v104 = vld [vmem:[%s0 + $0x164] sm:$0xf]
  %v105 = vld [vmem:[%s0 + $0x168] sm:$0xf]
  %v106 = vld [vmem:[%s0 + $0x16c] sm:$0xf]
  %v107 = vld [vmem:[%s0 + $0x170] sm:$0xf]
  %v108 = vld [vmem:[%s0 + $0x174] sm:$0xf]
  %v109 = vld [vmem:[%s0 + $0x178] sm:$0xf]
  %v110 = vld [vmem:[%s0 + $0x17c] sm:$0xf]
  %v111 = vld [vmem:[%s0 + $0x180] sm:$0xf]
  %v112 = vld [vmem:[%s0 + $0x184] sm:$0xf]
  %v113 = vld [vmem:[%s0 + $0x188] sm:$0xf]
  %v114 = vld [vmem:[%s0 + $0x18c] sm:$0xf]
  %v115 = vld [vmem:[%s0 + $0x190] sm:$0xf]
  %v116 = vld [vmem:[%s0 + $0x194] sm:$0xf]
  %v117 = vld [vmem:[%s0 + $0x198] sm:$0xf]
  %v118 = vld [vmem:[%s0 + $0x19c] sm:$0xf]
  %v119 = vld [vmem:[%s0 + $0x1a0] sm:$0xf]
  %v120 = vld [vmem:[%s0 + $0x1a4] sm:$0xf]
  %v121 = vld [vmem:[%s0 + $0x1a8] sm:$0xf]
  %v122 = vld [vmem:[%s0 + $0x1ac] sm:$0xf]
  %v123 = vld [vmem:[%s0 + $0x1b0] sm:$0xf]
  %v124 = vld [vmem:[%s0 + $0x1b4] sm:$0xf]
  %v125 = vld [vmem:[%s0 + $0x1b8] sm:$0xf]
  %v126 = vld [vmem:[%s0 + $0x1bc] sm:$0xf]
  %v127 = vld [vmem:[%s0 + $0x1c0] sm:$0xf]
  %v128 = vld [vmem:[%s0 + $0x1c4] sm:$0xf]
  %v129 = vld [vmem:[%s0 + $0x1c8] sm:$0xf]
  %v130 = vld [vmem:[%s0 + $0x1cc] sm:$0xf]
  %v131 = vld [vmem:[%s0 + $0x1d0] sm:$0xf]
  %v132 = vld [vmem:[%s0 + $0x1d4] sm:$0xf]
  %v133 = vld [vmem:[%s0 + $0x1d8] sm:$0xf]
  %v134 = vld [vmem:[%s0 + $0x1dc] sm:$0xf]
  %v135 = vld [vmem:[%s0 + $0x1e0] sm:$0xf]
  %v136 = vld [vmem:[%s0 + $0x1e4] sm:$0xf]
  %v137 = vld [vmem:[%s0 + $0x1e8] sm:$0xf]
  %v138 = vld [vmem:[%s0 + $0x1ec] sm:$0xf]
  %v139 = vld [vmem:[%s0 + $0x1f0] sm:$0xf]
  %v140 = vld [vmem:[%s0 + $0x1f4] sm:$0xf]
  %v141 = vld [vmem:[%s0 + $0x1f8] sm:$0xf]
  %v142 = vld [vmem:[%s0 + $0x1fc] sm:$0xf]
  %v143 = vld [vmem:[%s0 + $0x200] sm:$0xf]
  %v144 = vld [vmem:[%s0 + $0x204] sm:$0xf]
  %v145 = vld [vmem:[%s0 + $0x208] sm:$0xf]
  %v146 = vld [vmem:[%s0 + $0x20c] sm:$0xf]
  %v147 = vld [vmem:[%s0 + $0x210] sm:$0xf]
  %v148 = vld [vmem:[%s0 + $0x214] sm:$0xf]
  %v149 = vld [vmem:[%s0 + $0x218] sm:$0xf]
  %v150 = vld [vmem:[%s0 + $0x21c] sm:$0xf]
  %v151 = vld [vmem:[%s0 + $0x220] sm:$0xf]
  %v152 = vld [vmem:[%s0 + $0x224] sm:$0xf]
  %v153 = vld [vmem:[%s0 + $0x228] sm:$0xf]
  %v154 = vld [vmem:[%s0 + $0x22c] sm:$0xf]
  %v155 = vld [vmem:[%s0 + $0x230] sm:$0xf]
  %v156 = vld [vmem:[%s0 + $0x234] sm:$0xf]
  %v157 = vld [vmem:[%s0 + $0x238] sm:$0xf]
  %v158 = vld [vmem:[%s0 + $0x23c] sm:$0xf]
  %v159 = vld [vmem:[%s0 + $0x240] sm:$0xf]
  %v160 = vld [vmem:[%s0 + $0x244] sm:$0xf]
  %v161 = vld [vmem:[%s0 + $0x248] sm:$0xf]
  %v162 = vld [vmem:[%s0 + $0x24c] sm:$0xf]
  %v163 = vld [vmem:[%s0 + $0x250] sm:$0xf]
  %v164 = vld [vmem:[%s0 + $0x254] sm:$0xf]
  %v165 = vld [vmem:[%s0 + $0x258] sm:$0xf]
  %v166 = vld [vmem:[%s0 + $0x25c] sm:$0xf]
  %v167 = vld [vmem:[%s0 + $0x260] sm:$0xf]
  %v168 = vld [vmem:[%s0 + $0x264] sm:$0xf]
  %v169 = vld [vmem:[%s0 + $0x268] sm:$0xf]
  %v170 = vld [vmem:[%s0 + $0x26c] sm:$0xf]
  %v171 = vld [vmem:[%s0 + $0x270] sm:$0xf]
  %v172 = vld [vmem:[%s0 + $0x274] sm:$0xf]
  %v173 = vld [vmem:[%s0 + $0x278] sm:$0xf]
  %v174 = vld [vmem:[%s0 + $0x27c] sm:$0xf]
  %v175 = vld [vmem:[%s0 + $0x280] sm:$0xf]
  %v176 = vld [vmem:[%s0 + $0x284] sm:$0xf]
  %v177 = vld [vmem:[%s0 + $0x288] sm:$0xf]
  %v178 = vld [vmem:[%s0 + $0x28c] sm:$0xf]
  %v179 = vld [vmem:[%s0 + $0x290] sm:$0xf]
  %v180 = vld [vmem:[%s0 + $0x294] sm:$0xf]
  %v181 = vld [vmem:[%s0 + $0x298] sm:$0xf]
  %v182 = vld [vmem:[%s0 + $0x29c] sm:$0xf]
  %v183 = vld [vmem:[%s0 + $0x2a0] sm:$0xf]
  %v184 = vld [vmem:[%s0 + $0x2a4] sm:$0xf]
  %v185 = vld [vmem:[%s0 + $0x2a8] sm:$0xf]
  %v186 = vld [vmem:[%s0 + $0x2ac] sm:$0xf]
  %v187 = vld [vmem:[%s0 + $0x2b0] sm:$0xf]
  %v188 = vld [vmem:[%s0 + $0x2b4] sm:$0xf]
  %v189 = vld [vmem:[%s0 + $0x2b8] sm:$0xf]
  %v190 = vld [vmem:[%s0 + $0x2bc] sm:$0xf]
  %v191 = vld [vmem:[%s0 + $0x2c0] sm:$0xf]
  %v192 = vld [vmem:[%s0 + $0x2c4] sm:$0xf]
  %v193 = vld [vmem:[%s0 + $0x2c8] sm:$0xf]
  %v194 = vld [vmem:[%s0 + $0x2cc] sm:$0xf]
  %v195 = vld [vmem:[%s0 + $0x2d0] sm:$0xf]
  %v196 = vld [vmem:[%s0 + $0x2d4] sm:$0xf]
  %v197 = vld [vmem:[%s0 + $0x2d8] sm:$0xf]
  %v198 = vld [vmem:[%s0 + $0x2dc] sm:$0xf]
  %v199 = vld [vmem:[%s0 + $0x2e0] sm:$0xf]
  %v200 = vld [vmem:[%s0 + $0x2e4] sm:$0xf]
  %v201 = vld [vmem:[%s0 + $0x2e8] sm:$0xf]
  %v202 = vld [vmem:[%s0 + $0x2ec] sm:$0xf]
  %v203 = vld [vmem:[%s0 + $0x2f0] sm:$0xf]
  %v204 = vld [vmem:[%s0 + $0x2f4] sm:$0xf]
  %v205 = vld [vmem:[%s0 + $0x2f8] sm:$0xf]
  %v206 = vld [vmem:[%s0 + $0x2fc] sm:$0xf]
  %v207 = vld [vmem:[%s0 + $0x300] sm:$0xf]
  %v208 = vld [vmem:[%s0 + $0x304] sm:$0xf]
  %v209 = vld [vmem:[%s0 + $0x308] sm:$0xf]
  %v210 = vld [vmem:[%s0 + $0x30c] sm:$0xf]
  %v211 = vld [vmem:[%s0 + $0x310] sm:$0xf]
  %v212 = vld [vmem:[%s0 + $0x314] sm:$0xf]
  %v213 = vld [vmem:[%s0 + $0x318] sm:$0xf]
  %v214 = vld [vmem:[%s0 + $0x31c] sm:$0xf]
  %v215 = vld [vmem:[%s1] sm:$0xf]
  %v216 = vld [vmem:[%s1 + $0x4] sm:$0xf]
  %v217 = vld [vmem:[%s1 + $0x8] sm:$0xf]
  %v218 = vld [vmem:[%s1 + $0xc] sm:$0xf]
  %v219 = vld [vmem:[%s1 + $0x10] sm:$0xf]
  %v220 = vld [vmem:[%s1 + $0x14] sm:$0xf]
  %v221 = vld [vmem:[%s1 + $0x18] sm:$0x1]
  %v422 = vunpack.c.l.b16 %v15
  %v423 = vunpack.c.l.b16 %v16
  %v424 = vunpack.c.l.b16 %v17
  %v425 = vunpack.c.l.b16 %v18
  %v426 = vunpack.c.l.b16 %v19
  %v427 = vunpack.c.l.b16 %v20
  %v428 = vunpack.c.l.b16 %v21
  %v429 = vunpack.c.l.b16 %v22
  %v430 = vunpack.c.l.b16 %v23
  %v431 = vunpack.c.l.b16 %v24
  %v432 = vunpack.c.l.b16 %v25
  %v433 = vunpack.c.l.b16 %v26
  %v434 = vunpack.c.l.b16 %v27
  %v435 = vunpack.c.l.b16 %v28
  %v436 = vunpack.c.l.b16 %v29
  %v437 = vunpack.c.l.b16 %v30
  %v438 = vunpack.c.l.b16 %v31
  %v439 = vunpack.c.l.b16 %v32
  %v440 = vunpack.c.l.b16 %v33
  %v441 = vunpack.c.l.b16 %v34
  %v442 = vunpack.c.l.b16 %v35
  %v443 = vunpack.c.l.b16 %v36
  %v444 = vunpack.c.l.b16 %v37
  %v445 = vunpack.c.l.b16 %v38
  %v446 = vunpack.c.l.b16 %v39
  %v447 = vunpack.c.l.b16 %v40
  %v448 = vunpack.c.l.b16 %v41
  %v449 = vunpack.c.l.b16 %v42
  %v450 = vunpack.c.l.b16 %v43
  %v451 = vunpack.c.l.b16 %v44
  %v452 = vunpack.c.l.b16 %v45
  %v453 = vunpack.c.l.b16 %v46
  %v454 = vunpack.c.l.b16 %v47
  %v455 = vunpack.c.l.b16 %v48
  %v456 = vunpack.c.l.b16 %v49
  %v457 = vunpack.c.l.b16 %v50
  %v458 = vunpack.c.l.b16 %v51
  %v459 = vunpack.c.l.b16 %v52
  %v460 = vunpack.c.l.b16 %v53
  %v461 = vunpack.c.l.b16 %v54
  %v462 = vunpack.c.l.b16 %v55
  %v463 = vunpack.c.l.b16 %v56
  %v464 = vunpack.c.l.b16 %v57
  %v465 = vunpack.c.l.b16 %v58
  %v466 = vunpack.c.l.b16 %v59
  %v467 = vunpack.c.l.b16 %v60
  %v468 = vunpack.c.l.b16 %v61
  %v469 = vunpack.c.l.b16 %v62
  %v470 = vunpack.c.l.b16 %v63
  %v471 = vunpack.c.l.b16 %v64
  %v472 = vunpack.c.l.b16 %v65
  %v473 = vunpack.c.l.b16 %v66
  %v474 = vunpack.c.l.b16 %v67
  %v475 = vunpack.c.l.b16 %v68
  %v476 = vunpack.c.l.b16 %v69
  %v477 = vunpack.c.l.b16 %v70
  %v478 = vunpack.c.l.b16 %v71
  %v479 = vunpack.c.l.b16 %v72
  %v480 = vunpack.c.l.b16 %v73
  %v481 = vunpack.c.l.b16 %v74
  %v482 = vunpack.c.l.b16 %v75
  %v483 = vunpack.c.l.b16 %v76
  %v484 = vunpack.c.l.b16 %v77
  %v485 = vunpack.c.l.b16 %v78
  %v486 = vunpack.c.l.b16 %v79
  %v487 = vunpack.c.l.b16 %v80
  %v488 = vunpack.c.l.b16 %v81
  %v489 = vunpack.c.l.b16 %v82
  %v490 = vunpack.c.l.b16 %v83
  %v491 = vunpack.c.l.b16 %v84
  %v492 = vunpack.c.l.b16 %v85
  %v493 = vunpack.c.l.b16 %v86
  %v494 = vunpack.c.l.b16 %v87
  %v495 = vunpack.c.l.b16 %v88
  %v496 = vunpack.c.l.b16 %v89
  %v497 = vunpack.c.l.b16 %v90
  %v498 = vunpack.c.l.b16 %v91
  %v499 = vunpack.c.l.b16 %v92
  %v500 = vunpack.c.l.b16 %v93
  %v501 = vunpack.c.l.b16 %v94
  %v502 = vunpack.c.l.b16 %v95
  %v503 = vunpack.c.l.b16 %v96
  %v504 = vunpack.c.l.b16 %v97
  %v505 = vunpack.c.l.b16 %v98
  %v506 = vunpack.c.l.b16 %v99
  %v507 = vunpack.c.l.b16 %v100
  %v508 = vunpack.c.l.b16 %v101
  %v509 = vunpack.c.l.b16 %v102
  %v510 = vunpack.c.l.b16 %v103
  %v511 = vunpack.c.l.b16 %v104
  %v512 = vunpack.c.l.b16 %v105
  %v513 = vunpack.c.l.b16 %v106
  %v514 = vunpack.c.l.b16 %v107
  %v515 = vunpack.c.l.b16 %v108
  %v516 = vunpack.c.l.b16 %v109
  %v517 = vunpack.c.l.b16 %v110
  %v518 = vunpack.c.l.b16 %v111
  %v519 = vunpack.c.l.b16 %v112
  %v520 = vunpack.c.l.b16 %v113
  %v521 = vunpack.c.l.b16 %v114
  %v522 = vunpack.c.l.b16 %v115
  %v523 = vunpack.c.l.b16 %v116
  %v524 = vunpack.c.l.b16 %v117
  %v525 = vunpack.c.l.b16 %v118
  %v526 = vunpack.c.l.b16 %v119
  %v527 = vunpack.c.l.b16 %v120
  %v528 = vunpack.c.l.b16 %v121
  %v529 = vunpack.c.l.b16 %v122
  %v530 = vunpack.c.l.b16 %v123
  %v531 = vunpack.c.l.b16 %v124
  %v532 = vunpack.c.l.b16 %v125
  %v533 = vunpack.c.l.b16 %v126
  %v534 = vunpack.c.l.b16 %v127
  %v535 = vunpack.c.l.b16 %v128
  %v536 = vunpack.c.l.b16 %v129
  %v537 = vunpack.c.l.b16 %v130
  %v538 = vunpack.c.l.b16 %v131
  %v539 = vunpack.c.l.b16 %v132
  %v540 = vunpack.c.l.b16 %v133
  %v541 = vunpack.c.l.b16 %v134
  %v542 = vunpack.c.l.b16 %v135
  %v543 = vunpack.c.l.b16 %v136
  %v544 = vunpack.c.l.b16 %v137
  %v545 = vunpack.c.l.b16 %v138
  %v546 = vunpack.c.l.b16 %v139
  %v547 = vunpack.c.l.b16 %v140
  %v548 = vunpack.c.l.b16 %v141
  %v549 = vunpack.c.l.b16 %v142
  %v550 = vunpack.c.l.b16 %v143
  %v551 = vunpack.c.l.b16 %v144
  %v552 = vunpack.c.l.b16 %v145
  %v553 = vunpack.c.l.b16 %v146
  %v554 = vunpack.c.l.b16 %v147
  %v555 = vunpack.c.l.b16 %v148
  %v556 = vunpack.c.l.b16 %v149
  %v557 = vunpack.c.l.b16 %v150
  %v558 = vunpack.c.l.b16 %v151
  %v559 = vunpack.c.l.b16 %v152
  %v560 = vunpack.c.l.b16 %v153
  %v561 = vunpack.c.l.b16 %v154
  %v562 = vunpack.c.l.b16 %v155
  %v563 = vunpack.c.l.b16 %v156
  %v564 = vunpack.c.l.b16 %v157
  %v565 = vunpack.c.l.b16 %v158
  %v566 = vunpack.c.l.b16 %v159
  %v567 = vunpack.c.l.b16 %v160
  %v568 = vunpack.c.l.b16 %v161
  %v569 = vunpack.c.l.b16 %v162
  %v570 = vunpack.c.l.b16 %v163
  %v571 = vunpack.c.l.b16 %v164
  %v572 = vunpack.c.l.b16 %v165
  %v573 = vunpack.c.l.b16 %v166
  %v574 = vunpack.c.l.b16 %v167
  %v575 = vunpack.c.l.b16 %v168
  %v576 = vunpack.c.l.b16 %v169
  %v577 = vunpack.c.l.b16 %v170
  %v578 = vunpack.c.l.b16 %v171
  %v579 = vunpack.c.l.b16 %v172
  %v580 = vunpack.c.l.b16 %v173
  %v581 = vunpack.c.l.b16 %v174
  %v582 = vunpack.c.l.b16 %v175
  %v583 = vunpack.c.l.b16 %v176
  %v584 = vunpack.c.l.b16 %v177
  %v585 = vunpack.c.l.b16 %v178
  %v586 = vunpack.c.l.b16 %v179
  %v587 = vunpack.c.l.b16 %v180
  %v588 = vunpack.c.l.b16 %v181
  %v589 = vunpack.c.l.b16 %v182
  %v590 = vunpack.c.l.b16 %v183
  %v591 = vunpack.c.l.b16 %v184
  %v592 = vunpack.c.l.b16 %v185
  %v593 = vunpack.c.l.b16 %v186
  %v594 = vunpack.c.l.b16 %v187
  %v595 = vunpack.c.l.b16 %v188
  %v596 = vunpack.c.l.b16 %v189
  %v597 = vunpack.c.l.b16 %v190
  %v598 = vunpack.c.l.b16 %v191
  %v599 = vunpack.c.l.b16 %v192
  %v600 = vunpack.c.l.b16 %v193
  %v601 = vunpack.c.l.b16 %v194
  %v602 = vunpack.c.l.b16 %v195
  %v603 = vunpack.c.l.b16 %v196
  %v604 = vunpack.c.l.b16 %v197
  %v605 = vunpack.c.l.b16 %v198
  %v606 = vunpack.c.l.b16 %v199
  %v607 = vunpack.c.l.b16 %v200
  %v608 = vunpack.c.l.b16 %v201
  %v609 = vunpack.c.l.b16 %v202
  %v610 = vunpack.c.l.b16 %v203
  %v611 = vunpack.c.l.b16 %v204
  %v612 = vunpack.c.l.b16 %v205
  %v613 = vunpack.c.l.b16 %v206
  %v614 = vunpack.c.l.b16 %v207
  %v615 = vunpack.c.l.b16 %v208
  %v616 = vunpack.c.l.b16 %v209
  %v617 = vunpack.c.l.b16 %v210
  %v618 = vunpack.c.l.b16 %v211
  %v619 = vunpack.c.l.b16 %v212
  %v620 = vunpack.c.l.b16 %v213
  %v621 = vunpack.c.l.b16 %v214
  %v622 = vpack.c.b16 %v423, %v422
  %v623 = vpack.c.b16 %v425, %v424
  %v624 = vpack.c.b16 %v427, %v426
  %v625 = vpack.c.b16 %v429, %v428
  %v626 = vpack.c.b16 %v431, %v430
  %v627 = vpack.c.b16 %v433, %v432
  %v628 = vpack.c.b16 %v435, %v434
  %v629 = vpack.c.b16 %v437, %v436
  %v630 = vpack.c.b16 %v439, %v438
  %v631 = vpack.c.b16 %v441, %v440
  %v632 = vpack.c.b16 %v443, %v442
  %v633 = vpack.c.b16 %v445, %v444
  %v634 = vpack.c.b16 %v447, %v446
  %v635 = vpack.c.b16 %v449, %v448
  %v636 = vpack.c.b16 %v451, %v450
  %v637 = vpack.c.b16 %v453, %v452
  %v638 = vpack.c.b16 %v455, %v454
  %v639 = vpack.c.b16 %v457, %v456
  %v640 = vpack.c.b16 %v459, %v458
  %v641 = vpack.c.b16 %v461, %v460
  %v642 = vpack.c.b16 %v463, %v462
  %v643 = vpack.c.b16 %v465, %v464
  %v644 = vpack.c.b16 %v467, %v466
  %v645 = vpack.c.b16 %v469, %v468
  %v646 = vpack.c.b16 %v471, %v470
  %v647 = vpack.c.b16 %v473, %v472
  %v648 = vpack.c.b16 %v475, %v474
  %v649 = vpack.c.b16 %v477, %v476
  %v650 = vpack.c.b16 %v479, %v478
  %v651 = vpack.c.b16 %v481, %v480
  %v652 = vpack.c.b16 %v483, %v482
  %v653 = vpack.c.b16 %v485, %v484
  %v654 = vpack.c.b16 %v487, %v486
  %v655 = vpack.c.b16 %v489, %v488
  %v656 = vpack.c.b16 %v491, %v490
  %v657 = vpack.c.b16 %v493, %v492
  %v658 = vpack.c.b16 %v495, %v494
  %v659 = vpack.c.b16 %v497, %v496
  %v660 = vpack.c.b16 %v499, %v498
  %v661 = vpack.c.b16 %v501, %v500
  %v662 = vpack.c.b16 %v503, %v502
  %v663 = vpack.c.b16 %v505, %v504
  %v664 = vpack.c.b16 %v507, %v506
  %v665 = vpack.c.b16 %v509, %v508
  %v666 = vpack.c.b16 %v511, %v510
  %v667 = vpack.c.b16 %v513, %v512
  %v668 = vpack.c.b16 %v515, %v514
  %v669 = vpack.c.b16 %v517, %v516
  %v670 = vpack.c.b16 %v519, %v518
  %v671 = vpack.c.b16 %v521, %v520
  %v672 = vpack.c.b16 %v523, %v522
  %v673 = vpack.c.b16 %v525, %v524
  %v674 = vpack.c.b16 %v527, %v526
  %v675 = vpack.c.b16 %v529, %v528
  %v676 = vpack.c.b16 %v531, %v530
  %v677 = vpack.c.b16 %v533, %v532
  %v678 = vpack.c.b16 %v535, %v534
  %v679 = vpack.c.b16 %v537, %v536
  %v680 = vpack.c.b16 %v539, %v538
  %v681 = vpack.c.b16 %v541, %v540
  %v682 = vpack.c.b16 %v543, %v542
  %v683 = vpack.c.b16 %v545, %v544
  %v684 = vpack.c.b16 %v547, %v546
  %v685 = vpack.c.b16 %v549, %v548
  %v686 = vpack.c.b16 %v551, %v550
  %v687 = vpack.c.b16 %v553, %v552
  %v688 = vpack.c.b16 %v555, %v554
  %v689 = vpack.c.b16 %v557, %v556
  %v690 = vpack.c.b16 %v559, %v558
  %v691 = vpack.c.b16 %v561, %v560
  %v692 = vpack.c.b16 %v563, %v562
  %v693 = vpack.c.b16 %v565, %v564
  %v694 = vpack.c.b16 %v567, %v566
  %v695 = vpack.c.b16 %v569, %v568
  %v696 = vpack.c.b16 %v571, %v570
  %v697 = vpack.c.b16 %v573, %v572
  %v698 = vpack.c.b16 %v575, %v574
  %v699 = vpack.c.b16 %v577, %v576
  %v700 = vpack.c.b16 %v579, %v578
  %v701 = vpack.c.b16 %v581, %v580
  %v702 = vpack.c.b16 %v583, %v582
  %v703 = vpack.c.b16 %v585, %v584
  %v704 = vpack.c.b16 %v587, %v586
  %v705 = vpack.c.b16 %v589, %v588
  %v706 = vpack.c.b16 %v591, %v590
  %v707 = vpack.c.b16 %v593, %v592
  %v708 = vpack.c.b16 %v595, %v594
  %v709 = vpack.c.b16 %v597, %v596
  %v710 = vpack.c.b16 %v599, %v598
  %v711 = vpack.c.b16 %v601, %v600
  %v712 = vpack.c.b16 %v603, %v602
  %v713 = vpack.c.b16 %v605, %v604
  %v714 = vpack.c.b16 %v607, %v606
  %v715 = vpack.c.b16 %v609, %v608
  %v716 = vpack.c.b16 %v611, %v610
  %v717 = vpack.c.b16 %v613, %v612
  %v718 = vpack.c.b16 %v615, %v614
  %v719 = vpack.c.b16 %v617, %v616
  %v720 = vpack.c.b16 %v619, %v618
  %v721 = vpack.c.b16 %v621, %v620
  %v729 = vunpack.c.l.b16 %v215
  %v730 = vunpack.c.l.b16 %v216
  %v731 = vunpack.c.l.b16 %v217
  %v732 = vunpack.c.l.b16 %v218
  %v733 = vunpack.c.l.b16 %v219
  %v734 = vunpack.c.l.b16 %v220
  %v735 = vunpack.c.l.b16 %v221
  %v736 = vpack.c.b16 %v730, %v729
  %v737 = vpack.c.b16 %v732, %v731
  %v738 = vpack.c.b16 %v734, %v733
  %v739 = vpack.c.b16 %v735, %v735
  %vm743 = vcmask 400384
  %v745 = vsel %vm743, %v622, 0
  %v748 = vsel %vm743, %v623, 0
  %v751 = vsel %vm743, %v624, 0
  %v754 = vsel %vm743, %v625, 0
  %v757 = vsel %vm743, %v626, 0
  %v760 = vsel %vm743, %v627, 0
  %v763 = vsel %vm743, %v628, 0
  %v766 = vsel %vm743, %v629, 0
  %v769 = vsel %vm743, %v630, 0
  %v772 = vsel %vm743, %v631, 0
  %v775 = vsel %vm743, %v632, 0
  %v778 = vsel %vm743, %v633, 0
  %v781 = vsel %vm743, %v634, 0
  %v784 = vsel %vm743, %v635, 0
  %v787 = vsel %vm743, %v636, 0
  %v790 = vsel %vm743, %v637, 0
  %v793 = vsel %vm743, %v638, 0
  %v796 = vsel %vm743, %v639, 0
  %v799 = vsel %vm743, %v640, 0
  %v802 = vsel %vm743, %v641, 0
  %v805 = vsel %vm743, %v642, 0
  %v808 = vsel %vm743, %v643, 0
  %v811 = vsel %vm743, %v644, 0
  %v814 = vsel %vm743, %v645, 0
  %v817 = vsel %vm743, %v646, 0
  %v820 = vsel %vm743, %v647, 0
  %v823 = vsel %vm743, %v648, 0
  %v826 = vsel %vm743, %v649, 0
  %v829 = vsel %vm743, %v650, 0
  %v832 = vsel %vm743, %v651, 0
  %v835 = vsel %vm743, %v652, 0
  %v838 = vsel %vm743, %v653, 0
  %v841 = vsel %vm743, %v654, 0
  %v844 = vsel %vm743, %v655, 0
  %v847 = vsel %vm743, %v656, 0
  %v850 = vsel %vm743, %v657, 0
  %v853 = vsel %vm743, %v658, 0
  %v856 = vsel %vm743, %v659, 0
  %v859 = vsel %vm743, %v660, 0
  %v862 = vsel %vm743, %v661, 0
  %v865 = vsel %vm743, %v662, 0
  %v868 = vsel %vm743, %v663, 0
  %v871 = vsel %vm743, %v664, 0
  %v874 = vsel %vm743, %v665, 0
  %v877 = vsel %vm743, %v666, 0
  %v880 = vsel %vm743, %v667, 0
  %v883 = vsel %vm743, %v668, 0
  %v886 = vsel %vm743, %v669, 0
  %v889 = vsel %vm743, %v670, 0
  %v892 = vsel %vm743, %v671, 0
  %v895 = vsel %vm743, %v672, 0
  %v898 = vsel %vm743, %v673, 0
  %v901 = vsel %vm743, %v674, 0
  %v904 = vsel %vm743, %v675, 0
  %v907 = vsel %vm743, %v676, 0
  %v910 = vsel %vm743, %v677, 0
  %v913 = vsel %vm743, %v678, 0
  %v916 = vsel %vm743, %v679, 0
  %v919 = vsel %vm743, %v680, 0
  %v922 = vsel %vm743, %v681, 0
  %v925 = vsel %vm743, %v682, 0
  %v928 = vsel %vm743, %v683, 0
  %v931 = vsel %vm743, %v684, 0
  %v934 = vsel %vm743, %v685, 0
  %v937 = vsel %vm743, %v686, 0
  %v940 = vsel %vm743, %v687, 0
  %v943 = vsel %vm743, %v688, 0
  %v946 = vsel %vm743, %v689, 0
  %v949 = vsel %vm743, %v690, 0
  %v952 = vsel %vm743, %v691, 0
  %v955 = vsel %vm743, %v692, 0
  %v958 = vsel %vm743, %v693, 0
  %v961 = vsel %vm743, %v694, 0
  %v964 = vsel %vm743, %v695, 0
  %v967 = vsel %vm743, %v696, 0
  %v970 = vsel %vm743, %v697, 0
  %v973 = vsel %vm743, %v698, 0
  %v976 = vsel %vm743, %v699, 0
  %v979 = vsel %vm743, %v700, 0
  %v982 = vsel %vm743, %v701, 0
  %v985 = vsel %vm743, %v702, 0
  %v988 = vsel %vm743, %v703, 0
  %v991 = vsel %vm743, %v704, 0
  %v994 = vsel %vm743, %v705, 0
  %v997 = vsel %vm743, %v706, 0
  %v1000 = vsel %vm743, %v707, 0
  %v1003 = vsel %vm743, %v708, 0
  %v1006 = vsel %vm743, %v709, 0
  %v1009 = vsel %vm743, %v710, 0
  %v1012 = vsel %vm743, %v711, 0
  %v1015 = vsel %vm743, %v712, 0
  %v1018 = vsel %vm743, %v713, 0
  %v1021 = vsel %vm743, %v714, 0
  %v1024 = vsel %vm743, %v715, 0
  %v1027 = vsel %vm743, %v716, 0
  %v1030 = vsel %vm743, %v717, 0
  %v1033 = vsel %vm743, %v718, 0
  %v1036 = vsel %vm743, %v719, 0
  %v1039 = vsel %vm743, %v720, 0
  %v1042 = vsel %vm743, %v721, 0
  %vm1044 = vcmask 1040384
  %v1045 = vsel 0, 4294967295, 65535
  %v1046 = vsel %vm1044, %v1045, 0
  %v1048 = vand.u32 %v739, %v1046
  %1050 = vmatpush.bf16.msra.mxu0 0
  %1051 = vmatpush.bf16.msra.mxu0 0
  %1052 = vmatpush.bf16.msra.mxu0 0
  %1053 = vmatpush.bf16.msra.mxu0 0
  %1054 = vmatpush.bf16.msra.mxu0 %v1048
  %1055 = vmatpush.bf16.msra.mxu0 %v738
  %1056 = vmatpush.bf16.msra.mxu0 %v737
  %1057 = vmatpush.bf16.msra.mxu0 %v736
  %1058 = vmatmul.bf16.gmra.mxu0 %v745
  %v1059 = vpop.f32.mrf.mxu0
  %v1060 = vadd.f32 0.0, %v1059
  %v1061 = vpop.f32.mrf.mxu0
  %v1062 = vadd.f32 0.0, %v1061
  %1063 = vmatmul.bf16.gmra.mxu0 %v748
  %v1064 = vpop.f32.mrf.mxu0
  %v1065 = vadd.f32 0.0, %v1064
  %v1066 = vpop.f32.mrf.mxu0
  %v1067 = vadd.f32 0.0, %v1066
  %1068 = vmatmul.bf16.gmra.mxu0 %v751
  %v1069 = vpop.f32.mrf.mxu0
  %v1070 = vadd.f32 0.0, %v1069
  %v1071 = vpop.f32.mrf.mxu0
  %v1072 = vadd.f32 0.0, %v1071
  %1073 = vmatmul.bf16.gmra.mxu0 %v754
  %v1074 = vpop.f32.mrf.mxu0
  %v1075 = vadd.f32 0.0, %v1074
  %v1076 = vpop.f32.mrf.mxu0
  %v1077 = vadd.f32 0.0, %v1076
  %1078 = vmatmul.bf16.gmra.mxu0 %v757
  %v1079 = vpop.f32.mrf.mxu0
  %v1080 = vadd.f32 0.0, %v1079
  %v1081 = vpop.f32.mrf.mxu0
  %v1082 = vadd.f32 0.0, %v1081
  %1083 = vmatmul.bf16.gmra.mxu0 %v760
  %v1084 = vpop.f32.mrf.mxu0
  %v1085 = vadd.f32 0.0, %v1084
  %v1086 = vpop.f32.mrf.mxu0
  %v1087 = vadd.f32 0.0, %v1086
  %1088 = vmatmul.bf16.gmra.mxu0 %v763
  %v1089 = vpop.f32.mrf.mxu0
  %v1090 = vadd.f32 0.0, %v1089
  %v1091 = vpop.f32.mrf.mxu0
  %v1092 = vadd.f32 0.0, %v1091
  %1093 = vmatmul.bf16.gmra.mxu0 %v766
  %v1094 = vpop.f32.mrf.mxu0
  %v1095 = vadd.f32 0.0, %v1094
  %v1096 = vpop.f32.mrf.mxu0
  %v1097 = vadd.f32 0.0, %v1096
  %1098 = vmatmul.bf16.gmra.mxu0 %v769
  %v1099 = vpop.f32.mrf.mxu0
  %v1100 = vadd.f32 0.0, %v1099
  %v1101 = vpop.f32.mrf.mxu0
  %v1102 = vadd.f32 0.0, %v1101
  %1103 = vmatmul.bf16.gmra.mxu0 %v772
  %v1104 = vpop.f32.mrf.mxu0
  %v1105 = vadd.f32 0.0, %v1104
  %v1106 = vpop.f32.mrf.mxu0
  %v1107 = vadd.f32 0.0, %v1106
  %1108 = vmatmul.bf16.gmra.mxu0 %v775
  %v1109 = vpop.f32.mrf.mxu0
  %v1110 = vadd.f32 0.0, %v1109
  %v1111 = vpop.f32.mrf.mxu0
  %v1112 = vadd.f32 0.0, %v1111
  %1113 = vmatmul.bf16.gmra.mxu0 %v778
  %v1114 = vpop.f32.mrf.mxu0
  %v1115 = vadd.f32 0.0, %v1114
  %v1116 = vpop.f32.mrf.mxu0
  %v1117 = vadd.f32 0.0, %v1116
  %1118 = vmatmul.bf16.gmra.mxu0 %v781
  %v1119 = vpop.f32.mrf.mxu0
  %v1120 = vadd.f32 0.0, %v1119
  %v1121 = vpop.f32.mrf.mxu0
  %v1122 = vadd.f32 0.0, %v1121
  %1123 = vmatmul.bf16.gmra.mxu0 %v784
  %v1124 = vpop.f32.mrf.mxu0
  %v1125 = vadd.f32 0.0, %v1124
  %v1126 = vpop.f32.mrf.mxu0
  %v1127 = vadd.f32 0.0, %v1126
  %1128 = vmatmul.bf16.gmra.mxu0 %v787
  %v1129 = vpop.f32.mrf.mxu0
  %v1130 = vadd.f32 0.0, %v1129
  %v1131 = vpop.f32.mrf.mxu0
  %v1132 = vadd.f32 0.0, %v1131
  %1133 = vmatmul.bf16.gmra.mxu0 %v790
  %v1134 = vpop.f32.mrf.mxu0
  %v1135 = vadd.f32 0.0, %v1134
  %v1136 = vpop.f32.mrf.mxu0
  %v1137 = vadd.f32 0.0, %v1136
  %1138 = vmatmul.bf16.gmra.mxu0 %v793
  %v1139 = vpop.f32.mrf.mxu0
  %v1140 = vadd.f32 0.0, %v1139
  %v1141 = vpop.f32.mrf.mxu0
  %v1142 = vadd.f32 0.0, %v1141
  %1143 = vmatmul.bf16.gmra.mxu0 %v796
  %v1144 = vpop.f32.mrf.mxu0
  %v1145 = vadd.f32 0.0, %v1144
  %v1146 = vpop.f32.mrf.mxu0
  %v1147 = vadd.f32 0.0, %v1146
  %1148 = vmatmul.bf16.gmra.mxu0 %v799
  %v1149 = vpop.f32.mrf.mxu0
  %v1150 = vadd.f32 0.0, %v1149
  %v1151 = vpop.f32.mrf.mxu0
  %v1152 = vadd.f32 0.0, %v1151
  %1153 = vmatmul.bf16.gmra.mxu0 %v802
  %v1154 = vpop.f32.mrf.mxu0
  %v1155 = vadd.f32 0.0, %v1154
  %v1156 = vpop.f32.mrf.mxu0
  %v1157 = vadd.f32 0.0, %v1156
  %1158 = vmatmul.bf16.gmra.mxu0 %v805
  %v1159 = vpop.f32.mrf.mxu0
  %v1160 = vadd.f32 0.0, %v1159
  %v1161 = vpop.f32.mrf.mxu0
  %v1162 = vadd.f32 0.0, %v1161
  %1163 = vmatmul.bf16.gmra.mxu0 %v808
  %v1164 = vpop.f32.mrf.mxu0
  %v1165 = vadd.f32 0.0, %v1164
  %v1166 = vpop.f32.mrf.mxu0
  %v1167 = vadd.f32 0.0, %v1166
  %1168 = vmatmul.bf16.gmra.mxu0 %v811
  %v1169 = vpop.f32.mrf.mxu0
  %v1170 = vadd.f32 0.0, %v1169
  %v1171 = vpop.f32.mrf.mxu0
  %v1172 = vadd.f32 0.0, %v1171
  %1173 = vmatmul.bf16.gmra.mxu0 %v814
  %v1174 = vpop.f32.mrf.mxu0
  %v1175 = vadd.f32 0.0, %v1174
  %v1176 = vpop.f32.mrf.mxu0
  %v1177 = vadd.f32 0.0, %v1176
  %1178 = vmatmul.bf16.gmra.mxu0 %v817
  %v1179 = vpop.f32.mrf.mxu0
  %v1180 = vadd.f32 0.0, %v1179
  %v1181 = vpop.f32.mrf.mxu0
  %v1182 = vadd.f32 0.0, %v1181
  %1183 = vmatmul.bf16.gmra.mxu0 %v820
  %v1184 = vpop.f32.mrf.mxu0
  %v1185 = vadd.f32 0.0, %v1184
  %v1186 = vpop.f32.mrf.mxu0
  %v1187 = vadd.f32 0.0, %v1186
  %1188 = vmatmul.bf16.gmra.mxu0 %v823
  %v1189 = vpop.f32.mrf.mxu0
  %v1190 = vadd.f32 0.0, %v1189
  %v1191 = vpop.f32.mrf.mxu0
  %v1192 = vadd.f32 0.0, %v1191
  %1193 = vmatmul.bf16.gmra.mxu0 %v826
  %v1194 = vpop.f32.mrf.mxu0
  %v1195 = vadd.f32 0.0, %v1194
  %v1196 = vpop.f32.mrf.mxu0
  %v1197 = vadd.f32 0.0, %v1196
  %1198 = vmatmul.bf16.gmra.mxu0 %v829
  %v1199 = vpop.f32.mrf.mxu0
  %v1200 = vadd.f32 0.0, %v1199
  %v1201 = vpop.f32.mrf.mxu0
  %v1202 = vadd.f32 0.0, %v1201
  %1203 = vmatmul.bf16.gmra.mxu0 %v832
  %v1204 = vpop.f32.mrf.mxu0
  %v1205 = vadd.f32 0.0, %v1204
  %v1206 = vpop.f32.mrf.mxu0
  %v1207 = vadd.f32 0.0, %v1206
  %1208 = vmatmul.bf16.gmra.mxu0 %v835
  %v1209 = vpop.f32.mrf.mxu0
  %v1210 = vadd.f32 0.0, %v1209
  %v1211 = vpop.f32.mrf.mxu0
  %v1212 = vadd.f32 0.0, %v1211
  %1213 = vmatmul.bf16.gmra.mxu0 %v838
  %v1214 = vpop.f32.mrf.mxu0
  %v1215 = vadd.f32 0.0, %v1214
  %v1216 = vpop.f32.mrf.mxu0
  %v1217 = vadd.f32 0.0, %v1216
  %1218 = vmatmul.bf16.gmra.mxu0 %v841
  %v1219 = vpop.f32.mrf.mxu0
  %v1220 = vadd.f32 0.0, %v1219
  %v1221 = vpop.f32.mrf.mxu0
  %v1222 = vadd.f32 0.0, %v1221
  %1223 = vmatmul.bf16.gmra.mxu0 %v844
  %v1224 = vpop.f32.mrf.mxu0
  %v1225 = vadd.f32 0.0, %v1224
  %v1226 = vpop.f32.mrf.mxu0
  %v1227 = vadd.f32 0.0, %v1226
  %1228 = vmatmul.bf16.gmra.mxu0 %v847
  %v1229 = vpop.f32.mrf.mxu0
  %v1230 = vadd.f32 0.0, %v1229
  %v1231 = vpop.f32.mrf.mxu0
  %v1232 = vadd.f32 0.0, %v1231
  %1233 = vmatmul.bf16.gmra.mxu0 %v850
  %v1234 = vpop.f32.mrf.mxu0
  %v1235 = vadd.f32 0.0, %v1234
  %v1236 = vpop.f32.mrf.mxu0
  %v1237 = vadd.f32 0.0, %v1236
  %1238 = vmatmul.bf16.gmra.mxu0 %v853
  %v1239 = vpop.f32.mrf.mxu0
  %v1240 = vadd.f32 0.0, %v1239
  %v1241 = vpop.f32.mrf.mxu0
  %v1242 = vadd.f32 0.0, %v1241
  %1243 = vmatmul.bf16.gmra.mxu0 %v856
  %v1244 = vpop.f32.mrf.mxu0
  %v1245 = vadd.f32 0.0, %v1244
  %v1246 = vpop.f32.mrf.mxu0
  %v1247 = vadd.f32 0.0, %v1246
  %1248 = vmatmul.bf16.gmra.mxu0 %v859
  %v1249 = vpop.f32.mrf.mxu0
  %v1250 = vadd.f32 0.0, %v1249
  %v1251 = vpop.f32.mrf.mxu0
  %v1252 = vadd.f32 0.0, %v1251
  %1253 = vmatmul.bf16.gmra.mxu0 %v862
  %v1254 = vpop.f32.mrf.mxu0
  %v1255 = vadd.f32 0.0, %v1254
  %v1256 = vpop.f32.mrf.mxu0
  %v1257 = vadd.f32 0.0, %v1256
  %1258 = vmatmul.bf16.gmra.mxu0 %v865
  %v1259 = vpop.f32.mrf.mxu0
  %v1260 = vadd.f32 0.0, %v1259
  %v1261 = vpop.f32.mrf.mxu0
  %v1262 = vadd.f32 0.0, %v1261
  %1263 = vmatmul.bf16.gmra.mxu0 %v868
  %v1264 = vpop.f32.mrf.mxu0
  %v1265 = vadd.f32 0.0, %v1264
  %v1266 = vpop.f32.mrf.mxu0
  %v1267 = vadd.f32 0.0, %v1266
  %1268 = vmatmul.bf16.gmra.mxu0 %v871
  %v1269 = vpop.f32.mrf.mxu0
  %v1270 = vadd.f32 0.0, %v1269
  %v1271 = vpop.f32.mrf.mxu0
  %v1272 = vadd.f32 0.0, %v1271
  %1273 = vmatmul.bf16.gmra.mxu0 %v874
  %v1274 = vpop.f32.mrf.mxu0
  %v1275 = vadd.f32 0.0, %v1274
  %v1276 = vpop.f32.mrf.mxu0
  %v1277 = vadd.f32 0.0, %v1276
  %1278 = vmatmul.bf16.gmra.mxu0 %v877
  %v1279 = vpop.f32.mrf.mxu0
  %v1280 = vadd.f32 0.0, %v1279
  %v1281 = vpop.f32.mrf.mxu0
  %v1282 = vadd.f32 0.0, %v1281
  %1283 = vmatmul.bf16.gmra.mxu0 %v880
  %v1284 = vpop.f32.mrf.mxu0
  %v1285 = vadd.f32 0.0, %v1284
  %v1286 = vpop.f32.mrf.mxu0
  %v1287 = vadd.f32 0.0, %v1286
  %1288 = vmatmul.bf16.gmra.mxu0 %v883
  %v1289 = vpop.f32.mrf.mxu0
  %v1290 = vadd.f32 0.0, %v1289
  %v1291 = vpop.f32.mrf.mxu0
  %v1292 = vadd.f32 0.0, %v1291
  %1293 = vmatmul.bf16.gmra.mxu0 %v886
  %v1294 = vpop.f32.mrf.mxu0
  %v1295 = vadd.f32 0.0, %v1294
  %v1296 = vpop.f32.mrf.mxu0
  %v1297 = vadd.f32 0.0, %v1296
  %1298 = vmatmul.bf16.gmra.mxu0 %v889
  %v1299 = vpop.f32.mrf.mxu0
  %v1300 = vadd.f32 0.0, %v1299
  %v1301 = vpop.f32.mrf.mxu0
  %v1302 = vadd.f32 0.0, %v1301
  %1303 = vmatmul.bf16.gmra.mxu0 %v892
  %v1304 = vpop.f32.mrf.mxu0
  %v1305 = vadd.f32 0.0, %v1304
  %v1306 = vpop.f32.mrf.mxu0
  %v1307 = vadd.f32 0.0, %v1306
  %1308 = vmatmul.bf16.gmra.mxu0 %v895
  %v1309 = vpop.f32.mrf.mxu0
  %v1310 = vadd.f32 0.0, %v1309
  %v1311 = vpop.f32.mrf.mxu0
  %v1312 = vadd.f32 0.0, %v1311
  %1313 = vmatmul.bf16.gmra.mxu0 %v898
  %v1314 = vpop.f32.mrf.mxu0
  %v1315 = vadd.f32 0.0, %v1314
  %v1316 = vpop.f32.mrf.mxu0
  %v1317 = vadd.f32 0.0, %v1316
  %1318 = vmatmul.bf16.gmra.mxu0 %v901
  %v1319 = vpop.f32.mrf.mxu0
  %v1320 = vadd.f32 0.0, %v1319
  %v1321 = vpop.f32.mrf.mxu0
  %v1322 = vadd.f32 0.0, %v1321
  %1323 = vmatmul.bf16.gmra.mxu0 %v904
  %v1324 = vpop.f32.mrf.mxu0
  %v1325 = vadd.f32 0.0, %v1324
  %v1326 = vpop.f32.mrf.mxu0
  %v1327 = vadd.f32 0.0, %v1326
  %1328 = vmatmul.bf16.gmra.mxu0 %v907
  %v1329 = vpop.f32.mrf.mxu0
  %v1330 = vadd.f32 0.0, %v1329
  %v1331 = vpop.f32.mrf.mxu0
  %v1332 = vadd.f32 0.0, %v1331
  %1333 = vmatmul.bf16.gmra.mxu0 %v910
  %v1334 = vpop.f32.mrf.mxu0
  %v1335 = vadd.f32 0.0, %v1334
  %v1336 = vpop.f32.mrf.mxu0
  %v1337 = vadd.f32 0.0, %v1336
  %1338 = vmatmul.bf16.gmra.mxu0 %v913
  %v1339 = vpop.f32.mrf.mxu0
  %v1340 = vadd.f32 0.0, %v1339
  %v1341 = vpop.f32.mrf.mxu0
  %v1342 = vadd.f32 0.0, %v1341
  %1343 = vmatmul.bf16.gmra.mxu0 %v916
  %v1344 = vpop.f32.mrf.mxu0
  %v1345 = vadd.f32 0.0, %v1344
  %v1346 = vpop.f32.mrf.mxu0
  %v1347 = vadd.f32 0.0, %v1346
  %1348 = vmatmul.bf16.gmra.mxu0 %v919
  %v1349 = vpop.f32.mrf.mxu0
  %v1350 = vadd.f32 0.0, %v1349
  %v1351 = vpop.f32.mrf.mxu0
  %v1352 = vadd.f32 0.0, %v1351
  %1353 = vmatmul.bf16.gmra.mxu0 %v922
  %v1354 = vpop.f32.mrf.mxu0
  %v1355 = vadd.f32 0.0, %v1354
  %v1356 = vpop.f32.mrf.mxu0
  %v1357 = vadd.f32 0.0, %v1356
  %1358 = vmatmul.bf16.gmra.mxu0 %v925
  %v1359 = vpop.f32.mrf.mxu0
  %v1360 = vadd.f32 0.0, %v1359
  %v1361 = vpop.f32.mrf.mxu0
  %v1362 = vadd.f32 0.0, %v1361
  %1363 = vmatmul.bf16.gmra.mxu0 %v928
  %v1364 = vpop.f32.mrf.mxu0
  %v1365 = vadd.f32 0.0, %v1364
  %v1366 = vpop.f32.mrf.mxu0
  %v1367 = vadd.f32 0.0, %v1366
  %1368 = vmatmul.bf16.gmra.mxu0 %v931
  %v1369 = vpop.f32.mrf.mxu0
  %v1370 = vadd.f32 0.0, %v1369
  %v1371 = vpop.f32.mrf.mxu0
  %v1372 = vadd.f32 0.0, %v1371
  %1373 = vmatmul.bf16.gmra.mxu0 %v934
  %v1374 = vpop.f32.mrf.mxu0
  %v1375 = vadd.f32 0.0, %v1374
  %v1376 = vpop.f32.mrf.mxu0
  %v1377 = vadd.f32 0.0, %v1376
  %1378 = vmatmul.bf16.gmra.mxu0 %v937
  %v1379 = vpop.f32.mrf.mxu0
  %v1380 = vadd.f32 0.0, %v1379
  %v1381 = vpop.f32.mrf.mxu0
  %v1382 = vadd.f32 0.0, %v1381
  %1383 = vmatmul.bf16.gmra.mxu0 %v940
  %v1384 = vpop.f32.mrf.mxu0
  %v1385 = vadd.f32 0.0, %v1384
  %v1386 = vpop.f32.mrf.mxu0
  %v1387 = vadd.f32 0.0, %v1386
  %1388 = vmatmul.bf16.gmra.mxu0 %v943
  %v1389 = vpop.f32.mrf.mxu0
  %v1390 = vadd.f32 0.0, %v1389
  %v1391 = vpop.f32.mrf.mxu0
  %v1392 = vadd.f32 0.0, %v1391
  %1393 = vmatmul.bf16.gmra.mxu0 %v946
  %v1394 = vpop.f32.mrf.mxu0
  %v1395 = vadd.f32 0.0, %v1394
  %v1396 = vpop.f32.mrf.mxu0
  %v1397 = vadd.f32 0.0, %v1396
  %1398 = vmatmul.bf16.gmra.mxu0 %v949
  %v1399 = vpop.f32.mrf.mxu0
  %v1400 = vadd.f32 0.0, %v1399
  %v1401 = vpop.f32.mrf.mxu0
  %v1402 = vadd.f32 0.0, %v1401
  %1403 = vmatmul.bf16.gmra.mxu0 %v952
  %v1404 = vpop.f32.mrf.mxu0
  %v1405 = vadd.f32 0.0, %v1404
  %v1406 = vpop.f32.mrf.mxu0
  %v1407 = vadd.f32 0.0, %v1406
  %1408 = vmatmul.bf16.gmra.mxu0 %v955
  %v1409 = vpop.f32.mrf.mxu0
  %v1410 = vadd.f32 0.0, %v1409
  %v1411 = vpop.f32.mrf.mxu0
  %v1412 = vadd.f32 0.0, %v1411
  %1413 = vmatmul.bf16.gmra.mxu0 %v958
  %v1414 = vpop.f32.mrf.mxu0
  %v1415 = vadd.f32 0.0, %v1414
  %v1416 = vpop.f32.mrf.mxu0
  %v1417 = vadd.f32 0.0, %v1416
  %1418 = vmatmul.bf16.gmra.mxu0 %v961
  %v1419 = vpop.f32.mrf.mxu0
  %v1420 = vadd.f32 0.0, %v1419
  %v1421 = vpop.f32.mrf.mxu0
  %v1422 = vadd.f32 0.0, %v1421
  %1423 = vmatmul.bf16.gmra.mxu0 %v964
  %v1424 = vpop.f32.mrf.mxu0
  %v1425 = vadd.f32 0.0, %v1424
  %v1426 = vpop.f32.mrf.mxu0
  %v1427 = vadd.f32 0.0, %v1426
  %1428 = vmatmul.bf16.gmra.mxu0 %v967
  %v1429 = vpop.f32.mrf.mxu0
  %v1430 = vadd.f32 0.0, %v1429
  %v1431 = vpop.f32.mrf.mxu0
  %v1432 = vadd.f32 0.0, %v1431
  %1433 = vmatmul.bf16.gmra.mxu0 %v970
  %v1434 = vpop.f32.mrf.mxu0
  %v1435 = vadd.f32 0.0, %v1434
  %v1436 = vpop.f32.mrf.mxu0
  %v1437 = vadd.f32 0.0, %v1436
  %1438 = vmatmul.bf16.gmra.mxu0 %v973
  %v1439 = vpop.f32.mrf.mxu0
  %v1440 = vadd.f32 0.0, %v1439
  %v1441 = vpop.f32.mrf.mxu0
  %v1442 = vadd.f32 0.0, %v1441
  %1443 = vmatmul.bf16.gmra.mxu0 %v976
  %v1444 = vpop.f32.mrf.mxu0
  %v1445 = vadd.f32 0.0, %v1444
  %v1446 = vpop.f32.mrf.mxu0
  %v1447 = vadd.f32 0.0, %v1446
  %1448 = vmatmul.bf16.gmra.mxu0 %v979
  %v1449 = vpop.f32.mrf.mxu0
  %v1450 = vadd.f32 0.0, %v1449
  %v1451 = vpop.f32.mrf.mxu0
  %v1452 = vadd.f32 0.0, %v1451
  %1453 = vmatmul.bf16.gmra.mxu0 %v982
  %v1454 = vpop.f32.mrf.mxu0
  %v1455 = vadd.f32 0.0, %v1454
  %v1456 = vpop.f32.mrf.mxu0
  %v1457 = vadd.f32 0.0, %v1456
  %1458 = vmatmul.bf16.gmra.mxu0 %v985
  %v1459 = vpop.f32.mrf.mxu0
  %v1460 = vadd.f32 0.0, %v1459
  %v1461 = vpop.f32.mrf.mxu0
  %v1462 = vadd.f32 0.0, %v1461
  %1463 = vmatmul.bf16.gmra.mxu0 %v988
  %v1464 = vpop.f32.mrf.mxu0
  %v1465 = vadd.f32 0.0, %v1464
  %v1466 = vpop.f32.mrf.mxu0
  %v1467 = vadd.f32 0.0, %v1466
  %1468 = vmatmul.bf16.gmra.mxu0 %v991
  %v1469 = vpop.f32.mrf.mxu0
  %v1470 = vadd.f32 0.0, %v1469
  %v1471 = vpop.f32.mrf.mxu0
  %v1472 = vadd.f32 0.0, %v1471
  %1473 = vmatmul.bf16.gmra.mxu0 %v994
  %v1474 = vpop.f32.mrf.mxu0
  %v1475 = vadd.f32 0.0, %v1474
  %v1476 = vpop.f32.mrf.mxu0
  %v1477 = vadd.f32 0.0, %v1476
  %1478 = vmatmul.bf16.gmra.mxu0 %v997
  %v1479 = vpop.f32.mrf.mxu0
  %v1480 = vadd.f32 0.0, %v1479
  %v1481 = vpop.f32.mrf.mxu0
  %v1482 = vadd.f32 0.0, %v1481
  %1483 = vmatmul.bf16.gmra.mxu0 %v1000
  %v1484 = vpop.f32.mrf.mxu0
  %v1485 = vadd.f32 0.0, %v1484
  %v1486 = vpop.f32.mrf.mxu0
  %v1487 = vadd.f32 0.0, %v1486
  %1488 = vmatmul.bf16.gmra.mxu0 %v1003
  %v1489 = vpop.f32.mrf.mxu0
  %v1490 = vadd.f32 0.0, %v1489
  %v1491 = vpop.f32.mrf.mxu0
  %v1492 = vadd.f32 0.0, %v1491
  %1493 = vmatmul.bf16.gmra.mxu0 %v1006
  %v1494 = vpop.f32.mrf.mxu0
  %v1495 = vadd.f32 0.0, %v1494
  %v1496 = vpop.f32.mrf.mxu0
  %v1497 = vadd.f32 0.0, %v1496
  %1498 = vmatmul.bf16.gmra.mxu0 %v1009
  %v1499 = vpop.f32.mrf.mxu0
  %v1500 = vadd.f32 0.0, %v1499
  %v1501 = vpop.f32.mrf.mxu0
  %v1502 = vadd.f32 0.0, %v1501
  %1503 = vmatmul.bf16.gmra.mxu0 %v1012
  %v1504 = vpop.f32.mrf.mxu0
  %v1505 = vadd.f32 0.0, %v1504
  %v1506 = vpop.f32.mrf.mxu0
  %v1507 = vadd.f32 0.0, %v1506
  %1508 = vmatmul.bf16.gmra.mxu0 %v1015
  %v1509 = vpop.f32.mrf.mxu0
  %v1510 = vadd.f32 0.0, %v1509
  %v1511 = vpop.f32.mrf.mxu0
  %v1512 = vadd.f32 0.0, %v1511
  %1513 = vmatmul.bf16.gmra.mxu0 %v1018
  %v1514 = vpop.f32.mrf.mxu0
  %v1515 = vadd.f32 0.0, %v1514
  %v1516 = vpop.f32.mrf.mxu0
  %v1517 = vadd.f32 0.0, %v1516
  %1518 = vmatmul.bf16.gmra.mxu0 %v1021
  %v1519 = vpop.f32.mrf.mxu0
  %v1520 = vadd.f32 0.0, %v1519
  %v1521 = vpop.f32.mrf.mxu0
  %v1522 = vadd.f32 0.0, %v1521
  %1523 = vmatmul.bf16.gmra.mxu0 %v1024
  %v1524 = vpop.f32.mrf.mxu0
  %v1525 = vadd.f32 0.0, %v1524
  %v1526 = vpop.f32.mrf.mxu0
  %v1527 = vadd.f32 0.0, %v1526
  %1528 = vmatmul.bf16.gmra.mxu0 %v1027
  %v1529 = vpop.f32.mrf.mxu0
  %v1530 = vadd.f32 0.0, %v1529
  %v1531 = vpop.f32.mrf.mxu0
  %v1532 = vadd.f32 0.0, %v1531
  %1533 = vmatmul.bf16.gmra.mxu0 %v1030
  %v1534 = vpop.f32.mrf.mxu0
  %v1535 = vadd.f32 0.0, %v1534
  %v1536 = vpop.f32.mrf.mxu0
  %v1537 = vadd.f32 0.0, %v1536
  %1538 = vmatmul.bf16.gmra.mxu0 %v1033
  %v1539 = vpop.f32.mrf.mxu0
  %v1540 = vadd.f32 0.0, %v1539
  %v1541 = vpop.f32.mrf.mxu0
  %v1542 = vadd.f32 0.0, %v1541
  %1543 = vmatmul.bf16.gmra.mxu0 %v1036
  %v1544 = vpop.f32.mrf.mxu0
  %v1545 = vadd.f32 0.0, %v1544
  %v1546 = vpop.f32.mrf.mxu0
  %v1547 = vadd.f32 0.0, %v1546
  %1548 = vmatmul.bf16.gmra.mxu0 %v1039
  %v1549 = vpop.f32.mrf.mxu0
  %v1550 = vadd.f32 0.0, %v1549
  %v1551 = vpop.f32.mrf.mxu0
  %v1552 = vadd.f32 0.0, %v1551
  %1553 = vmatmul.bf16.gmra.mxu0 %v1042
  %v1554 = vpop.f32.mrf.mxu0
  %v1555 = vadd.f32 0.0, %v1554
  %v1556 = vpop.f32.mrf.mxu0
  %v1557 = vadd.f32 0.0, %v1556
  %1558 = vdwg.mxu0
  %v1559 = vmax.f32 %v1060, %v1185
  %v1560 = vmax.f32 %v1559, %v1310
  %v1561 = vmax.f32 %v1560, %v1435
  %v1562 = vmax.f32 %v1062, %v1187
  %v1563 = vmax.f32 %v1562, %v1312
  %v1564 = vmax.f32 %v1563, %v1437
  %v1565 = vmax.f32 %v1065, %v1190
  %v1566 = vmax.f32 %v1565, %v1315
  %v1567 = vmax.f32 %v1566, %v1440
  %v1568 = vmax.f32 %v1067, %v1192
  %v1569 = vmax.f32 %v1568, %v1317
  %v1570 = vmax.f32 %v1569, %v1442
  %v1571 = vmax.f32 %v1070, %v1195
  %v1572 = vmax.f32 %v1571, %v1320
  %v1573 = vmax.f32 %v1572, %v1445
  %v1574 = vmax.f32 %v1072, %v1197
  %v1575 = vmax.f32 %v1574, %v1322
  %v1576 = vmax.f32 %v1575, %v1447
  %v1577 = vmax.f32 %v1075, %v1200
  %v1578 = vmax.f32 %v1577, %v1325
  %v1579 = vmax.f32 %v1578, %v1450
  %v1580 = vmax.f32 %v1077, %v1202
  %v1581 = vmax.f32 %v1580, %v1327
  %v1582 = vmax.f32 %v1581, %v1452
  %v1583 = vmax.f32 %v1080, %v1205
  %v1584 = vmax.f32 %v1583, %v1330
  %v1585 = vmax.f32 %v1584, %v1455
  %v1586 = vmax.f32 %v1082, %v1207
  %v1587 = vmax.f32 %v1586, %v1332
  %v1588 = vmax.f32 %v1587, %v1457
  %v1589 = vmax.f32 %v1085, %v1210
  %v1590 = vmax.f32 %v1589, %v1335
  %v1591 = vmax.f32 %v1590, %v1460
  %v1592 = vmax.f32 %v1087, %v1212
  %v1593 = vmax.f32 %v1592, %v1337
  %v1594 = vmax.f32 %v1593, %v1462
  %v1595 = vmax.f32 %v1090, %v1215
  %v1596 = vmax.f32 %v1595, %v1340
  %v1597 = vmax.f32 %v1596, %v1465
  %v1598 = vmax.f32 %v1092, %v1217
  %v1599 = vmax.f32 %v1598, %v1342
  %v1600 = vmax.f32 %v1599, %v1467
  %v1601 = vmax.f32 %v1095, %v1220
  %v1602 = vmax.f32 %v1601, %v1345
  %v1603 = vmax.f32 %v1602, %v1470
  %v1604 = vmax.f32 %v1097, %v1222
  %v1605 = vmax.f32 %v1604, %v1347
  %v1606 = vmax.f32 %v1605, %v1472
  %v1607 = vmax.f32 %v1100, %v1225
  %v1608 = vmax.f32 %v1607, %v1350
  %v1609 = vmax.f32 %v1608, %v1475
  %v1610 = vmax.f32 %v1102, %v1227
  %v1611 = vmax.f32 %v1610, %v1352
  %v1612 = vmax.f32 %v1611, %v1477
  %v1613 = vmax.f32 %v1105, %v1230
  %v1614 = vmax.f32 %v1613, %v1355
  %v1615 = vmax.f32 %v1614, %v1480
  %v1616 = vmax.f32 %v1107, %v1232
  %v1617 = vmax.f32 %v1616, %v1357
  %v1618 = vmax.f32 %v1617, %v1482
  %v1619 = vmax.f32 %v1110, %v1235
  %v1620 = vmax.f32 %v1619, %v1360
  %v1621 = vmax.f32 %v1620, %v1485
  %v1622 = vmax.f32 %v1112, %v1237
  %v1623 = vmax.f32 %v1622, %v1362
  %v1624 = vmax.f32 %v1623, %v1487
  %v1625 = vmax.f32 %v1115, %v1240
  %v1626 = vmax.f32 %v1625, %v1365
  %v1627 = vmax.f32 %v1626, %v1490
  %v1628 = vmax.f32 %v1117, %v1242
  %v1629 = vmax.f32 %v1628, %v1367
  %v1630 = vmax.f32 %v1629, %v1492
  %v1631 = vmax.f32 %v1120, %v1245
  %v1632 = vmax.f32 %v1631, %v1370
  %v1633 = vmax.f32 %v1632, %v1495
  %v1634 = vmax.f32 %v1122, %v1247
  %v1635 = vmax.f32 %v1634, %v1372
  %v1636 = vmax.f32 %v1635, %v1497
  %v1637 = vmax.f32 %v1125, %v1250
  %v1638 = vmax.f32 %v1637, %v1375
  %v1639 = vmax.f32 %v1638, %v1500
  %v1640 = vmax.f32 %v1127, %v1252
  %v1641 = vmax.f32 %v1640, %v1377
  %v1642 = vmax.f32 %v1641, %v1502
  %v1643 = vmax.f32 %v1130, %v1255
  %v1644 = vmax.f32 %v1643, %v1380
  %v1645 = vmax.f32 %v1644, %v1505
  %v1646 = vmax.f32 %v1132, %v1257
  %v1647 = vmax.f32 %v1646, %v1382
  %v1648 = vmax.f32 %v1647, %v1507
  %v1649 = vmax.f32 %v1135, %v1260
  %v1650 = vmax.f32 %v1649, %v1385
  %v1651 = vmax.f32 %v1650, %v1510
  %v1652 = vmax.f32 %v1137, %v1262
  %v1653 = vmax.f32 %v1652, %v1387
  %v1654 = vmax.f32 %v1653, %v1512
  %v1655 = vmax.f32 %v1140, %v1265
  %v1656 = vmax.f32 %v1655, %v1390
  %v1657 = vmax.f32 %v1656, %v1515
  %v1658 = vmax.f32 %v1142, %v1267
  %v1659 = vmax.f32 %v1658, %v1392
  %v1660 = vmax.f32 %v1659, %v1517
  %v1661 = vmax.f32 %v1145, %v1270
  %v1662 = vmax.f32 %v1661, %v1395
  %v1663 = vmax.f32 %v1662, %v1520
  %v1664 = vmax.f32 %v1147, %v1272
  %v1665 = vmax.f32 %v1664, %v1397
  %v1666 = vmax.f32 %v1665, %v1522
  %v1667 = vmax.f32 %v1150, %v1275
  %v1668 = vmax.f32 %v1667, %v1400
  %v1669 = vmax.f32 %v1668, %v1525
  %v1670 = vmax.f32 %v1152, %v1277
  %v1671 = vmax.f32 %v1670, %v1402
  %v1672 = vmax.f32 %v1671, %v1527
  %v1673 = vmax.f32 %v1155, %v1280
  %v1674 = vmax.f32 %v1673, %v1405
  %v1675 = vmax.f32 %v1674, %v1530
  %v1676 = vmax.f32 %v1157, %v1282
  %v1677 = vmax.f32 %v1676, %v1407
  %v1678 = vmax.f32 %v1677, %v1532
  %v1679 = vmax.f32 %v1160, %v1285
  %v1680 = vmax.f32 %v1679, %v1410
  %v1681 = vmax.f32 %v1680, %v1535
  %v1682 = vmax.f32 %v1162, %v1287
  %v1683 = vmax.f32 %v1682, %v1412
  %v1684 = vmax.f32 %v1683, %v1537
  %v1685 = vmax.f32 %v1165, %v1290
  %v1686 = vmax.f32 %v1685, %v1415
  %v1687 = vmax.f32 %v1686, %v1540
  %v1688 = vmax.f32 %v1167, %v1292
  %v1689 = vmax.f32 %v1688, %v1417
  %v1690 = vmax.f32 %v1689, %v1542
  %v1691 = vmax.f32 %v1170, %v1295
  %v1692 = vmax.f32 %v1691, %v1420
  %v1693 = vmax.f32 %v1692, %v1545
  %v1694 = vmax.f32 %v1172, %v1297
  %v1695 = vmax.f32 %v1694, %v1422
  %v1696 = vmax.f32 %v1695, %v1547
  %v1697 = vmax.f32 %v1175, %v1300
  %v1698 = vmax.f32 %v1697, %v1425
  %v1699 = vmax.f32 %v1698, %v1550
  %v1700 = vmax.f32 %v1177, %v1302
  %v1701 = vmax.f32 %v1700, %v1427
  %v1702 = vmax.f32 %v1701, %v1552
  %v1703 = vmax.f32 %v1180, %v1305
  %v1704 = vmax.f32 %v1703, %v1430
  %v1705 = vmax.f32 %v1704, %v1555
  %v1706 = vmax.f32 %v1182, %v1307
  %v1707 = vmax.f32 %v1706, %v1432
  %v1708 = vmax.f32 %v1707, %v1557
  %v1709 = vld [vmem:[%s2] sm:$0x1]
  %v1711 = vperm.slane %v1709, 0
  %v1713 = vadd.f32 %v1561, %v1711
  %v1714 = vadd.f32 %v1564, %v1711
  %v1715 = vadd.f32 %v1567, %v1711
  %v1716 = vadd.f32 %v1570, %v1711
  %v1717 = vadd.f32 %v1573, %v1711
  %v1718 = vadd.f32 %v1576, %v1711
  %v1719 = vadd.f32 %v1579, %v1711
  %v1720 = vadd.f32 %v1582, %v1711
  %v1721 = vadd.f32 %v1585, %v1711
  %v1722 = vadd.f32 %v1588, %v1711
  %v1723 = vadd.f32 %v1591, %v1711
  %v1724 = vadd.f32 %v1594, %v1711
  %v1725 = vadd.f32 %v1597, %v1711
  %v1726 = vadd.f32 %v1600, %v1711
  %v1727 = vadd.f32 %v1603, %v1711
  %v1728 = vadd.f32 %v1606, %v1711
  %v1729 = vadd.f32 %v1609, %v1711
  %v1730 = vadd.f32 %v1612, %v1711
  %v1731 = vadd.f32 %v1615, %v1711
  %v1732 = vadd.f32 %v1618, %v1711
  %v1733 = vadd.f32 %v1621, %v1711
  %v1734 = vadd.f32 %v1624, %v1711
  %v1735 = vadd.f32 %v1627, %v1711
  %v1736 = vadd.f32 %v1630, %v1711
  %v1737 = vadd.f32 %v1633, %v1711
  %v1738 = vadd.f32 %v1636, %v1711
  %v1739 = vadd.f32 %v1639, %v1711
  %v1740 = vadd.f32 %v1642, %v1711
  %v1741 = vadd.f32 %v1645, %v1711
  %v1742 = vadd.f32 %v1648, %v1711
  %v1743 = vadd.f32 %v1651, %v1711
  %v1744 = vadd.f32 %v1654, %v1711
  %v1745 = vadd.f32 %v1657, %v1711
  %v1746 = vadd.f32 %v1660, %v1711
  %v1747 = vadd.f32 %v1663, %v1711
  %v1748 = vadd.f32 %v1666, %v1711
  %v1749 = vadd.f32 %v1669, %v1711
  %v1750 = vadd.f32 %v1672, %v1711
  %v1751 = vadd.f32 %v1675, %v1711
  %v1752 = vadd.f32 %v1678, %v1711
  %v1753 = vadd.f32 %v1681, %v1711
  %v1754 = vadd.f32 %v1684, %v1711
  %v1755 = vadd.f32 %v1687, %v1711
  %v1756 = vadd.f32 %v1690, %v1711
  %v1757 = vadd.f32 %v1693, %v1711
  %v1758 = vadd.f32 %v1696, %v1711
  %v1759 = vadd.f32 %v1699, %v1711
  %v1760 = vadd.f32 %v1702, %v1711
  %v1761 = vadd.f32 %v1705, %v1711
  %v1762 = vadd.f32 %v1708, %v1711
  %v1763 = vmax.f32 %v1713, 0.0
  %v1764 = vmax.f32 %v1714, 0.0
  %v1765 = vmax.f32 %v1715, 0.0
  %v1766 = vmax.f32 %v1716, 0.0
  %v1767 = vmax.f32 %v1717, 0.0
  %v1768 = vmax.f32 %v1718, 0.0
  %v1769 = vmax.f32 %v1719, 0.0
  %v1770 = vmax.f32 %v1720, 0.0
  %v1771 = vmax.f32 %v1721, 0.0
  %v1772 = vmax.f32 %v1722, 0.0
  %v1773 = vmax.f32 %v1723, 0.0
  %v1774 = vmax.f32 %v1724, 0.0
  %v1775 = vmax.f32 %v1725, 0.0
  %v1776 = vmax.f32 %v1726, 0.0
  %v1777 = vmax.f32 %v1727, 0.0
  %v1778 = vmax.f32 %v1728, 0.0
  %v1779 = vmax.f32 %v1729, 0.0
  %v1780 = vmax.f32 %v1730, 0.0
  %v1781 = vmax.f32 %v1731, 0.0
  %v1782 = vmax.f32 %v1732, 0.0
  %v1783 = vmax.f32 %v1733, 0.0
  %v1784 = vmax.f32 %v1734, 0.0
  %v1785 = vmax.f32 %v1735, 0.0
  %v1786 = vmax.f32 %v1736, 0.0
  %v1787 = vmax.f32 %v1737, 0.0
  %v1788 = vmax.f32 %v1738, 0.0
  %v1789 = vmax.f32 %v1739, 0.0
  %v1790 = vmax.f32 %v1740, 0.0
  %v1791 = vmax.f32 %v1741, 0.0
  %v1792 = vmax.f32 %v1742, 0.0
  %v1793 = vmax.f32 %v1743, 0.0
  %v1794 = vmax.f32 %v1744, 0.0
  %v1795 = vmax.f32 %v1745, 0.0
  %v1796 = vmax.f32 %v1746, 0.0
  %v1797 = vmax.f32 %v1747, 0.0
  %v1798 = vmax.f32 %v1748, 0.0
  %v1799 = vmax.f32 %v1749, 0.0
  %v1800 = vmax.f32 %v1750, 0.0
  %v1801 = vmax.f32 %v1751, 0.0
  %v1802 = vmax.f32 %v1752, 0.0
  %v1803 = vmax.f32 %v1753, 0.0
  %v1804 = vmax.f32 %v1754, 0.0
  %v1805 = vmax.f32 %v1755, 0.0
  %v1806 = vmax.f32 %v1756, 0.0
  %v1807 = vmax.f32 %v1757, 0.0
  %v1808 = vmax.f32 %v1758, 0.0
  %v1809 = vmax.f32 %v1759, 0.0
  %v1810 = vmax.f32 %v1760, 0.0
  %v1811 = vmax.f32 %v1761, 0.0
  %v1812 = vmax.f32 %v1762, 0.0
  %v1813 = vpack.c.bf16 %v1763, %v1763
  %v1814 = vpack.c.bf16 %v1764, %v1764
  %v1815 = vpack.c.bf16 %v1765, %v1765
  %v1816 = vpack.c.bf16 %v1766, %v1766
  %v1817 = vpack.c.bf16 %v1767, %v1767
  %v1818 = vpack.c.bf16 %v1768, %v1768
  %v1819 = vpack.c.bf16 %v1769, %v1769
  %v1820 = vpack.c.bf16 %v1770, %v1770
  %v1821 = vpack.c.bf16 %v1771, %v1771
  %v1822 = vpack.c.bf16 %v1772, %v1772
  %v1823 = vpack.c.bf16 %v1773, %v1773
  %v1824 = vpack.c.bf16 %v1774, %v1774
  %v1825 = vpack.c.bf16 %v1775, %v1775
  %v1826 = vpack.c.bf16 %v1776, %v1776
  %v1827 = vpack.c.bf16 %v1777, %v1777
  %v1828 = vpack.c.bf16 %v1778, %v1778
  %v1829 = vpack.c.bf16 %v1779, %v1779
  %v1830 = vpack.c.bf16 %v1780, %v1780
  %v1831 = vpack.c.bf16 %v1781, %v1781
  %v1832 = vpack.c.bf16 %v1782, %v1782
  %v1833 = vpack.c.bf16 %v1783, %v1783
  %v1834 = vpack.c.bf16 %v1784, %v1784
  %v1835 = vpack.c.bf16 %v1785, %v1785
  %v1836 = vpack.c.bf16 %v1786, %v1786
  %v1837 = vpack.c.bf16 %v1787, %v1787
  %v1838 = vpack.c.bf16 %v1788, %v1788
  %v1839 = vpack.c.bf16 %v1789, %v1789
  %v1840 = vpack.c.bf16 %v1790, %v1790
  %v1841 = vpack.c.bf16 %v1791, %v1791
  %v1842 = vpack.c.bf16 %v1792, %v1792
  %v1843 = vpack.c.bf16 %v1793, %v1793
  %v1844 = vpack.c.bf16 %v1794, %v1794
  %v1845 = vpack.c.bf16 %v1795, %v1795
  %v1846 = vpack.c.bf16 %v1796, %v1796
  %v1847 = vpack.c.bf16 %v1797, %v1797
  %v1848 = vpack.c.bf16 %v1798, %v1798
  %v1849 = vpack.c.bf16 %v1799, %v1799
  %v1850 = vpack.c.bf16 %v1800, %v1800
  %v1851 = vpack.c.bf16 %v1801, %v1801
  %v1852 = vpack.c.bf16 %v1802, %v1802
  %v1853 = vpack.c.bf16 %v1803, %v1803
  %v1854 = vpack.c.bf16 %v1804, %v1804
  %v1855 = vpack.c.bf16 %v1805, %v1805
  %v1856 = vpack.c.bf16 %v1806, %v1806
  %v1857 = vpack.c.bf16 %v1807, %v1807
  %v1858 = vpack.c.bf16 %v1808, %v1808
  %v1859 = vpack.c.bf16 %v1809, %v1809
  %v1860 = vpack.c.bf16 %v1810, %v1810
  %v1861 = vpack.c.bf16 %v1811, %v1811
  %v1862 = vpack.c.bf16 %v1812, %v1812
  %1863 = vst [vmem:[%s3] sm:$0xf] %v1813
  %1864 = vst [vmem:[%s3 + $0x4] sm:$0xf] %v1814
  %1865 = vst [vmem:[%s3 + $0x8] sm:$0xf] %v1815
  %1866 = vst [vmem:[%s3 + $0xc] sm:$0xf] %v1816
  %1867 = vst [vmem:[%s3 + $0x10] sm:$0xf] %v1817
  %1868 = vst [vmem:[%s3 + $0x14] sm:$0xf] %v1818
  %1869 = vst [vmem:[%s3 + $0x18] sm:$0xf] %v1819
  %1870 = vst [vmem:[%s3 + $0x1c] sm:$0xf] %v1820
  %1871 = vst [vmem:[%s3 + $0x20] sm:$0xf] %v1821
  %1872 = vst [vmem:[%s3 + $0x24] sm:$0xf] %v1822
  %1873 = vst [vmem:[%s3 + $0x28] sm:$0xf] %v1823
  %1874 = vst [vmem:[%s3 + $0x2c] sm:$0xf] %v1824
  %1875 = vst [vmem:[%s3 + $0x30] sm:$0xf] %v1825
  %1876 = vst [vmem:[%s3 + $0x34] sm:$0xf] %v1826
  %1877 = vst [vmem:[%s3 + $0x38] sm:$0xf] %v1827
  %1878 = vst [vmem:[%s3 + $0x3c] sm:$0xf] %v1828
  %1879 = vst [vmem:[%s3 + $0x40] sm:$0xf] %v1829
  %1880 = vst [vmem:[%s3 + $0x44] sm:$0xf] %v1830
  %1881 = vst [vmem:[%s3 + $0x48] sm:$0xf] %v1831
  %1882 = vst [vmem:[%s3 + $0x4c] sm:$0xf] %v1832
  %1883 = vst [vmem:[%s3 + $0x50] sm:$0xf] %v1833
  %1884 = vst [vmem:[%s3 + $0x54] sm:$0xf] %v1834
  %1885 = vst [vmem:[%s3 + $0x58] sm:$0xf] %v1835
  %1886 = vst [vmem:[%s3 + $0x5c] sm:$0xf] %v1836
  %1887 = vst [vmem:[%s3 + $0x60] sm:$0xf] %v1837
  %1888 = vst [vmem:[%s3 + $0x64] sm:$0xf] %v1838
  %1889 = vst [vmem:[%s3 + $0x68] sm:$0xf] %v1839
  %1890 = vst [vmem:[%s3 + $0x6c] sm:$0xf] %v1840
  %1891 = vst [vmem:[%s3 + $0x70] sm:$0xf] %v1841
  %1892 = vst [vmem:[%s3 + $0x74] sm:$0xf] %v1842
  %1893 = vst [vmem:[%s3 + $0x78] sm:$0xf] %v1843
  %1894 = vst [vmem:[%s3 + $0x7c] sm:$0xf] %v1844
  %1895 = vst [vmem:[%s3 + $0x80] sm:$0xf] %v1845
  %1896 = vst [vmem:[%s3 + $0x84] sm:$0xf] %v1846
  %1897 = vst [vmem:[%s3 + $0x88] sm:$0xf] %v1847
  %1898 = vst [vmem:[%s3 + $0x8c] sm:$0xf] %v1848
  %1899 = vst [vmem:[%s3 + $0x90] sm:$0xf] %v1849
  %1900 = vst [vmem:[%s3 + $0x94] sm:$0xf] %v1850
  %1901 = vst [vmem:[%s3 + $0x98] sm:$0xf] %v1851
  %1902 = vst [vmem:[%s3 + $0x9c] sm:$0xf] %v1852
  %1903 = vst [vmem:[%s3 + $0xa0] sm:$0xf] %v1853
  %1904 = vst [vmem:[%s3 + $0xa4] sm:$0xf] %v1854
  %1905 = vst [vmem:[%s3 + $0xa8] sm:$0xf] %v1855
  %1906 = vst [vmem:[%s3 + $0xac] sm:$0xf] %v1856
  %1907 = vst [vmem:[%s3 + $0xb0] sm:$0xf] %v1857
  %1908 = vst [vmem:[%s3 + $0xb4] sm:$0xf] %v1858
  %1909 = vst [vmem:[%s3 + $0xb8] sm:$0xf] %v1859
  %1910 = vst [vmem:[%s3 + $0xbc] sm:$0xf] %v1860
  %1911 = vst [vmem:[%s3 + $0xc0] sm:$0xf] %v1861
  %1912 = vst [vmem:[%s3 + $0xc4] sm:$0xf] %v1862
  // Predicated region
  $region14: #{net_forward.3} parent=0 // pred_check
    _
  $region15: #{net_forward.3} parent=0 // pred_check_branch
    %1914 = sbr.rel (0) target = $region17
  $region16: #{net_forward.3} parent=0 // pred_region
    _
  $region17: #{net_forward.3} parent=0 // pred_fallthru
    _
  // Predicated region
  $region18: #{net_forward.3} parent=0 // pred_check
    _
  $region19: #{net_forward.3} parent=0 // pred_check_branch
    %1916 = sbr.rel (0) target = $region21
  $region20: #{net_forward.3} parent=0 // pred_region
    _
  $region21: #{net_forward.3} parent=0 // pred_fallthru
    _

// kernel: net_forward.4
$region0: #{net_forward.4}
  #allocation0 [shape = 'u32[]', space=smem, size = 0x4, offset = 0x4, fixed_abs, tag = 'smem constant byte address 0x4 - core index']
  #allocation1 [shape = 'u32[72,128]{1,0:T(1,128)}', space=vmem, size = 0x9000, scoped, tag = 'internal scratch']
  %s0 = inlined_call_operand.vmem [shape: bf16[4,112,490], index: 0, kind: input, shape index: {}]
  %s1 = inlined_call_operand.vmem [shape: bf16[490,128], index: 1, kind: input, shape index: {}]
  %s2 = inlined_call_operand.vmem [shape: f32[1,128], index: 2, kind: input, shape index: {}]
  %s3 = inlined_call_operand.vmem [shape: bf16[112,128], index: 3, kind: output, shape index: {}]
  %s4 = sld [smem:[#allocation0]]
  $region22: #{net_forward.4} parent=0
    _
  %s6 = ssub.s32 1, %s4
  %s7 = scalar_select 0, %s6, %s4
  // Predicated region
  $region2: #{net_forward.4} parent=0 // pred_check
    _
  $region3: #{net_forward.4} parent=0 // pred_check_branch
    %9 = sbr.rel (0) target = $region5
  $region4: #{net_forward.4} parent=0 // pred_region
    _
  $region5: #{net_forward.4} parent=0 // pred_fallthru
    _
  // Predicated region
  $region6: #{net_forward.4} parent=0 // pred_check
    _
  $region7: #{net_forward.4} parent=0 // pred_check_branch
    %11 = sbr.rel (0) target = $region9
  $region8: #{net_forward.4} parent=0 // pred_region
    _
  $region9: #{net_forward.4} parent=0 // pred_fallthru
    _
  // Predicated region
  $region10: #{net_forward.4} parent=0 // pred_check
    _
  $region11: #{net_forward.4} parent=0 // pred_check_branch
    %13 = sbr.rel (0) target = $region13
  $region12: #{net_forward.4} parent=0 // pred_region
    _
  $region13: #{net_forward.4} parent=0 // pred_fallthru
    _
  %v15 = vld [vmem:[%s0] sm:$0xff]
  %v16 = vld [vmem:[%s0 + $0x8] sm:$0xff]
  %v17 = vld [vmem:[%s0 + $0x10] sm:$0xff]
  %v18 = vld [vmem:[%s0 + $0x18] sm:$0xff]
  %v19 = vld [vmem:[%s0 + $0x20] sm:$0xff]
  %v20 = vld [vmem:[%s0 + $0x28] sm:$0xff]
  %v21 = vld [vmem:[%s0 + $0x30] sm:$0xff]
  %v22 = vld [vmem:[%s0 + $0x38] sm:$0xff]
  %v23 = vld [vmem:[%s0 + $0x40] sm:$0xff]
  %v24 = vld [vmem:[%s0 + $0x48] sm:$0xff]
  %v25 = vld [vmem:[%s0 + $0x50] sm:$0xff]
  %v26 = vld [vmem:[%s0 + $0x58] sm:$0xff]
  %v27 = vld [vmem:[%s0 + $0x60] sm:$0xff]
  %v28 = vld [vmem:[%s0 + $0x68] sm:$0xff]
  %v29 = vld [vmem:[%s0 + $0x70] sm:$0xff]
  %v30 = vld [vmem:[%s0 + $0x78] sm:$0xff]
  %v31 = vld [vmem:[%s0 + $0x80] sm:$0xff]
  %v32 = vld [vmem:[%s0 + $0x88] sm:$0xff]
  %v33 = vld [vmem:[%s0 + $0x90] sm:$0xff]
  %v34 = vld [vmem:[%s0 + $0x98] sm:$0xff]
  %v35 = vld [vmem:[%s0 + $0xa0] sm:$0xff]
  %v36 = vld [vmem:[%s0 + $0xa8] sm:$0xff]
  %v37 = vld [vmem:[%s0 + $0xb0] sm:$0xff]
  %v38 = vld [vmem:[%s0 + $0xb8] sm:$0xff]
  %v39 = vld [vmem:[%s0 + $0xc0] sm:$0xff]
  %v40 = vld [vmem:[%s0 + $0xc8] sm:$0xff]
  %v41 = vld [vmem:[%s0 + $0xd0] sm:$0xff]
  %v42 = vld [vmem:[%s0 + $0xd8] sm:$0xff]
  %v43 = vld [vmem:[%s0 + $0xe0] sm:$0xff]
  %v44 = vld [vmem:[%s0 + $0xe8] sm:$0xff]
  %v45 = vld [vmem:[%s0 + $0xf0] sm:$0xff]
  %v46 = vld [vmem:[%s0 + $0xf8] sm:$0xff]
  %v47 = vld [vmem:[%s0 + $0x100] sm:$0xff]
  %v48 = vld [vmem:[%s0 + $0x108] sm:$0xff]
  %v49 = vld [vmem:[%s0 + $0x110] sm:$0xff]
  %v50 = vld [vmem:[%s0 + $0x118] sm:$0xff]
  %v51 = vld [vmem:[%s0 + $0x120] sm:$0xff]
  %v52 = vld [vmem:[%s0 + $0x128] sm:$0xff]
  %v53 = vld [vmem:[%s0 + $0x130] sm:$0xff]
  %v54 = vld [vmem:[%s0 + $0x138] sm:$0xff]
  %v55 = vld [vmem:[%s0 + $0x140] sm:$0xff]
  %v56 = vld [vmem:[%s0 + $0x148] sm:$0xff]
  %v57 = vld [vmem:[%s0 + $0x150] sm:$0xff]
  %v58 = vld [vmem:[%s0 + $0x158] sm:$0xff]
  %v59 = vld [vmem:[%s0 + $0x160] sm:$0xff]
  %v60 = vld [vmem:[%s0 + $0x168] sm:$0xff]
  %v61 = vld [vmem:[%s0 + $0x170] sm:$0xff]
  %v62 = vld [vmem:[%s0 + $0x178] sm:$0xff]
  %v63 = vld [vmem:[%s0 + $0x180] sm:$0xff]
  %v64 = vld [vmem:[%s0 + $0x188] sm:$0xff]
  %v65 = vld [vmem:[%s0 + $0x190] sm:$0xff]
  %v66 = vld [vmem:[%s0 + $0x198] sm:$0xff]
  %v67 = vld [vmem:[%s0 + $0x1a0] sm:$0xff]
  %v68 = vld [vmem:[%s0 + $0x1a8] sm:$0xff]
  %v69 = vld [vmem:[%s0 + $0x1b0] sm:$0xff]
  %v70 = vld [vmem:[%s0 + $0x1b8] sm:$0xff]
  %v71 = vld [vmem:[%s0 + $0x1c0] sm:$0xff]
  %v72 = vld [vmem:[%s0 + $0x1c8] sm:$0xff]
  %v73 = vld [vmem:[%s0 + $0x1d0] sm:$0xff]
  %v74 = vld [vmem:[%s0 + $0x1d8] sm:$0xff]
  %v75 = vld [vmem:[%s0 + $0x1e0] sm:$0xff]
  %v76 = vld [vmem:[%s0 + $0x1e8] sm:$0xff]
  %v77 = vld [vmem:[%s0 + $0x1f0] sm:$0xff]
  %v78 = vld [vmem:[%s0 + $0x1f8] sm:$0xff]
  %v79 = vld [vmem:[%s0 + $0x200] sm:$0xff]
  %v80 = vld [vmem:[%s0 + $0x208] sm:$0xff]
  %v81 = vld [vmem:[%s0 + $0x210] sm:$0xff]
  %v82 = vld [vmem:[%s0 + $0x218] sm:$0xff]
  %v83 = vld [vmem:[%s0 + $0x220] sm:$0xff]
  %v84 = vld [vmem:[%s0 + $0x228] sm:$0xff]
  %v85 = vld [vmem:[%s0 + $0x230] sm:$0xff]
  %v86 = vld [vmem:[%s0 + $0x238] sm:$0xff]
  %v87 = vld [vmem:[%s0 + $0x240] sm:$0xff]
  %v88 = vld [vmem:[%s0 + $0x248] sm:$0xff]
  %v89 = vld [vmem:[%s0 + $0x250] sm:$0xff]
  %v90 = vld [vmem:[%s0 + $0x258] sm:$0xff]
  %v91 = vld [vmem:[%s0 + $0x260] sm:$0xff]
  %v92 = vld [vmem:[%s0 + $0x268] sm:$0xff]
  %v93 = vld [vmem:[%s0 + $0x270] sm:$0xff]
  %v94 = vld [vmem:[%s0 + $0x278] sm:$0xff]
  %v95 = vld [vmem:[%s0 + $0x280] sm:$0xff]
  %v96 = vld [vmem:[%s0 + $0x288] sm:$0xff]
  %v97 = vld [vmem:[%s0 + $0x290] sm:$0xff]
  %v98 = vld [vmem:[%s0 + $0x298] sm:$0xff]
  %v99 = vld [vmem:[%s0 + $0x2a0] sm:$0xff]
  %v100 = vld [vmem:[%s0 + $0x2a8] sm:$0xff]
  %v101 = vld [vmem:[%s0 + $0x2b0] sm:$0xff]
  %v102 = vld [vmem:[%s0 + $0x2b8] sm:$0xff]
  %v103 = vld [vmem:[%s0 + $0x2c0] sm:$0xff]
  %v104 = vld [vmem:[%s0 + $0x2c8] sm:$0xff]
  %v105 = vld [vmem:[%s0 + $0x2d0] sm:$0xff]
  %v106 = vld [vmem:[%s0 + $0x2d8] sm:$0xff]
  %v107 = vld [vmem:[%s0 + $0x2e0] sm:$0xff]
  %v108 = vld [vmem:[%s0 + $0x2e8] sm:$0xff]
  %v109 = vld [vmem:[%s0 + $0x2f0] sm:$0xff]
  %v110 = vld [vmem:[%s0 + $0x2f8] sm:$0xff]
  %v111 = vld [vmem:[%s0 + $0x300] sm:$0xff]
  %v112 = vld [vmem:[%s0 + $0x308] sm:$0xff]
  %v113 = vld [vmem:[%s0 + $0x310] sm:$0xff]
  %v114 = vld [vmem:[%s0 + $0x318] sm:$0xff]
  %v115 = vld [vmem:[%s0 + $0x320] sm:$0xff]
  %v116 = vld [vmem:[%s0 + $0x328] sm:$0xff]
  %v117 = vld [vmem:[%s0 + $0x330] sm:$0xff]
  %v118 = vld [vmem:[%s0 + $0x338] sm:$0xff]
  %v119 = vld [vmem:[%s0 + $0x340] sm:$0xff]
  %v120 = vld [vmem:[%s0 + $0x348] sm:$0xff]
  %v121 = vld [vmem:[%s0 + $0x350] sm:$0xff]
  %v122 = vld [vmem:[%s0 + $0x358] sm:$0xff]
  %v123 = vld [vmem:[%s0 + $0x360] sm:$0xff]
  %v124 = vld [vmem:[%s0 + $0x368] sm:$0xff]
  %v125 = vld [vmem:[%s0 + $0x370] sm:$0xff]
  %v126 = vld [vmem:[%s0 + $0x378] sm:$0xff]
  %v127 = vld [vmem:[%s1] sm:$0xf]
  %v128 = vld [vmem:[%s1 + $0x4] sm:$0xf]
  %v129 = vld [vmem:[%s1 + $0x8] sm:$0xf]
  %v130 = vld [vmem:[%s1 + $0xc] sm:$0xf]
  %v131 = vld [vmem:[%s1 + $0x10] sm:$0xf]
  %v132 = vld [vmem:[%s1 + $0x14] sm:$0xf]
  %v133 = vld [vmem:[%s1 + $0x18] sm:$0xf]
  %v134 = vld [vmem:[%s1 + $0x1c] sm:$0xf]
  %v135 = vld [vmem:[%s1 + $0x20] sm:$0xf]
  %v136 = vld [vmem:[%s1 + $0x24] sm:$0xf]
  %v137 = vld [vmem:[%s1 + $0x28] sm:$0xf]
  %v138 = vld [vmem:[%s1 + $0x2c] sm:$0xf]
  %v139 = vld [vmem:[%s1 + $0x30] sm:$0xf]
  %v140 = vld [vmem:[%s1 + $0x34] sm:$0xf]
  %v141 = vld [vmem:[%s1 + $0x38] sm:$0xf]
  %v142 = vld [vmem:[%s1 + $0x3c] sm:$0xf]
  %v143 = vld [vmem:[%s1 + $0x40] sm:$0xf]
  %v144 = vld [vmem:[%s1 + $0x44] sm:$0xf]
  %v145 = vld [vmem:[%s1 + $0x48] sm:$0xf]
  %v146 = vld [vmem:[%s1 + $0x4c] sm:$0xf]
  %v147 = vld [vmem:[%s1 + $0x50] sm:$0xf]
  %v148 = vld [vmem:[%s1 + $0x54] sm:$0xf]
  %v149 = vld [vmem:[%s1 + $0x58] sm:$0xf]
  %v150 = vld [vmem:[%s1 + $0x5c] sm:$0xf]
  %v151 = vld [vmem:[%s1 + $0x60] sm:$0xf]
  %v152 = vld [vmem:[%s1 + $0x64] sm:$0xf]
  %v153 = vld [vmem:[%s1 + $0x68] sm:$0xf]
  %v154 = vld [vmem:[%s1 + $0x6c] sm:$0xf]
  %v155 = vld [vmem:[%s1 + $0x70] sm:$0xf]
  %v156 = vld [vmem:[%s1 + $0x74] sm:$0xf]
  %v157 = vld [vmem:[%s1 + $0x78] sm:$0xf]
  %v158 = vld [vmem:[%s1 + $0x7c] sm:$0xf]
  %v159 = vld [vmem:[%s1 + $0x80] sm:$0xf]
  %v160 = vld [vmem:[%s1 + $0x84] sm:$0xf]
  %v161 = vld [vmem:[%s1 + $0x88] sm:$0xf]
  %v162 = vld [vmem:[%s1 + $0x8c] sm:$0xf]
  %v163 = vld [vmem:[%s1 + $0x90] sm:$0xf]
  %v164 = vld [vmem:[%s1 + $0x94] sm:$0xf]
  %v165 = vld [vmem:[%s1 + $0x98] sm:$0xf]
  %v166 = vld [vmem:[%s1 + $0x9c] sm:$0xf]
  %v167 = vld [vmem:[%s1 + $0xa0] sm:$0xf]
  %v168 = vld [vmem:[%s1 + $0xa4] sm:$0xf]
  %v169 = vld [vmem:[%s1 + $0xa8] sm:$0xf]
  %v170 = vld [vmem:[%s1 + $0xac] sm:$0xf]
  %v171 = vld [vmem:[%s1 + $0xb0] sm:$0xf]
  %v172 = vld [vmem:[%s1 + $0xb4] sm:$0xf]
  %v173 = vld [vmem:[%s1 + $0xb8] sm:$0xf]
  %v174 = vld [vmem:[%s1 + $0xbc] sm:$0xf]
  %v175 = vld [vmem:[%s1 + $0xc0] sm:$0xf]
  %v176 = vld [vmem:[%s1 + $0xc4] sm:$0xf]
  %v177 = vld [vmem:[%s1 + $0xc8] sm:$0xf]
  %v178 = vld [vmem:[%s1 + $0xcc] sm:$0xf]
  %v179 = vld [vmem:[%s1 + $0xd0] sm:$0xf]
  %v180 = vld [vmem:[%s1 + $0xd4] sm:$0xf]
  %v181 = vld [vmem:[%s1 + $0xd8] sm:$0xf]
  %v182 = vld [vmem:[%s1 + $0xdc] sm:$0xf]
  %v183 = vld [vmem:[%s1 + $0xe0] sm:$0xf]
  %v184 = vld [vmem:[%s1 + $0xe4] sm:$0xf]
  %v185 = vld [vmem:[%s1 + $0xe8] sm:$0xf]
  %v186 = vld [vmem:[%s1 + $0xec] sm:$0xf]
  %v187 = vld [vmem:[%s1 + $0xf0] sm:$0xf]
  %v188 = vld [vmem:[%s1 + $0xf4] sm:$0x1]
  %v301 = vunpack.c.l.b16 %v15
  %v302 = vunpack.c.h.b16 %v15
  %v303 = vunpack.c.l.b16 %v16
  %v304 = vunpack.c.h.b16 %v16
  %v305 = vunpack.c.l.b16 %v17
  %v306 = vunpack.c.h.b16 %v17
  %v307 = vunpack.c.l.b16 %v18
  %v308 = vunpack.c.h.b16 %v18
  %v309 = vunpack.c.l.b16 %v19
  %v310 = vunpack.c.h.b16 %v19
  %v311 = vunpack.c.l.b16 %v20
  %v312 = vunpack.c.h.b16 %v20
  %v313 = vunpack.c.l.b16 %v21
  %v314 = vunpack.c.h.b16 %v21
  %v315 = vunpack.c.l.b16 %v22
  %v316 = vunpack.c.h.b16 %v22
  %v317 = vunpack.c.l.b16 %v23
  %v318 = vunpack.c.h.b16 %v23
  %v319 = vunpack.c.l.b16 %v24
  %v320 = vunpack.c.h.b16 %v24
  %v321 = vunpack.c.l.b16 %v25
  %v322 = vunpack.c.h.b16 %v25
  %v323 = vunpack.c.l.b16 %v26
  %v324 = vunpack.c.h.b16 %v26
  %v325 = vunpack.c.l.b16 %v27
  %v326 = vunpack.c.h.b16 %v27
  %v327 = vunpack.c.l.b16 %v28
  %v328 = vunpack.c.h.b16 %v28
  %v329 = vunpack.c.l.b16 %v29
  %v330 = vunpack.c.h.b16 %v29
  %v331 = vunpack.c.l.b16 %v30
  %v332 = vunpack.c.h.b16 %v30
  %v333 = vunpack.c.l.b16 %v31
  %v334 = vunpack.c.h.b16 %v31
  %v335 = vunpack.c.l.b16 %v32
  %v336 = vunpack.c.h.b16 %v32
  %v337 = vunpack.c.l.b16 %v33
  %v338 = vunpack.c.h.b16 %v33
  %v339 = vunpack.c.l.b16 %v34
  %v340 = vunpack.c.h.b16 %v34
  %v341 = vunpack.c.l.b16 %v35
  %v342 = vunpack.c.h.b16 %v35
  %v343 = vunpack.c.l.b16 %v36
  %v344 = vunpack.c.h.b16 %v36
  %v345 = vunpack.c.l.b16 %v37
  %v346 = vunpack.c.h.b16 %v37
  %v347 = vunpack.c.l.b16 %v38
  %v348 = vunpack.c.h.b16 %v38
  %v349 = vunpack.c.l.b16 %v39
  %v350 = vunpack.c.h.b16 %v39
  %v351 = vunpack.c.l.b16 %v40
  %v352 = vunpack.c.h.b16 %v40
  %v353 = vunpack.c.l.b16 %v41
  %v354 = vunpack.c.h.b16 %v41
  %v355 = vunpack.c.l.b16 %v42
  %v356 = vunpack.c.h.b16 %v42
  %v357 = vunpack.c.l.b16 %v43
  %v358 = vunpack.c.h.b16 %v43
  %v359 = vunpack.c.l.b16 %v44
  %v360 = vunpack.c.h.b16 %v44
  %v361 = vunpack.c.l.b16 %v45
  %v362 = vunpack.c.h.b16 %v45
  %v363 = vunpack.c.l.b16 %v46
  %v364 = vunpack.c.h.b16 %v46
  %v365 = vunpack.c.l.b16 %v47
  %v366 = vunpack.c.h.b16 %v47
  %v367 = vunpack.c.l.b16 %v48
  %v368 = vunpack.c.h.b16 %v48
  %v369 = vunpack.c.l.b16 %v49
  %v370 = vunpack.c.h.b16 %v49
  %v371 = vunpack.c.l.b16 %v50
  %v372 = vunpack.c.h.b16 %v50
  %v373 = vunpack.c.l.b16 %v51
  %v374 = vunpack.c.h.b16 %v51
  %v375 = vunpack.c.l.b16 %v52
  %v376 = vunpack.c.h.b16 %v52
  %v377 = vunpack.c.l.b16 %v53
  %v378 = vunpack.c.h.b16 %v53
  %v379 = vunpack.c.l.b16 %v54
  %v380 = vunpack.c.h.b16 %v54
  %v381 = vunpack.c.l.b16 %v55
  %v382 = vunpack.c.h.b16 %v55
  %v383 = vunpack.c.l.b16 %v56
  %v384 = vunpack.c.h.b16 %v56
  %v385 = vunpack.c.l.b16 %v57
  %v386 = vunpack.c.h.b16 %v57
  %v387 = vunpack.c.l.b16 %v58
  %v388 = vunpack.c.h.b16 %v58
  %v389 = vunpack.c.l.b16 %v59
  %v390 = vunpack.c.h.b16 %v59
  %v391 = vunpack.c.l.b16 %v60
  %v392 = vunpack.c.h.b16 %v60
  %v393 = vunpack.c.l.b16 %v61
  %v394 = vunpack.c.h.b16 %v61
  %v395 = vunpack.c.l.b16 %v62
  %v396 = vunpack.c.h.b16 %v62
  %v397 = vunpack.c.l.b16 %v63
  %v398 = vunpack.c.h.b16 %v63
  %v399 = vunpack.c.l.b16 %v64
  %v400 = vunpack.c.h.b16 %v64
  %v401 = vunpack.c.l.b16 %v65
  %v402 = vunpack.c.h.b16 %v65
  %v403 = vunpack.c.l.b16 %v66
  %v404 = vunpack.c.h.b16 %v66
  %v405 = vunpack.c.l.b16 %v67
  %v406 = vunpack.c.h.b16 %v67
  %v407 = vunpack.c.l.b16 %v68
  %v408 = vunpack.c.h.b16 %v68
  %v409 = vunpack.c.l.b16 %v69
  %v410 = vunpack.c.h.b16 %v69
  %v411 = vunpack.c.l.b16 %v70
  %v412 = vunpack.c.h.b16 %v70
  %v413 = vunpack.c.l.b16 %v71
  %v414 = vunpack.c.h.b16 %v71
  %v415 = vunpack.c.l.b16 %v72
  %v416 = vunpack.c.h.b16 %v72
  %v417 = vunpack.c.l.b16 %v73
  %v418 = vunpack.c.h.b16 %v73
  %v419 = vunpack.c.l.b16 %v74
  %v420 = vunpack.c.h.b16 %v74
  %v421 = vunpack.c.l.b16 %v75
  %v422 = vunpack.c.h.b16 %v75
  %v423 = vunpack.c.l.b16 %v76
  %v424 = vunpack.c.h.b16 %v76
  %v425 = vunpack.c.l.b16 %v77
  %v426 = vunpack.c.h.b16 %v77
  %v427 = vunpack.c.l.b16 %v78
  %v428 = vunpack.c.h.b16 %v78
  %v429 = vunpack.c.l.b16 %v79
  %v430 = vunpack.c.h.b16 %v79
  %v431 = vunpack.c.l.b16 %v80
  %v432 = vunpack.c.h.b16 %v80
  %v433 = vunpack.c.l.b16 %v81
  %v434 = vunpack.c.h.b16 %v81
  %v435 = vunpack.c.l.b16 %v82
  %v436 = vunpack.c.h.b16 %v82
  %v437 = vunpack.c.l.b16 %v83
  %v438 = vunpack.c.h.b16 %v83
  %v439 = vunpack.c.l.b16 %v84
  %v440 = vunpack.c.h.b16 %v84
  %v441 = vunpack.c.l.b16 %v85
  %v442 = vunpack.c.h.b16 %v85
  %v443 = vunpack.c.l.b16 %v86
  %v444 = vunpack.c.h.b16 %v86
  %v445 = vunpack.c.l.b16 %v87
  %v446 = vunpack.c.h.b16 %v87
  %v447 = vunpack.c.l.b16 %v88
  %v448 = vunpack.c.h.b16 %v88
  %v449 = vunpack.c.l.b16 %v89
  %v450 = vunpack.c.h.b16 %v89
  %v451 = vunpack.c.l.b16 %v90
  %v452 = vunpack.c.h.b16 %v90
  %v453 = vunpack.c.l.b16 %v91
  %v454 = vunpack.c.h.b16 %v91
  %v455 = vunpack.c.l.b16 %v92
  %v456 = vunpack.c.h.b16 %v92
  %v457 = vunpack.c.l.b16 %v93
  %v458 = vunpack.c.h.b16 %v93
  %v459 = vunpack.c.l.b16 %v94
  %v460 = vunpack.c.h.b16 %v94
  %v461 = vunpack.c.l.b16 %v95
  %v462 = vunpack.c.h.b16 %v95
  %v463 = vunpack.c.l.b16 %v96
  %v464 = vunpack.c.h.b16 %v96
  %v465 = vunpack.c.l.b16 %v97
  %v466 = vunpack.c.h.b16 %v97
  %v467 = vunpack.c.l.b16 %v98
  %v468 = vunpack.c.h.b16 %v98
  %v469 = vunpack.c.l.b16 %v99
  %v470 = vunpack.c.h.b16 %v99
  %v471 = vunpack.c.l.b16 %v100
  %v472 = vunpack.c.h.b16 %v100
  %v473 = vunpack.c.l.b16 %v101
  %v474 = vunpack.c.h.b16 %v101
  %v475 = vunpack.c.l.b16 %v102
  %v476 = vunpack.c.h.b16 %v102
  %v477 = vunpack.c.l.b16 %v103
  %v478 = vunpack.c.h.b16 %v103
  %v479 = vunpack.c.l.b16 %v104
  %v480 = vunpack.c.h.b16 %v104
  %v481 = vunpack.c.l.b16 %v105
  %v482 = vunpack.c.h.b16 %v105
  %v483 = vunpack.c.l.b16 %v106
  %v484 = vunpack.c.h.b16 %v106
  %v485 = vunpack.c.l.b16 %v107
  %v486 = vunpack.c.h.b16 %v107
  %v487 = vunpack.c.l.b16 %v108
  %v488 = vunpack.c.h.b16 %v108
  %v489 = vunpack.c.l.b16 %v109
  %v490 = vunpack.c.h.b16 %v109
  %v491 = vunpack.c.l.b16 %v110
  %v492 = vunpack.c.h.b16 %v110
  %v493 = vunpack.c.l.b16 %v111
  %v494 = vunpack.c.h.b16 %v111
  %v495 = vunpack.c.l.b16 %v112
  %v496 = vunpack.c.h.b16 %v112
  %v497 = vunpack.c.l.b16 %v113
  %v498 = vunpack.c.h.b16 %v113
  %v499 = vunpack.c.l.b16 %v114
  %v500 = vunpack.c.h.b16 %v114
  %v501 = vunpack.c.l.b16 %v115
  %v502 = vunpack.c.h.b16 %v115
  %v503 = vunpack.c.l.b16 %v116
  %v504 = vunpack.c.h.b16 %v116
  %v505 = vunpack.c.l.b16 %v117
  %v506 = vunpack.c.h.b16 %v117
  %v507 = vunpack.c.l.b16 %v118
  %v508 = vunpack.c.h.b16 %v118
  %v509 = vunpack.c.l.b16 %v119
  %v510 = vunpack.c.h.b16 %v119
  %v511 = vunpack.c.l.b16 %v120
  %v512 = vunpack.c.h.b16 %v120
  %v513 = vunpack.c.l.b16 %v121
  %v514 = vunpack.c.h.b16 %v121
  %v515 = vunpack.c.l.b16 %v122
  %v516 = vunpack.c.h.b16 %v122
  %v517 = vunpack.c.l.b16 %v123
  %v518 = vunpack.c.h.b16 %v123
  %v519 = vunpack.c.l.b16 %v124
  %v520 = vunpack.c.h.b16 %v124
  %v521 = vunpack.c.l.b16 %v125
  %v522 = vunpack.c.h.b16 %v125
  %v523 = vunpack.c.l.b16 %v126
  %v524 = vunpack.c.h.b16 %v126
  %v525 = vpack.c.b16 %v305, %v301
  %v526 = vpack.c.b16 %v306, %v302
  %v527 = vpack.c.b16 %v307, %v303
  %v528 = vpack.c.b16 %v308, %v304
  %v529 = vpack.c.b16 %v313, %v309
  %v530 = vpack.c.b16 %v314, %v310
  %v531 = vpack.c.b16 %v315, %v311
  %v532 = vpack.c.b16 %v316, %v312
  %v533 = vpack.c.b16 %v321, %v317
  %v534 = vpack.c.b16 %v322, %v318
  %v535 = vpack.c.b16 %v323, %v319
  %v536 = vpack.c.b16 %v324, %v320
  %v537 = vpack.c.b16 %v329, %v325
  %v538 = vpack.c.b16 %v330, %v326
  %v539 = vpack.c.b16 %v331, %v327
  %v540 = vpack.c.b16 %v332, %v328
  %v541 = vpack.c.b16 %v337, %v333
  %v542 = vpack.c.b16 %v338, %v334
  %v543 = vpack.c.b16 %v339, %v335
  %v544 = vpack.c.b16 %v340, %v336
  %v545 = vpack.c.b16 %v345, %v341
  %v546 = vpack.c.b16 %v346, %v342
  %v547 = vpack.c.b16 %v347, %v343
  %v548 = vpack.c.b16 %v348, %v344
  %v549 = vpack.c.b16 %v353, %v349
  %v550 = vpack.c.b16 %v354, %v350
  %v551 = vpack.c.b16 %v355, %v351
  %v552 = vpack.c.b16 %v356, %v352
  %v553 = vpack.c.b16 %v361, %v357
  %v554 = vpack.c.b16 %v362, %v358
  %v555 = vpack.c.b16 %v363, %v359
  %v556 = vpack.c.b16 %v364, %v360
  %v557 = vpack.c.b16 %v369, %v365
  %v558 = vpack.c.b16 %v370, %v366
  %v559 = vpack.c.b16 %v371, %v367
  %v560 = vpack.c.b16 %v372, %v368
  %v561 = vpack.c.b16 %v377, %v373
  %v562 = vpack.c.b16 %v378, %v374
  %v563 = vpack.c.b16 %v379, %v375
  %v564 = vpack.c.b16 %v380, %v376
  %v565 = vpack.c.b16 %v385, %v381
  %v566 = vpack.c.b16 %v386, %v382
  %v567 = vpack.c.b16 %v387, %v383
  %v568 = vpack.c.b16 %v388, %v384
  %v569 = vpack.c.b16 %v393, %v389
  %v570 = vpack.c.b16 %v394, %v390
  %v571 = vpack.c.b16 %v395, %v391
  %v572 = vpack.c.b16 %v396, %v392
  %v573 = vpack.c.b16 %v401, %v397
  %v574 = vpack.c.b16 %v402, %v398
  %v575 = vpack.c.b16 %v403, %v399
  %v576 = vpack.c.b16 %v404, %v400
  %v577 = vpack.c.b16 %v409, %v405
  %v578 = vpack.c.b16 %v410, %v406
  %v579 = vpack.c.b16 %v411, %v407
  %v580 = vpack.c.b16 %v412, %v408
  %v581 = vpack.c.b16 %v417, %v413
  %v582 = vpack.c.b16 %v418, %v414
  %v583 = vpack.c.b16 %v419, %v415
  %v584 = vpack.c.b16 %v420, %v416
  %v585 = vpack.c.b16 %v425, %v421
  %v586 = vpack.c.b16 %v426, %v422
  %v587 = vpack.c.b16 %v427, %v423
  %v588 = vpack.c.b16 %v428, %v424
  %v589 = vpack.c.b16 %v433, %v429
  %v590 = vpack.c.b16 %v434, %v430
  %v591 = vpack.c.b16 %v435, %v431
  %v592 = vpack.c.b16 %v436, %v432
  %v593 = vpack.c.b16 %v441, %v437
  %v594 = vpack.c.b16 %v442, %v438
  %v595 = vpack.c.b16 %v443, %v439
  %v596 = vpack.c.b16 %v444, %v440
  %v597 = vpack.c.b16 %v449, %v445
  %v598 = vpack.c.b16 %v450, %v446
  %v599 = vpack.c.b16 %v451, %v447
  %v600 = vpack.c.b16 %v452, %v448
  %v601 = vpack.c.b16 %v457, %v453
  %v602 = vpack.c.b16 %v458, %v454
  %v603 = vpack.c.b16 %v459, %v455
  %v604 = vpack.c.b16 %v460, %v456
  %v605 = vpack.c.b16 %v465, %v461
  %v606 = vpack.c.b16 %v466, %v462
  %v607 = vpack.c.b16 %v467, %v463
  %v608 = vpack.c.b16 %v468, %v464
  %v609 = vpack.c.b16 %v473, %v469
  %v610 = vpack.c.b16 %v474, %v470
  %v611 = vpack.c.b16 %v475, %v471
  %v612 = vpack.c.b16 %v476, %v472
  %v613 = vpack.c.b16 %v481, %v477
  %v614 = vpack.c.b16 %v482, %v478
  %v615 = vpack.c.b16 %v483, %v479
  %v616 = vpack.c.b16 %v484, %v480
  %v617 = vpack.c.b16 %v489, %v485
  %v618 = vpack.c.b16 %v490, %v486
  %v619 = vpack.c.b16 %v491, %v487
  %v620 = vpack.c.b16 %v492, %v488
  %v621 = vpack.c.b16 %v497, %v493
  %v622 = vpack.c.b16 %v498, %v494
  %v623 = vpack.c.b16 %v499, %v495
  %v624 = vpack.c.b16 %v500, %v496
  %v625 = vpack.c.b16 %v505, %v501
  %v626 = vpack.c.b16 %v506, %v502
  %v627 = vpack.c.b16 %v507, %v503
  %v628 = vpack.c.b16 %v508, %v504
  %v629 = vpack.c.b16 %v513, %v509
  %v630 = vpack.c.b16 %v514, %v510
  %v631 = vpack.c.b16 %v515, %v511
  %v632 = vpack.c.b16 %v516, %v512
  %v633 = vpack.c.b16 %v521, %v517
  %v634 = vpack.c.b16 %v522, %v518
  %v635 = vpack.c.b16 %v523, %v519
  %v636 = vpack.c.b16 %v524, %v520
  %v783 = vunpack.c.l.b16 %v127
  %v784 = vunpack.c.l.b16 %v128
  %v785 = vunpack.c.l.b16 %v129
  %v786 = vunpack.c.l.b16 %v130
  %v787 = vunpack.c.l.b16 %v131
  %v788 = vunpack.c.l.b16 %v132
  %v789 = vunpack.c.l.b16 %v133
  %v790 = vunpack.c.l.b16 %v134
  %v791 = vunpack.c.l.b16 %v135
  %v792 = vunpack.c.l.b16 %v136
  %v793 = vunpack.c.l.b16 %v137
  %v794 = vunpack.c.l.b16 %v138
  %v795 = vunpack.c.l.b16 %v139
  %v796 = vunpack.c.l.b16 %v140
  %v797 = vunpack.c.l.b16 %v141
  %v798 = vunpack.c.l.b16 %v142
  %v799 = vunpack.c.l.b16 %v143
  %v800 = vunpack.c.l.b16 %v144
  %v801 = vunpack.c.l.b16 %v145
  %v802 = vunpack.c.l.b16 %v146
  %v803 = vunpack.c.l.b16 %v147
  %v804 = vunpack.c.l.b16 %v148
  %v805 = vunpack.c.l.b16 %v149
  %v806 = vunpack.c.l.b16 %v150
  %v807 = vunpack.c.l.b16 %v151
  %v808 = vunpack.c.l.b16 %v152
  %v809 = vunpack.c.l.b16 %v153
  %v810 = vunpack.c.l.b16 %v154
  %v811 = vunpack.c.l.b16 %v155
  %v812 = vunpack.c.l.b16 %v156
  %v813 = vunpack.c.l.b16 %v157
  %v814 = vunpack.c.l.b16 %v158
  %v815 = vunpack.c.l.b16 %v159
  %v816 = vunpack.c.l.b16 %v160
  %v817 = vunpack.c.l.b16 %v161
  %v818 = vunpack.c.l.b16 %v162
  %v819 = vunpack.c.l.b16 %v163
  %v820 = vunpack.c.l.b16 %v164
  %v821 = vunpack.c.l.b16 %v165
  %v822 = vunpack.c.l.b16 %v166
  %v823 = vunpack.c.l.b16 %v167
  %v824 = vunpack.c.l.b16 %v168
  %v825 = vunpack.c.l.b16 %v169
  %v826 = vunpack.c.l.b16 %v170
  %v827 = vunpack.c.l.b16 %v171
  %v828 = vunpack.c.l.b16 %v172
  %v829 = vunpack.c.l.b16 %v173
  %v830 = vunpack.c.l.b16 %v174
  %v831 = vunpack.c.l.b16 %v175
  %v832 = vunpack.c.l.b16 %v176
  %v833 = vunpack.c.l.b16 %v177
  %v834 = vunpack.c.l.b16 %v178
  %v835 = vunpack.c.l.b16 %v179
  %v836 = vunpack.c.l.b16 %v180
  %v837 = vunpack.c.l.b16 %v181
  %v838 = vunpack.c.l.b16 %v182
  %v839 = vunpack.c.l.b16 %v183
  %v840 = vunpack.c.l.b16 %v184
  %v841 = vunpack.c.l.b16 %v185
  %v842 = vunpack.c.l.b16 %v186
  %v843 = vunpack.c.l.b16 %v187
  %v844 = vunpack.c.l.b16 %v188
  %v845 = vpack.c.b16 %v784, %v783
  %v846 = vpack.c.b16 %v786, %v785
  %v847 = vpack.c.b16 %v788, %v787
  %v848 = vpack.c.b16 %v790, %v789
  %v849 = vpack.c.b16 %v792, %v791
  %v850 = vpack.c.b16 %v794, %v793
  %v851 = vpack.c.b16 %v796, %v795
  %v852 = vpack.c.b16 %v798, %v797
  %v853 = vpack.c.b16 %v800, %v799
  %v854 = vpack.c.b16 %v802, %v801
  %v855 = vpack.c.b16 %v804, %v803
  %v856 = vpack.c.b16 %v806, %v805
  %v857 = vpack.c.b16 %v808, %v807
  %v858 = vpack.c.b16 %v810, %v809
  %v859 = vpack.c.b16 %v812, %v811
  %v860 = vpack.c.b16 %v814, %v813
  %v861 = vpack.c.b16 %v816, %v815
  %v862 = vpack.c.b16 %v818, %v817
  %v863 = vpack.c.b16 %v820, %v819
  %v864 = vpack.c.b16 %v822, %v821
  %v865 = vpack.c.b16 %v824, %v823
  %v866 = vpack.c.b16 %v826, %v825
  %v867 = vpack.c.b16 %v828, %v827
  %v868 = vpack.c.b16 %v830, %v829
  %v869 = vpack.c.b16 %v832, %v831
  %v870 = vpack.c.b16 %v834, %v833
  %v871 = vpack.c.b16 %v836, %v835
  %v872 = vpack.c.b16 %v838, %v837
  %v873 = vpack.c.b16 %v840, %v839
  %v874 = vpack.c.b16 %v842, %v841
  %v875 = vpack.c.b16 %v844, %v843
  %vm906 = vcmask 867328
  %v908 = vsel %vm906, %v528, 0
  %v911 = vsel %vm906, %v532, 0
  %v914 = vsel %vm906, %v536, 0
  %v917 = vsel %vm906, %v540, 0
  %v920 = vsel %vm906, %v544, 0
  %v923 = vsel %vm906, %v548, 0
  %v926 = vsel %vm906, %v552, 0
  %v929 = vsel %vm906, %v556, 0
  %v932 = vsel %vm906, %v560, 0
  %v935 = vsel %vm906, %v564, 0
  %v938 = vsel %vm906, %v568, 0
  %v941 = vsel %vm906, %v572, 0
  %v944 = vsel %vm906, %v576, 0
  %v947 = vsel %vm906, %v580, 0
  %v950 = vsel %vm906, %v584, 0
  %v953 = vsel %vm906, %v588, 0
  %v956 = vsel %vm906, %v592, 0
  %v959 = vsel %vm906, %v596, 0
  %v962 = vsel %vm906, %v600, 0
  %v965 = vsel %vm906, %v604, 0
  %v968 = vsel %vm906, %v608, 0
  %v971 = vsel %vm906, %v612, 0
  %v974 = vsel %vm906, %v616, 0
  %v977 = vsel %vm906, %v620, 0
  %v980 = vsel %vm906, %v624, 0
  %v983 = vsel %vm906, %v628, 0
  %v986 = vsel %vm906, %v632, 0
  %v989 = vsel %vm906, %v636, 0
  %vm991 = vcmask 1044480
  %v993 = vsel %vm991, %v875, 0
  %995 = vmatpush.bf16.msra.mxu0 %v852
  %996 = vmatpush.bf16.msra.mxu0 %v851
  %997 = vmatpush.bf16.msra.mxu0 %v850
  %998 = vmatpush.bf16.msra.mxu0 %v849
  %999 = vmatpush.bf16.msra.mxu0 %v848
  %1000 = vmatpush.bf16.msra.mxu0 %v847
  %1001 = vmatpush.bf16.msra.mxu0 %v846
  %1002 = vmatpush.bf16.msra.mxu0 %v845
  %1003 = vmatmul.bf16.gmra.mxu0 %v525
  %v1004 = vpop.f32.mrf.mxu0
  %v1005 = vadd.f32 0.0, %v1004
  %v1006 = vpop.f32.mrf.mxu0
  %v1007 = vadd.f32 0.0, %v1006
  %1008 = vmatmul.bf16.gmra.mxu0 %v529
  %v1009 = vpop.f32.mrf.mxu0
  %v1010 = vadd.f32 0.0, %v1009
  %v1011 = vpop.f32.mrf.mxu0
  %v1012 = vadd.f32 0.0, %v1011
  %1013 = vmatmul.bf16.gmra.mxu0 %v533
  %v1014 = vpop.f32.mrf.mxu0
  %v1015 = vadd.f32 0.0, %v1014
  %v1016 = vpop.f32.mrf.mxu0
  %v1017 = vadd.f32 0.0, %v1016
  %1018 = vmatmul.bf16.gmra.mxu0 %v537
  %v1019 = vpop.f32.mrf.mxu0
  %v1020 = vadd.f32 0.0, %v1019
  %v1021 = vpop.f32.mrf.mxu0
  %v1022 = vadd.f32 0.0, %v1021
  %1023 = vmatmul.bf16.gmra.mxu0 %v541
  %v1024 = vpop.f32.mrf.mxu0
  %v1025 = vadd.f32 0.0, %v1024
  %v1026 = vpop.f32.mrf.mxu0
  %v1027 = vadd.f32 0.0, %v1026
  %1028 = vmatmul.bf16.gmra.mxu0 %v545
  %v1029 = vpop.f32.mrf.mxu0
  %v1030 = vadd.f32 0.0, %v1029
  %v1031 = vpop.f32.mrf.mxu0
  %v1032 = vadd.f32 0.0, %v1031
  %1033 = vmatmul.bf16.gmra.mxu0 %v549
  %v1034 = vpop.f32.mrf.mxu0
  %v1035 = vadd.f32 0.0, %v1034
  %v1036 = vpop.f32.mrf.mxu0
  %v1037 = vadd.f32 0.0, %v1036
  %1038 = vmatmul.bf16.gmra.mxu0 %v553
  %v1039 = vpop.f32.mrf.mxu0
  %v1040 = vadd.f32 0.0, %v1039
  %v1041 = vpop.f32.mrf.mxu0
  %v1042 = vadd.f32 0.0, %v1041
  %1043 = vmatmul.bf16.gmra.mxu0 %v557
  %v1044 = vpop.f32.mrf.mxu0
  %v1045 = vadd.f32 0.0, %v1044
  %v1046 = vpop.f32.mrf.mxu0
  %v1047 = vadd.f32 0.0, %v1046
  %1048 = vmatmul.bf16.gmra.mxu0 %v561
  %v1049 = vpop.f32.mrf.mxu0
  %v1050 = vadd.f32 0.0, %v1049
  %v1051 = vpop.f32.mrf.mxu0
  %v1052 = vadd.f32 0.0, %v1051
  %1053 = vmatmul.bf16.gmra.mxu0 %v565
  %v1054 = vpop.f32.mrf.mxu0
  %v1055 = vadd.f32 0.0, %v1054
  %v1056 = vpop.f32.mrf.mxu0
  %v1057 = vadd.f32 0.0, %v1056
  %1058 = vmatmul.bf16.gmra.mxu0 %v569
  %v1059 = vpop.f32.mrf.mxu0
  %v1060 = vadd.f32 0.0, %v1059
  %v1061 = vpop.f32.mrf.mxu0
  %v1062 = vadd.f32 0.0, %v1061
  %1063 = vmatmul.bf16.gmra.mxu0 %v573
  %v1064 = vpop.f32.mrf.mxu0
  %v1065 = vadd.f32 0.0, %v1064
  %v1066 = vpop.f32.mrf.mxu0
  %v1067 = vadd.f32 0.0, %v1066
  %1068 = vmatmul.bf16.gmra.mxu0 %v577
  %v1069 = vpop.f32.mrf.mxu0
  %v1070 = vadd.f32 0.0, %v1069
  %v1071 = vpop.f32.mrf.mxu0
  %v1072 = vadd.f32 0.0, %v1071
  %1073 = vmatmul.bf16.gmra.mxu0 %v581
  %v1074 = vpop.f32.mrf.mxu0
  %v1075 = vadd.f32 0.0, %v1074
  %v1076 = vpop.f32.mrf.mxu0
  %v1077 = vadd.f32 0.0, %v1076
  %1078 = vmatmul.bf16.gmra.mxu0 %v585
  %v1079 = vpop.f32.mrf.mxu0
  %v1080 = vadd.f32 0.0, %v1079
  %v1081 = vpop.f32.mrf.mxu0
  %v1082 = vadd.f32 0.0, %v1081
  %1083 = vmatmul.bf16.gmra.mxu0 %v589
  %v1084 = vpop.f32.mrf.mxu0
  %v1085 = vadd.f32 0.0, %v1084
  %v1086 = vpop.f32.mrf.mxu0
  %v1087 = vadd.f32 0.0, %v1086
  %1088 = vmatmul.bf16.gmra.mxu0 %v593
  %v1089 = vpop.f32.mrf.mxu0
  %v1090 = vadd.f32 0.0, %v1089
  %v1091 = vpop.f32.mrf.mxu0
  %v1092 = vadd.f32 0.0, %v1091
  %1093 = vmatmul.bf16.gmra.mxu0 %v597
  %v1094 = vpop.f32.mrf.mxu0
  %v1095 = vadd.f32 0.0, %v1094
  %v1096 = vpop.f32.mrf.mxu0
  %v1097 = vadd.f32 0.0, %v1096
  %1098 = vmatmul.bf16.gmra.mxu0 %v601
  %v1099 = vpop.f32.mrf.mxu0
  %v1100 = vadd.f32 0.0, %v1099
  %v1101 = vpop.f32.mrf.mxu0
  %v1102 = vadd.f32 0.0, %v1101
  %1103 = vmatmul.bf16.gmra.mxu0 %v605
  %v1104 = vpop.f32.mrf.mxu0
  %v1105 = vadd.f32 0.0, %v1104
  %v1106 = vpop.f32.mrf.mxu0
  %v1107 = vadd.f32 0.0, %v1106
  %1108 = vmatmul.bf16.gmra.mxu0 %v609
  %v1109 = vpop.f32.mrf.mxu0
  %v1110 = vadd.f32 0.0, %v1109
  %v1111 = vpop.f32.mrf.mxu0
  %v1112 = vadd.f32 0.0, %v1111
  %1113 = vmatmul.bf16.gmra.mxu0 %v613
  %v1114 = vpop.f32.mrf.mxu0
  %v1115 = vadd.f32 0.0, %v1114
  %v1116 = vpop.f32.mrf.mxu0
  %v1117 = vadd.f32 0.0, %v1116
  %1118 = vmatmul.bf16.gmra.mxu0 %v617
  %v1119 = vpop.f32.mrf.mxu0
  %v1120 = vadd.f32 0.0, %v1119
  %v1121 = vpop.f32.mrf.mxu0
  %v1122 = vadd.f32 0.0, %v1121
  %1123 = vmatmul.bf16.gmra.mxu0 %v621
  %v1124 = vpop.f32.mrf.mxu0
  %v1125 = vadd.f32 0.0, %v1124
  %v1126 = vpop.f32.mrf.mxu0
  %v1127 = vadd.f32 0.0, %v1126
  %1128 = vmatmul.bf16.gmra.mxu0 %v625
  %v1129 = vpop.f32.mrf.mxu0
  %v1130 = vadd.f32 0.0, %v1129
  %v1131 = vpop.f32.mrf.mxu0
  %v1132 = vadd.f32 0.0, %v1131
  %1133 = vmatmul.bf16.gmra.mxu0 %v629
  %v1134 = vpop.f32.mrf.mxu0
  %v1135 = vadd.f32 0.0, %v1134
  %v1136 = vpop.f32.mrf.mxu0
  %v1137 = vadd.f32 0.0, %v1136
  %1138 = vmatmul.bf16.gmra.mxu0 %v633
  %v1139 = vpop.f32.mrf.mxu0
  %v1140 = vadd.f32 0.0, %v1139
  %v1141 = vpop.f32.mrf.mxu0
  %v1142 = vadd.f32 0.0, %v1141
  %1143 = vdwg.mxu0
  %1144 = vmatpush.bf16.msra.mxu0 %v860
  %1145 = vmatpush.bf16.msra.mxu0 %v859
  %1146 = vmatpush.bf16.msra.mxu0 %v858
  %1147 = vmatpush.bf16.msra.mxu0 %v857
  %1148 = vmatpush.bf16.msra.mxu0 %v856
  %1149 = vmatpush.bf16.msra.mxu0 %v855
  %1150 = vmatpush.bf16.msra.mxu0 %v854
  %1151 = vmatpush.bf16.msra.mxu0 %v853
  %1152 = vmatmul.bf16.gmra.mxu0 %v526
  %v1153 = vpop.f32.mrf.mxu0
  %v1154 = vadd.f32 %v1005, %v1153
  %v1155 = vpop.f32.mrf.mxu0
  %v1156 = vadd.f32 %v1007, %v1155
  %1157 = vmatmul.bf16.gmra.mxu0 %v530
  %v1158 = vpop.f32.mrf.mxu0
  %v1159 = vadd.f32 %v1010, %v1158
  %v1160 = vpop.f32.mrf.mxu0
  %v1161 = vadd.f32 %v1012, %v1160
  %1162 = vmatmul.bf16.gmra.mxu0 %v534
  %v1163 = vpop.f32.mrf.mxu0
  %v1164 = vadd.f32 %v1015, %v1163
  %v1165 = vpop.f32.mrf.mxu0
  %v1166 = vadd.f32 %v1017, %v1165
  %1167 = vmatmul.bf16.gmra.mxu0 %v538
  %v1168 = vpop.f32.mrf.mxu0
  %v1169 = vadd.f32 %v1020, %v1168
  %v1170 = vpop.f32.mrf.mxu0
  %v1171 = vadd.f32 %v1022, %v1170
  %1172 = vmatmul.bf16.gmra.mxu0 %v542
  %v1173 = vpop.f32.mrf.mxu0
  %v1174 = vadd.f32 %v1025, %v1173
  %v1175 = vpop.f32.mrf.mxu0
  %v1176 = vadd.f32 %v1027, %v1175
  %1177 = vmatmul.bf16.gmra.mxu0 %v546
  %v1178 = vpop.f32.mrf.mxu0
  %v1179 = vadd.f32 %v1030, %v1178
  %v1180 = vpop.f32.mrf.mxu0
  %v1181 = vadd.f32 %v1032, %v1180
  %1182 = vmatmul.bf16.gmra.mxu0 %v550
  %v1183 = vpop.f32.mrf.mxu0
  %v1184 = vadd.f32 %v1035, %v1183
  %v1185 = vpop.f32.mrf.mxu0
  %v1186 = vadd.f32 %v1037, %v1185
  %1187 = vmatmul.bf16.gmra.mxu0 %v554
  %v1188 = vpop.f32.mrf.mxu0
  %v1189 = vadd.f32 %v1040, %v1188
  %v1190 = vpop.f32.mrf.mxu0
  %v1191 = vadd.f32 %v1042, %v1190
  %1192 = vmatmul.bf16.gmra.mxu0 %v558
  %v1193 = vpop.f32.mrf.mxu0
  %v1194 = vadd.f32 %v1045, %v1193
  %v1195 = vpop.f32.mrf.mxu0
  %v1196 = vadd.f32 %v1047, %v1195
  %1197 = vmatmul.bf16.gmra.mxu0 %v562
  %v1198 = vpop.f32.mrf.mxu0
  %v1199 = vadd.f32 %v1050, %v1198
  %v1200 = vpop.f32.mrf.mxu0
  %v1201 = vadd.f32 %v1052, %v1200
  %1202 = vmatmul.bf16.gmra.mxu0 %v566
  %v1203 = vpop.f32.mrf.mxu0
  %v1204 = vadd.f32 %v1055, %v1203
  %v1205 = vpop.f32.mrf.mxu0
  %v1206 = vadd.f32 %v1057, %v1205
  %1207 = vmatmul.bf16.gmra.mxu0 %v570
  %v1208 = vpop.f32.mrf.mxu0
  %v1209 = vadd.f32 %v1060, %v1208
  %v1210 = vpop.f32.mrf.mxu0
  %v1211 = vadd.f32 %v1062, %v1210
  %1212 = vmatmul.bf16.gmra.mxu0 %v574
  %v1213 = vpop.f32.mrf.mxu0
  %v1214 = vadd.f32 %v1065, %v1213
  %v1215 = vpop.f32.mrf.mxu0
  %v1216 = vadd.f32 %v1067, %v1215
  %1217 = vmatmul.bf16.gmra.mxu0 %v578
  %v1218 = vpop.f32.mrf.mxu0
  %v1219 = vadd.f32 %v1070, %v1218
  %v1220 = vpop.f32.mrf.mxu0
  %v1221 = vadd.f32 %v1072, %v1220
  %1222 = vmatmul.bf16.gmra.mxu0 %v582
  %v1223 = vpop.f32.mrf.mxu0
  %v1224 = vadd.f32 %v1075, %v1223
  %v1225 = vpop.f32.mrf.mxu0
  %v1226 = vadd.f32 %v1077, %v1225
  %1227 = vmatmul.bf16.gmra.mxu0 %v586
  %v1228 = vpop.f32.mrf.mxu0
  %v1229 = vadd.f32 %v1080, %v1228
  %v1230 = vpop.f32.mrf.mxu0
  %v1231 = vadd.f32 %v1082, %v1230
  %1232 = vmatmul.bf16.gmra.mxu0 %v590
  %v1233 = vpop.f32.mrf.mxu0
  %v1234 = vadd.f32 %v1085, %v1233
  %v1235 = vpop.f32.mrf.mxu0
  %v1236 = vadd.f32 %v1087, %v1235
  %1237 = vmatmul.bf16.gmra.mxu0 %v594
  %v1238 = vpop.f32.mrf.mxu0
  %v1239 = vadd.f32 %v1090, %v1238
  %v1240 = vpop.f32.mrf.mxu0
  %v1241 = vadd.f32 %v1092, %v1240
  %1242 = vmatmul.bf16.gmra.mxu0 %v598
  %v1243 = vpop.f32.mrf.mxu0
  %v1244 = vadd.f32 %v1095, %v1243
  %v1245 = vpop.f32.mrf.mxu0
  %v1246 = vadd.f32 %v1097, %v1245
  %1247 = vmatmul.bf16.gmra.mxu0 %v602
  %v1248 = vpop.f32.mrf.mxu0
  %v1249 = vadd.f32 %v1100, %v1248
  %v1250 = vpop.f32.mrf.mxu0
  %v1251 = vadd.f32 %v1102, %v1250
  %1252 = vmatmul.bf16.gmra.mxu0 %v606
  %v1253 = vpop.f32.mrf.mxu0
  %v1254 = vadd.f32 %v1105, %v1253
  %v1255 = vpop.f32.mrf.mxu0
  %v1256 = vadd.f32 %v1107, %v1255
  %1257 = vmatmul.bf16.gmra.mxu0 %v610
  %v1258 = vpop.f32.mrf.mxu0
  %v1259 = vadd.f32 %v1110, %v1258
  %v1260 = vpop.f32.mrf.mxu0
  %v1261 = vadd.f32 %v1112, %v1260
  %1262 = vmatmul.bf16.gmra.mxu0 %v614
  %v1263 = vpop.f32.mrf.mxu0
  %v1264 = vadd.f32 %v1115, %v1263
  %v1265 = vpop.f32.mrf.mxu0
  %v1266 = vadd.f32 %v1117, %v1265
  %1267 = vmatmul.bf16.gmra.mxu0 %v618
  %v1268 = vpop.f32.mrf.mxu0
  %v1269 = vadd.f32 %v1120, %v1268
  %v1270 = vpop.f32.mrf.mxu0
  %v1271 = vadd.f32 %v1122, %v1270
  %1272 = vmatmul.bf16.gmra.mxu0 %v622
  %v1273 = vpop.f32.mrf.mxu0
  %v1274 = vadd.f32 %v1125, %v1273
  %v1275 = vpop.f32.mrf.mxu0
  %v1276 = vadd.f32 %v1127, %v1275
  %1277 = vmatmul.bf16.gmra.mxu0 %v626
  %v1278 = vpop.f32.mrf.mxu0
  %v1279 = vadd.f32 %v1130, %v1278
  %v1280 = vpop.f32.mrf.mxu0
  %v1281 = vadd.f32 %v1132, %v1280
  %1282 = vmatmul.bf16.gmra.mxu0 %v630
  %v1283 = vpop.f32.mrf.mxu0
  %v1284 = vadd.f32 %v1135, %v1283
  %v1285 = vpop.f32.mrf.mxu0
  %v1286 = vadd.f32 %v1137, %v1285
  %1287 = vmatmul.bf16.gmra.mxu0 %v634
  %v1288 = vpop.f32.mrf.mxu0
  %v1289 = vadd.f32 %v1140, %v1288
  %v1290 = vpop.f32.mrf.mxu0
  %v1291 = vadd.f32 %v1142, %v1290
  %1292 = vdwg.mxu0
  %1293 = vmatpush.bf16.msra.mxu0 %v868
  %1294 = vmatpush.bf16.msra.mxu0 %v867
  %1295 = vmatpush.bf16.msra.mxu0 %v866
  %1296 = vmatpush.bf16.msra.mxu0 %v865
  %1297 = vmatpush.bf16.msra.mxu0 %v864
  %1298 = vmatpush.bf16.msra.mxu0 %v863
  %1299 = vmatpush.bf16.msra.mxu0 %v862
  %1300 = vmatpush.bf16.msra.mxu0 %v861
  %1301 = vmatmul.bf16.gmra.mxu0 %v527
  %v1302 = vpop.f32.mrf.mxu0
  %v1303 = vadd.f32 %v1154, %v1302
  %v1304 = vpop.f32.mrf.mxu0
  %v1305 = vadd.f32 %v1156, %v1304
  %1306 = vmatmul.bf16.gmra.mxu0 %v531
  %v1307 = vpop.f32.mrf.mxu0
  %v1308 = vadd.f32 %v1159, %v1307
  %v1309 = vpop.f32.mrf.mxu0
  %v1310 = vadd.f32 %v1161, %v1309
  %1311 = vmatmul.bf16.gmra.mxu0 %v535
  %v1312 = vpop.f32.mrf.mxu0
  %v1313 = vadd.f32 %v1164, %v1312
  %v1314 = vpop.f32.mrf.mxu0
  %v1315 = vadd.f32 %v1166, %v1314
  %1316 = vmatmul.bf16.gmra.mxu0 %v539
  %v1317 = vpop.f32.mrf.mxu0
  %v1318 = vadd.f32 %v1169, %v1317
  %v1319 = vpop.f32.mrf.mxu0
  %v1320 = vadd.f32 %v1171, %v1319
  %1321 = vmatmul.bf16.gmra.mxu0 %v543
  %v1322 = vpop.f32.mrf.mxu0
  %v1323 = vadd.f32 %v1174, %v1322
  %v1324 = vpop.f32.mrf.mxu0
  %v1325 = vadd.f32 %v1176, %v1324
  %1326 = vmatmul.bf16.gmra.mxu0 %v547
  %v1327 = vpop.f32.mrf.mxu0
  %v1328 = vadd.f32 %v1179, %v1327
  %v1329 = vpop.f32.mrf.mxu0
  %v1330 = vadd.f32 %v1181, %v1329
  %1331 = vmatmul.bf16.gmra.mxu0 %v551
  %v1332 = vpop.f32.mrf.mxu0
  %v1333 = vadd.f32 %v1184, %v1332
  %v1334 = vpop.f32.mrf.mxu0
  %v1335 = vadd.f32 %v1186, %v1334
  %1336 = vmatmul.bf16.gmra.mxu0 %v555
  %v1337 = vpop.f32.mrf.mxu0
  %v1338 = vadd.f32 %v1189, %v1337
  %v1339 = vpop.f32.mrf.mxu0
  %v1340 = vadd.f32 %v1191, %v1339
  %1341 = vmatmul.bf16.gmra.mxu0 %v559
  %v1342 = vpop.f32.mrf.mxu0
  %v1343 = vadd.f32 %v1194, %v1342
  %v1344 = vpop.f32.mrf.mxu0
  %v1345 = vadd.f32 %v1196, %v1344
  %1346 = vmatmul.bf16.gmra.mxu0 %v563
  %v1347 = vpop.f32.mrf.mxu0
  %v1348 = vadd.f32 %v1199, %v1347
  %v1349 = vpop.f32.mrf.mxu0
  %v1350 = vadd.f32 %v1201, %v1349
  %1351 = vmatmul.bf16.gmra.mxu0 %v567
  %v1352 = vpop.f32.mrf.mxu0
  %v1353 = vadd.f32 %v1204, %v1352
  %v1354 = vpop.f32.mrf.mxu0
  %v1355 = vadd.f32 %v1206, %v1354
  %1356 = vmatmul.bf16.gmra.mxu0 %v571
  %v1357 = vpop.f32.mrf.mxu0
  %v1358 = vadd.f32 %v1209, %v1357
  %v1359 = vpop.f32.mrf.mxu0
  %v1360 = vadd.f32 %v1211, %v1359
  %1361 = vmatmul.bf16.gmra.mxu0 %v575
  %v1362 = vpop.f32.mrf.mxu0
  %v1363 = vadd.f32 %v1214, %v1362
  %v1364 = vpop.f32.mrf.mxu0
  %v1365 = vadd.f32 %v1216, %v1364
  %1366 = vmatmul.bf16.gmra.mxu0 %v579
  %v1367 = vpop.f32.mrf.mxu0
  %v1368 = vadd.f32 %v1219, %v1367
  %v1369 = vpop.f32.mrf.mxu0
  %v1370 = vadd.f32 %v1221, %v1369
  %1371 = vmatmul.bf16.gmra.mxu0 %v583
  %v1372 = vpop.f32.mrf.mxu0
  %v1373 = vadd.f32 %v1224, %v1372
  %v1374 = vpop.f32.mrf.mxu0
  %v1375 = vadd.f32 %v1226, %v1374
  %1376 = vmatmul.bf16.gmra.mxu0 %v587
  %v1377 = vpop.f32.mrf.mxu0
  %v1378 = vadd.f32 %v1229, %v1377
  %v1379 = vpop.f32.mrf.mxu0
  %v1380 = vadd.f32 %v1231, %v1379
  %1381 = vmatmul.bf16.gmra.mxu0 %v591
  %v1382 = vpop.f32.mrf.mxu0
  %v1383 = vadd.f32 %v1234, %v1382
  %v1384 = vpop.f32.mrf.mxu0
  %v1385 = vadd.f32 %v1236, %v1384
  %1386 = vmatmul.bf16.gmra.mxu0 %v595
  %v1387 = vpop.f32.mrf.mxu0
  %v1388 = vadd.f32 %v1239, %v1387
  %v1389 = vpop.f32.mrf.mxu0
  %v1390 = vadd.f32 %v1241, %v1389
  %1391 = vmatmul.bf16.gmra.mxu0 %v599
  %v1392 = vpop.f32.mrf.mxu0
  %v1393 = vadd.f32 %v1244, %v1392
  %v1394 = vpop.f32.mrf.mxu0
  %v1395 = vadd.f32 %v1246, %v1394
  %1396 = vmatmul.bf16.gmra.mxu0 %v603
  %v1397 = vpop.f32.mrf.mxu0
  %v1398 = vadd.f32 %v1249, %v1397
  %v1399 = vpop.f32.mrf.mxu0
  %v1400 = vadd.f32 %v1251, %v1399
  %1401 = vmatmul.bf16.gmra.mxu0 %v607
  %v1402 = vpop.f32.mrf.mxu0
  %v1403 = vadd.f32 %v1254, %v1402
  %v1404 = vpop.f32.mrf.mxu0
  %v1405 = vadd.f32 %v1256, %v1404
  %1406 = vmatmul.bf16.gmra.mxu0 %v611
  %v1407 = vpop.f32.mrf.mxu0
  %v1408 = vadd.f32 %v1259, %v1407
  %v1409 = vpop.f32.mrf.mxu0
  %v1410 = vadd.f32 %v1261, %v1409
  %1411 = vmatmul.bf16.gmra.mxu0 %v615
  %v1412 = vpop.f32.mrf.mxu0
  %v1413 = vadd.f32 %v1264, %v1412
  %v1414 = vpop.f32.mrf.mxu0
  %v1415 = vadd.f32 %v1266, %v1414
  %1416 = vmatmul.bf16.gmra.mxu0 %v619
  %v1417 = vpop.f32.mrf.mxu0
  %v1418 = vadd.f32 %v1269, %v1417
  %v1419 = vpop.f32.mrf.mxu0
  %v1420 = vadd.f32 %v1271, %v1419
  %1421 = vmatmul.bf16.gmra.mxu0 %v623
  %v1422 = vpop.f32.mrf.mxu0
  %v1423 = vadd.f32 %v1274, %v1422
  %v1424 = vpop.f32.mrf.mxu0
  %v1425 = vadd.f32 %v1276, %v1424
  %1426 = vmatmul.bf16.gmra.mxu0 %v627
  %v1427 = vpop.f32.mrf.mxu0
  %v1428 = vadd.f32 %v1279, %v1427
  %v1429 = vpop.f32.mrf.mxu0
  %v1430 = vadd.f32 %v1281, %v1429
  %1431 = vmatmul.bf16.gmra.mxu0 %v631
  %v1432 = vpop.f32.mrf.mxu0
  %v1433 = vadd.f32 %v1284, %v1432
  %v1434 = vpop.f32.mrf.mxu0
  %v1435 = vadd.f32 %v1286, %v1434
  %1436 = vmatmul.bf16.gmra.mxu0 %v635
  %v1437 = vpop.f32.mrf.mxu0
  %v1438 = vadd.f32 %v1289, %v1437
  %v1439 = vpop.f32.mrf.mxu0
  %v1440 = vadd.f32 %v1291, %v1439
  %1441 = vdwg.mxu0
  %1442 = vmatpush.bf16.msra.mxu0 0
  %1443 = vmatpush.bf16.msra.mxu0 %v993
  %1444 = vmatpush.bf16.msra.mxu0 %v874
  %1445 = vmatpush.bf16.msra.mxu0 %v873
  %1446 = vmatpush.bf16.msra.mxu0 %v872
  %1447 = vmatpush.bf16.msra.mxu0 %v871
  %1448 = vmatpush.bf16.msra.mxu0 %v870
  %1449 = vmatpush.bf16.msra.mxu0 %v869
  %1450 = vmatmul.bf16.gmra.mxu0 %v908
  %v1451 = vpop.f32.mrf.mxu0
  %v1452 = vadd.f32 %v1303, %v1451
  %v1453 = vpop.f32.mrf.mxu0
  %v1454 = vadd.f32 %v1305, %v1453
  %1455 = vmatmul.bf16.gmra.mxu0 %v911
  %v1456 = vpop.f32.mrf.mxu0
  %v1457 = vadd.f32 %v1308, %v1456
  %v1458 = vpop.f32.mrf.mxu0
  %v1459 = vadd.f32 %v1310, %v1458
  %1460 = vmatmul.bf16.gmra.mxu0 %v914
  %v1461 = vpop.f32.mrf.mxu0
  %v1462 = vadd.f32 %v1313, %v1461
  %v1463 = vpop.f32.mrf.mxu0
  %v1464 = vadd.f32 %v1315, %v1463
  %1465 = vmatmul.bf16.gmra.mxu0 %v917
  %v1466 = vpop.f32.mrf.mxu0
  %v1467 = vadd.f32 %v1318, %v1466
  %v1468 = vpop.f32.mrf.mxu0
  %v1469 = vadd.f32 %v1320, %v1468
  %1470 = vmatmul.bf16.gmra.mxu0 %v920
  %v1471 = vpop.f32.mrf.mxu0
  %v1472 = vadd.f32 %v1323, %v1471
  %v1473 = vpop.f32.mrf.mxu0
  %v1474 = vadd.f32 %v1325, %v1473
  %1475 = vmatmul.bf16.gmra.mxu0 %v923
  %v1476 = vpop.f32.mrf.mxu0
  %v1477 = vadd.f32 %v1328, %v1476
  %v1478 = vpop.f32.mrf.mxu0
  %v1479 = vadd.f32 %v1330, %v1478
  %1480 = vmatmul.bf16.gmra.mxu0 %v926
  %v1481 = vpop.f32.mrf.mxu0
  %v1482 = vadd.f32 %v1333, %v1481
  %v1483 = vpop.f32.mrf.mxu0
  %v1484 = vadd.f32 %v1335, %v1483
  %1485 = vmatmul.bf16.gmra.mxu0 %v929
  %v1486 = vpop.f32.mrf.mxu0
  %v1487 = vadd.f32 %v1338, %v1486
  %v1488 = vpop.f32.mrf.mxu0
  %v1489 = vadd.f32 %v1340, %v1488
  %1490 = vmatmul.bf16.gmra.mxu0 %v932
  %v1491 = vpop.f32.mrf.mxu0
  %v1492 = vadd.f32 %v1343, %v1491
  %v1493 = vpop.f32.mrf.mxu0
  %v1494 = vadd.f32 %v1345, %v1493
  %1495 = vmatmul.bf16.gmra.mxu0 %v935
  %v1496 = vpop.f32.mrf.mxu0
  %v1497 = vadd.f32 %v1348, %v1496
  %v1498 = vpop.f32.mrf.mxu0
  %v1499 = vadd.f32 %v1350, %v1498
  %1500 = vmatmul.bf16.gmra.mxu0 %v938
  %v1501 = vpop.f32.mrf.mxu0
  %v1502 = vadd.f32 %v1353, %v1501
  %v1503 = vpop.f32.mrf.mxu0
  %v1504 = vadd.f32 %v1355, %v1503
  %1505 = vmatmul.bf16.gmra.mxu0 %v941
  %v1506 = vpop.f32.mrf.mxu0
  %v1507 = vadd.f32 %v1358, %v1506
  %v1508 = vpop.f32.mrf.mxu0
  %v1509 = vadd.f32 %v1360, %v1508
  %1510 = vmatmul.bf16.gmra.mxu0 %v944
  %v1511 = vpop.f32.mrf.mxu0
  %v1512 = vadd.f32 %v1363, %v1511
  %v1513 = vpop.f32.mrf.mxu0
  %v1514 = vadd.f32 %v1365, %v1513
  %1515 = vmatmul.bf16.gmra.mxu0 %v947
  %v1516 = vpop.f32.mrf.mxu0
  %v1517 = vadd.f32 %v1368, %v1516
  %v1518 = vpop.f32.mrf.mxu0
  %v1519 = vadd.f32 %v1370, %v1518
  %1520 = vmatmul.bf16.gmra.mxu0 %v950
  %v1521 = vpop.f32.mrf.mxu0
  %v1522 = vadd.f32 %v1373, %v1521
  %v1523 = vpop.f32.mrf.mxu0
  %v1524 = vadd.f32 %v1375, %v1523
  %1525 = vmatmul.bf16.gmra.mxu0 %v953
  %v1526 = vpop.f32.mrf.mxu0
  %v1527 = vadd.f32 %v1378, %v1526
  %v1528 = vpop.f32.mrf.mxu0
  %v1529 = vadd.f32 %v1380, %v1528
  %1530 = vmatmul.bf16.gmra.mxu0 %v956
  %v1531 = vpop.f32.mrf.mxu0
  %v1532 = vadd.f32 %v1383, %v1531
  %v1533 = vpop.f32.mrf.mxu0
  %v1534 = vadd.f32 %v1385, %v1533
  %1535 = vmatmul.bf16.gmra.mxu0 %v959
  %v1536 = vpop.f32.mrf.mxu0
  %v1537 = vadd.f32 %v1388, %v1536
  %v1538 = vpop.f32.mrf.mxu0
  %v1539 = vadd.f32 %v1390, %v1538
  %1540 = vmatmul.bf16.gmra.mxu0 %v962
  %v1541 = vpop.f32.mrf.mxu0
  %v1542 = vadd.f32 %v1393, %v1541
  %v1543 = vpop.f32.mrf.mxu0
  %v1544 = vadd.f32 %v1395, %v1543
  %1545 = vmatmul.bf16.gmra.mxu0 %v965
  %v1546 = vpop.f32.mrf.mxu0
  %v1547 = vadd.f32 %v1398, %v1546
  %v1548 = vpop.f32.mrf.mxu0
  %v1549 = vadd.f32 %v1400, %v1548
  %1550 = vmatmul.bf16.gmra.mxu0 %v968
  %v1551 = vpop.f32.mrf.mxu0
  %v1552 = vadd.f32 %v1403, %v1551
  %v1553 = vpop.f32.mrf.mxu0
  %v1554 = vadd.f32 %v1405, %v1553
  %1555 = vmatmul.bf16.gmra.mxu0 %v971
  %v1556 = vpop.f32.mrf.mxu0
  %v1557 = vadd.f32 %v1408, %v1556
  %v1558 = vpop.f32.mrf.mxu0
  %v1559 = vadd.f32 %v1410, %v1558
  %1560 = vmatmul.bf16.gmra.mxu0 %v974
  %v1561 = vpop.f32.mrf.mxu0
  %v1562 = vadd.f32 %v1413, %v1561
  %v1563 = vpop.f32.mrf.mxu0
  %v1564 = vadd.f32 %v1415, %v1563
  %1565 = vmatmul.bf16.gmra.mxu0 %v977
  %v1566 = vpop.f32.mrf.mxu0
  %v1567 = vadd.f32 %v1418, %v1566
  %v1568 = vpop.f32.mrf.mxu0
  %v1569 = vadd.f32 %v1420, %v1568
  %1570 = vmatmul.bf16.gmra.mxu0 %v980
  %v1571 = vpop.f32.mrf.mxu0
  %v1572 = vadd.f32 %v1423, %v1571
  %v1573 = vpop.f32.mrf.mxu0
  %v1574 = vadd.f32 %v1425, %v1573
  %1575 = vmatmul.bf16.gmra.mxu0 %v983
  %v1576 = vpop.f32.mrf.mxu0
  %v1577 = vadd.f32 %v1428, %v1576
  %v1578 = vpop.f32.mrf.mxu0
  %v1579 = vadd.f32 %v1430, %v1578
  %1580 = vmatmul.bf16.gmra.mxu0 %v986
  %v1581 = vpop.f32.mrf.mxu0
  %v1582 = vadd.f32 %v1433, %v1581
  %v1583 = vpop.f32.mrf.mxu0
  %v1584 = vadd.f32 %v1435, %v1583
  %1585 = vmatmul.bf16.gmra.mxu0 %v989
  %v1586 = vpop.f32.mrf.mxu0
  %v1587 = vadd.f32 %v1438, %v1586
  %v1588 = vpop.f32.mrf.mxu0
  %v1589 = vadd.f32 %v1440, %v1588
  %1590 = vdwg.mxu0
  %v1591 = vmax.f32 %v1452, %v1487
  %v1592 = vmax.f32 %v1591, %v1522
  %v1593 = vmax.f32 %v1592, %v1557
  %v1594 = vmax.f32 %v1454, %v1489
  %v1595 = vmax.f32 %v1594, %v1524
  %v1596 = vmax.f32 %v1595, %v1559
  %v1597 = vmax.f32 %v1457, %v1492
  %v1598 = vmax.f32 %v1597, %v1527
  %v1599 = vmax.f32 %v1598, %v1562
  %v1600 = vmax.f32 %v1459, %v1494
  %v1601 = vmax.f32 %v1600, %v1529
  %v1602 = vmax.f32 %v1601, %v1564
  %v1603 = vmax.f32 %v1462, %v1497
  %v1604 = vmax.f32 %v1603, %v1532
  %v1605 = vmax.f32 %v1604, %v1567
  %v1606 = vmax.f32 %v1464, %v1499
  %v1607 = vmax.f32 %v1606, %v1534
  %v1608 = vmax.f32 %v1607, %v1569
  %v1609 = vmax.f32 %v1467, %v1502
  %v1610 = vmax.f32 %v1609, %v1537
  %v1611 = vmax.f32 %v1610, %v1572
  %v1612 = vmax.f32 %v1469, %v1504
  %v1613 = vmax.f32 %v1612, %v1539
  %v1614 = vmax.f32 %v1613, %v1574
  %v1615 = vmax.f32 %v1472, %v1507
  %v1616 = vmax.f32 %v1615, %v1542
  %v1617 = vmax.f32 %v1616, %v1577
  %v1618 = vmax.f32 %v1474, %v1509
  %v1619 = vmax.f32 %v1618, %v1544
  %v1620 = vmax.f32 %v1619, %v1579
  %v1621 = vmax.f32 %v1477, %v1512
  %v1622 = vmax.f32 %v1621, %v1547
  %v1623 = vmax.f32 %v1622, %v1582
  %v1624 = vmax.f32 %v1479, %v1514
  %v1625 = vmax.f32 %v1624, %v1549
  %v1626 = vmax.f32 %v1625, %v1584
  %v1627 = vmax.f32 %v1482, %v1517
  %v1628 = vmax.f32 %v1627, %v1552
  %v1629 = vmax.f32 %v1628, %v1587
  %v1630 = vmax.f32 %v1484, %v1519
  %v1631 = vmax.f32 %v1630, %v1554
  %v1632 = vmax.f32 %v1631, %v1589
  %v1633 = vld [vmem:[%s2] sm:$0x1]
  %v1635 = vperm.slane %v1633, 0
  %v1637 = vadd.f32 %v1593, %v1635
  %v1638 = vadd.f32 %v1596, %v1635
  %v1639 = vadd.f32 %v1599, %v1635
  %v1640 = vadd.f32 %v1602, %v1635
  %v1641 = vadd.f32 %v1605, %v1635
  %v1642 = vadd.f32 %v1608, %v1635
  %v1643 = vadd.f32 %v1611, %v1635
  %v1644 = vadd.f32 %v1614, %v1635
  %v1645 = vadd.f32 %v1617, %v1635
  %v1646 = vadd.f32 %v1620, %v1635
  %v1647 = vadd.f32 %v1623, %v1635
  %v1648 = vadd.f32 %v1626, %v1635
  %v1649 = vadd.f32 %v1629, %v1635
  %v1650 = vadd.f32 %v1632, %v1635
  %v1651 = vmax.f32 %v1637, 0.0
  %v1652 = vmax.f32 %v1638, 0.0
  %v1653 = vmax.f32 %v1639, 0.0
  %v1654 = vmax.f32 %v1640, 0.0
  %v1655 = vmax.f32 %v1641, 0.0
  %v1656 = vmax.f32 %v1642, 0.0
  %v1657 = vmax.f32 %v1643, 0.0
  %v1658 = vmax.f32 %v1644, 0.0
  %v1659 = vmax.f32 %v1645, 0.0
  %v1660 = vmax.f32 %v1646, 0.0
  %v1661 = vmax.f32 %v1647, 0.0
  %v1662 = vmax.f32 %v1648, 0.0
  %v1663 = vmax.f32 %v1649, 0.0
  %v1664 = vmax.f32 %v1650, 0.0
  %v1665 = vpack.c.bf16 %v1651, %v1651
  %v1666 = vpack.c.bf16 %v1652, %v1652
  %v1667 = vpack.c.bf16 %v1653, %v1653
  %v1668 = vpack.c.bf16 %v1654, %v1654
  %v1669 = vpack.c.bf16 %v1655, %v1655
  %v1670 = vpack.c.bf16 %v1656, %v1656
  %v1671 = vpack.c.bf16 %v1657, %v1657
  %v1672 = vpack.c.bf16 %v1658, %v1658
  %v1673 = vpack.c.bf16 %v1659, %v1659
  %v1674 = vpack.c.bf16 %v1660, %v1660
  %v1675 = vpack.c.bf16 %v1661, %v1661
  %v1676 = vpack.c.bf16 %v1662, %v1662
  %v1677 = vpack.c.bf16 %v1663, %v1663
  %v1678 = vpack.c.bf16 %v1664, %v1664
  %1679 = vst [vmem:[%s3] sm:$0xf] %v1665
  %1680 = vst [vmem:[%s3 + $0x4] sm:$0xf] %v1666
  %1681 = vst [vmem:[%s3 + $0x8] sm:$0xf] %v1667
  %1682 = vst [vmem:[%s3 + $0xc] sm:$0xf] %v1668
  %1683 = vst [vmem:[%s3 + $0x10] sm:$0xf] %v1669
  %1684 = vst [vmem:[%s3 + $0x14] sm:$0xf] %v1670
  %1685 = vst [vmem:[%s3 + $0x18] sm:$0xf] %v1671
  %1686 = vst [vmem:[%s3 + $0x1c] sm:$0xf] %v1672
  %1687 = vst [vmem:[%s3 + $0x20] sm:$0xf] %v1673
  %1688 = vst [vmem:[%s3 + $0x24] sm:$0xf] %v1674
  %1689 = vst [vmem:[%s3 + $0x28] sm:$0xf] %v1675
  %1690 = vst [vmem:[%s3 + $0x2c] sm:$0xf] %v1676
  %1691 = vst [vmem:[%s3 + $0x30] sm:$0xf] %v1677
  %1692 = vst [vmem:[%s3 + $0x34] sm:$0xf] %v1678
  // Predicated region
  $region14: #{net_forward.4} parent=0 // pred_check
    _
  $region15: #{net_forward.4} parent=0 // pred_check_branch
    %1694 = sbr.rel (0) target = $region17
  $region16: #{net_forward.4} parent=0 // pred_region
    _
  $region17: #{net_forward.4} parent=0 // pred_fallthru
    _
  // Predicated region
  $region18: #{net_forward.4} parent=0 // pred_check
    _
  $region19: #{net_forward.4} parent=0 // pred_check_branch
    %1696 = sbr.rel (0) target = $region21
  $region20: #{net_forward.4} parent=0 // pred_region
    _
  $region21: #{net_forward.4} parent=0 // pred_fallthru
    _

// kernel: net_forward.5
$region0: #{net_forward.5}
  #allocation0 [shape = 'u32[]', space=smem, size = 0x4, offset = 0x4, fixed_abs, tag = 'smem constant byte address 0x4 - core index']
  #allocation1 [shape = 'u32[72,128]{1,0:T(1,128)}', space=vmem, size = 0x9000, scoped, tag = 'internal scratch']
  %s0 = inlined_call_operand.vmem [shape: bf16[16,980], index: 0, kind: input, shape index: {}]
  %s1 = inlined_call_operand.vmem [shape: bf16[980,512], index: 1, kind: input, shape index: {}]
  %s2 = inlined_call_operand.vmem [shape: f32[1,512], index: 2, kind: input, shape index: {}]
  %s3 = inlined_call_operand.vmem [shape: bf16[512,128], index: 3, kind: input, shape index: {}]
  %s4 = inlined_call_operand.vmem [shape: f32[1,128], index: 4, kind: input, shape index: {}]
  %s5 = inlined_call_operand.vmem [shape: f32[16,128], index: 5, kind: output, shape index: {}]
  %s6 = sld [smem:[#allocation0]]
  $region30: #{net_forward.5} parent=0
    _
  %s8 = ssub.s32 1, %s6
  %s9 = scalar_select 0, %s8, %s6
  // Predicated region
  $region2: #{net_forward.5} parent=0 // pred_check
    _
  $region3: #{net_forward.5} parent=0 // pred_check_branch
    %11 = sbr.rel (0) target = $region5
  $region4: #{net_forward.5} parent=0 // pred_region
    _
  $region5: #{net_forward.5} parent=0 // pred_fallthru
    _
  // Predicated region
  $region6: #{net_forward.5} parent=0 // pred_check
    _
  $region7: #{net_forward.5} parent=0 // pred_check_branch
    %13 = sbr.rel (0) target = $region9
  $region8: #{net_forward.5} parent=0 // pred_region
    _
  $region9: #{net_forward.5} parent=0 // pred_fallthru
    _
  // Predicated region
  $region10: #{net_forward.5} parent=0 // pred_check
    _
  $region11: #{net_forward.5} parent=0 // pred_check_branch
    %15 = sbr.rel (0) target = $region13
  $region12: #{net_forward.5} parent=0 // pred_region
    _
  $region13: #{net_forward.5} parent=0 // pred_fallthru
    _
  // Predicated region
  $region14: #{net_forward.5} parent=0 // pred_check
    _
  $region15: #{net_forward.5} parent=0 // pred_check_branch
    %17 = sbr.rel (0) target = $region17
  $region16: #{net_forward.5} parent=0 // pred_region
    _
  $region17: #{net_forward.5} parent=0 // pred_fallthru
    _
  // Predicated region
  $region18: #{net_forward.5} parent=0 // pred_check
    _
  $region19: #{net_forward.5} parent=0 // pred_check_branch
    %19 = sbr.rel (0) target = $region21
  $region20: #{net_forward.5} parent=0 // pred_region
    _
  $region21: #{net_forward.5} parent=0 // pred_fallthru
    _
  %v21 = vld [vmem:[%s0] sm:$0xff]
  %v22 = vld [vmem:[%s0 + $0x8] sm:$0xff]
  %v23 = vld [vmem:[%s0 + $0x10] sm:$0xff]
  %v24 = vld [vmem:[%s0 + $0x18] sm:$0xff]
  %v25 = vld [vmem:[%s0 + $0x20] sm:$0xff]
  %v26 = vld [vmem:[%s0 + $0x28] sm:$0xff]
  %v27 = vld [vmem:[%s0 + $0x30] sm:$0xff]
  %v28 = vld [vmem:[%s0 + $0x38] sm:$0xff]
  %v29 = vld [vmem:[%s1] sm:$0xff]
  %v30 = vld [vmem:[%s1 + $0x8] sm:$0xff]
  %v31 = vld [vmem:[%s1 + $0x10] sm:$0xff]
  %v32 = vld [vmem:[%s1 + $0x18] sm:$0xff]
  %v33 = vld [vmem:[%s1 + $0x20] sm:$0xff]
  %v34 = vld [vmem:[%s1 + $0x28] sm:$0xff]
  %v35 = vld [vmem:[%s1 + $0x30] sm:$0xff]
  %v36 = vld [vmem:[%s1 + $0x38] sm:$0xff]
  %v37 = vld [vmem:[%s1 + $0x40] sm:$0xff]
  %v38 = vld [vmem:[%s1 + $0x48] sm:$0xff]
  %v39 = vld [vmem:[%s1 + $0x50] sm:$0xff]
  %v40 = vld [vmem:[%s1 + $0x58] sm:$0xff]
  %v41 = vld [vmem:[%s1 + $0x60] sm:$0xff]
  %v42 = vld [vmem:[%s1 + $0x68] sm:$0xff]
  %v43 = vld [vmem:[%s1 + $0x70] sm:$0xff]
  %v44 = vld [vmem:[%s1 + $0x78] sm:$0xff]
  %v45 = vld [vmem:[%s1 + $0x80] sm:$0xff]
  %v46 = vld [vmem:[%s1 + $0x88] sm:$0xff]
  %v47 = vld [vmem:[%s1 + $0x90] sm:$0xff]
  %v48 = vld [vmem:[%s1 + $0x98] sm:$0xff]
  %v49 = vld [vmem:[%s1 + $0xa0] sm:$0xff]
  %v50 = vld [vmem:[%s1 + $0xa8] sm:$0xff]
  %v51 = vld [vmem:[%s1 + $0xb0] sm:$0xff]
  %v52 = vld [vmem:[%s1 + $0xb8] sm:$0xff]
  %v53 = vld [vmem:[%s1 + $0xc0] sm:$0xff]
  %v54 = vld [vmem:[%s1 + $0xc8] sm:$0xff]
  %v55 = vld [vmem:[%s1 + $0xd0] sm:$0xff]
  %v56 = vld [vmem:[%s1 + $0xd8] sm:$0xff]
  %v57 = vld [vmem:[%s1 + $0xe0] sm:$0xff]
  %v58 = vld [vmem:[%s1 + $0xe8] sm:$0xff]
  %v59 = vld [vmem:[%s1 + $0xf0] sm:$0xff]
  %v60 = vld [vmem:[%s1 + $0xf8] sm:$0xff]
  %v61 = vld [vmem:[%s1 + $0x100] sm:$0xff]
  %v62 = vld [vmem:[%s1 + $0x108] sm:$0xff]
  %v63 = vld [vmem:[%s1 + $0x110] sm:$0xff]
  %v64 = vld [vmem:[%s1 + $0x118] sm:$0xff]
  %v65 = vld [vmem:[%s1 + $0x120] sm:$0xff]
  %v66 = vld [vmem:[%s1 + $0x128] sm:$0xff]
  %v67 = vld [vmem:[%s1 + $0x130] sm:$0xff]
  %v68 = vld [vmem:[%s1 + $0x138] sm:$0xff]
  %v69 = vld [vmem:[%s1 + $0x140] sm:$0xff]
  %v70 = vld [vmem:[%s1 + $0x148] sm:$0xff]
  %v71 = vld [vmem:[%s1 + $0x150] sm:$0xff]
  %v72 = vld [vmem:[%s1 + $0x158] sm:$0xff]
  %v73 = vld [vmem:[%s1 + $0x160] sm:$0xff]
  %v74 = vld [vmem:[%s1 + $0x168] sm:$0xff]
  %v75 = vld [vmem:[%s1 + $0x170] sm:$0xff]
  %v76 = vld [vmem:[%s1 + $0x178] sm:$0xff]
  %v77 = vld [vmem:[%s1 + $0x180] sm:$0xff]
  %v78 = vld [vmem:[%s1 + $0x188] sm:$0xff]
  %v79 = vld [vmem:[%s1 + $0x190] sm:$0xff]
  %v80 = vld [vmem:[%s1 + $0x198] sm:$0xff]
  %v81 = vld [vmem:[%s1 + $0x1a0] sm:$0xff]
  %v82 = vld [vmem:[%s1 + $0x1a8] sm:$0xff]
  %v83 = vld [vmem:[%s1 + $0x1b0] sm:$0xff]
  %v84 = vld [vmem:[%s1 + $0x1b8] sm:$0xff]
  %v85 = vld [vmem:[%s1 + $0x1c0] sm:$0xff]
  %v86 = vld [vmem:[%s1 + $0x1c8] sm:$0xff]
  %v87 = vld [vmem:[%s1 + $0x1d0] sm:$0xff]
  %v88 = vld [vmem:[%s1 + $0x1d8] sm:$0xff]
  %v89 = vld [vmem:[%s1 + $0x1e0] sm:$0xff]
  %v90 = vld [vmem:[%s1 + $0x1e8] sm:$0xff]
  %v91 = vld [vmem:[%s1 + $0x1f0] sm:$0xff]
  %v92 = vld [vmem:[%s1 + $0x1f8] sm:$0xff]
  %v93 = vld [vmem:[%s1 + $0x200] sm:$0xff]
  %v94 = vld [vmem:[%s1 + $0x208] sm:$0xff]
  %v95 = vld [vmem:[%s1 + $0x210] sm:$0xff]
  %v96 = vld [vmem:[%s1 + $0x218] sm:$0xff]
  %v97 = vld [vmem:[%s1 + $0x220] sm:$0xff]
  %v98 = vld [vmem:[%s1 + $0x228] sm:$0xff]
  %v99 = vld [vmem:[%s1 + $0x230] sm:$0xff]
  %v100 = vld [vmem:[%s1 + $0x238] sm:$0xff]
  %v101 = vld [vmem:[%s1 + $0x240] sm:$0xff]
  %v102 = vld [vmem:[%s1 + $0x248] sm:$0xff]
  %v103 = vld [vmem:[%s1 + $0x250] sm:$0xff]
  %v104 = vld [vmem:[%s1 + $0x258] sm:$0xff]
  %v105 = vld [vmem:[%s1 + $0x260] sm:$0xff]
  %v106 = vld [vmem:[%s1 + $0x268] sm:$0xff]
  %v107 = vld [vmem:[%s1 + $0x270] sm:$0xff]
  %v108 = vld [vmem:[%s1 + $0x278] sm:$0xff]
  %v109 = vld [vmem:[%s1 + $0x280] sm:$0xff]
  %v110 = vld [vmem:[%s1 + $0x288] sm:$0xff]
  %v111 = vld [vmem:[%s1 + $0x290] sm:$0xff]
  %v112 = vld [vmem:[%s1 + $0x298] sm:$0xff]
  %v113 = vld [vmem:[%s1 + $0x2a0] sm:$0xff]
  %v114 = vld [vmem:[%s1 + $0x2a8] sm:$0xff]
  %v115 = vld [vmem:[%s1 + $0x2b0] sm:$0xff]
  %v116 = vld [vmem:[%s1 + $0x2b8] sm:$0xff]
  %v117 = vld [vmem:[%s1 + $0x2c0] sm:$0xff]
  %v118 = vld [vmem:[%s1 + $0x2c8] sm:$0xff]
  %v119 = vld [vmem:[%s1 + $0x2d0] sm:$0xff]
  %v120 = vld [vmem:[%s1 + $0x2d8] sm:$0xff]
  %v121 = vld [vmem:[%s1 + $0x2e0] sm:$0xff]
  %v122 = vld [vmem:[%s1 + $0x2e8] sm:$0xff]
  %v123 = vld [vmem:[%s1 + $0x2f0] sm:$0xff]
  %v124 = vld [vmem:[%s1 + $0x2f8] sm:$0xff]
  %v125 = vld [vmem:[%s1 + $0x300] sm:$0xff]
  %v126 = vld [vmem:[%s1 + $0x308] sm:$0xff]
  %v127 = vld [vmem:[%s1 + $0x310] sm:$0xff]
  %v128 = vld [vmem:[%s1 + $0x318] sm:$0xff]
  %v129 = vld [vmem:[%s1 + $0x320] sm:$0xff]
  %v130 = vld [vmem:[%s1 + $0x328] sm:$0xff]
  %v131 = vld [vmem:[%s1 + $0x330] sm:$0xff]
  %v132 = vld [vmem:[%s1 + $0x338] sm:$0xff]
  %v133 = vld [vmem:[%s1 + $0x340] sm:$0xff]
  %v134 = vld [vmem:[%s1 + $0x348] sm:$0xff]
  %v135 = vld [vmem:[%s1 + $0x350] sm:$0xff]
  %v136 = vld [vmem:[%s1 + $0x358] sm:$0xff]
  %v137 = vld [vmem:[%s1 + $0x360] sm:$0xff]
  %v138 = vld [vmem:[%s1 + $0x368] sm:$0xff]
  %v139 = vld [vmem:[%s1 + $0x370] sm:$0xff]
  %v140 = vld [vmem:[%s1 + $0x378] sm:$0xff]
  %v141 = vld [vmem:[%s1 + $0x380] sm:$0xff]
  %v142 = vld [vmem:[%s1 + $0x388] sm:$0xff]
  %v143 = vld [vmem:[%s1 + $0x390] sm:$0xff]
  %v144 = vld [vmem:[%s1 + $0x398] sm:$0xff]
  %v145 = vld [vmem:[%s1 + $0x3a0] sm:$0xff]
  %v146 = vld [vmem:[%s1 + $0x3a8] sm:$0xff]
  %v147 = vld [vmem:[%s1 + $0x3b0] sm:$0xff]
  %v148 = vld [vmem:[%s1 + $0x3b8] sm:$0xff]
  %v149 = vld [vmem:[%s1 + $0x3c0] sm:$0xff]
  %v150 = vld [vmem:[%s1 + $0x3c8] sm:$0xff]
  %v151 = vld [vmem:[%s1 + $0x3d0] sm:$0xff]
  %v152 = vld [vmem:[%s1 + $0x3d8] sm:$0xff]
  %v153 = vld [vmem:[%s1 + $0x3e0] sm:$0xff]
  %v154 = vld [vmem:[%s1 + $0x3e8] sm:$0xff]
  %v155 = vld [vmem:[%s1 + $0x3f0] sm:$0xff]
  %v156 = vld [vmem:[%s1 + $0x3f8] sm:$0xff]
  %v157 = vld [vmem:[%s1 + $0x400] sm:$0xff]
  %v158 = vld [vmem:[%s1 + $0x408] sm:$0xff]
  %v159 = vld [vmem:[%s1 + $0x410] sm:$0xff]
  %v160 = vld [vmem:[%s1 + $0x418] sm:$0xff]
  %v161 = vld [vmem:[%s1 + $0x420] sm:$0xff]
  %v162 = vld [vmem:[%s1 + $0x428] sm:$0xff]
  %v163 = vld [vmem:[%s1 + $0x430] sm:$0xff]
  %v164 = vld [vmem:[%s1 + $0x438] sm:$0xff]
  %v165 = vld [vmem:[%s1 + $0x440] sm:$0xff]
  %v166 = vld [vmem:[%s1 + $0x448] sm:$0xff]
  %v167 = vld [vmem:[%s1 + $0x450] sm:$0xff]
  %v168 = vld [vmem:[%s1 + $0x458] sm:$0xff]
  %v169 = vld [vmem:[%s1 + $0x460] sm:$0xff]
  %v170 = vld [vmem:[%s1 + $0x468] sm:$0xff]
  %v171 = vld [vmem:[%s1 + $0x470] sm:$0xff]
  %v172 = vld [vmem:[%s1 + $0x478] sm:$0xff]
  %v173 = vld [vmem:[%s1 + $0x480] sm:$0xff]
  %v174 = vld [vmem:[%s1 + $0x488] sm:$0xff]
  %v175 = vld [vmem:[%s1 + $0x490] sm:$0xff]
  %v176 = vld [vmem:[%s1 + $0x498] sm:$0xff]
  %v177 = vld [vmem:[%s1 + $0x4a0] sm:$0xff]
  %v178 = vld [vmem:[%s1 + $0x4a8] sm:$0xff]
  %v179 = vld [vmem:[%s1 + $0x4b0] sm:$0xff]
  %v180 = vld [vmem:[%s1 + $0x4b8] sm:$0xff]
  %v181 = vld [vmem:[%s1 + $0x4c0] sm:$0xff]
  %v182 = vld [vmem:[%s1 + $0x4c8] sm:$0xff]
  %v183 = vld [vmem:[%s1 + $0x4d0] sm:$0xff]
  %v184 = vld [vmem:[%s1 + $0x4d8] sm:$0xff]
  %v185 = vld [vmem:[%s1 + $0x4e0] sm:$0xff]
  %v186 = vld [vmem:[%s1 + $0x4e8] sm:$0xff]
  %v187 = vld [vmem:[%s1 + $0x4f0] sm:$0xff]
  %v188 = vld [vmem:[%s1 + $0x4f8] sm:$0xff]
  %v189 = vld [vmem:[%s1 + $0x500] sm:$0xff]
  %v190 = vld [vmem:[%s1 + $0x508] sm:$0xff]
  %v191 = vld [vmem:[%s1 + $0x510] sm:$0xff]
  %v192 = vld [vmem:[%s1 + $0x518] sm:$0xff]
  %v193 = vld [vmem:[%s1 + $0x520] sm:$0xff]
  %v194 = vld [vmem:[%s1 + $0x528] sm:$0xff]
  %v195 = vld [vmem:[%s1 + $0x530] sm:$0xff]
  %v196 = vld [vmem:[%s1 + $0x538] sm:$0xff]
  %v197 = vld [vmem:[%s1 + $0x540] sm:$0xff]
  %v198 = vld [vmem:[%s1 + $0x548] sm:$0xff]
  %v199 = vld [vmem:[%s1 + $0x550] sm:$0xff]
  %v200 = vld [vmem:[%s1 + $0x558] sm:$0xff]
  %v201 = vld [vmem:[%s1 + $0x560] sm:$0xff]
  %v202 = vld [vmem:[%s1 + $0x568] sm:$0xff]
  %v203 = vld [vmem:[%s1 + $0x570] sm:$0xff]
  %v204 = vld [vmem:[%s1 + $0x578] sm:$0xff]
  %v205 = vld [vmem:[%s1 + $0x580] sm:$0xff]
  %v206 = vld [vmem:[%s1 + $0x588] sm:$0xff]
  %v207 = vld [vmem:[%s1 + $0x590] sm:$0xff]
  %v208 = vld [vmem:[%s1 + $0x598] sm:$0xff]
  %v209 = vld [vmem:[%s1 + $0x5a0] sm:$0xff]
  %v210 = vld [vmem:[%s1 + $0x5a8] sm:$0xff]
  %v211 = vld [vmem:[%s1 + $0x5b0] sm:$0xff]
  %v212 = vld [vmem:[%s1 + $0x5b8] sm:$0xff]
  %v213 = vld [vmem:[%s1 + $0x5c0] sm:$0xff]
  %v214 = vld [vmem:[%s1 + $0x5c8] sm:$0xff]
  %v215 = vld [vmem:[%s1 + $0x5d0] sm:$0xff]
  %v216 = vld [vmem:[%s1 + $0x5d8] sm:$0xff]
  %v217 = vld [vmem:[%s1 + $0x5e0] sm:$0xff]
  %v218 = vld [vmem:[%s1 + $0x5e8] sm:$0xff]
  %v219 = vld [vmem:[%s1 + $0x5f0] sm:$0xff]
  %v220 = vld [vmem:[%s1 + $0x5f8] sm:$0xff]
  %v221 = vld [vmem:[%s1 + $0x600] sm:$0xff]
  %v222 = vld [vmem:[%s1 + $0x608] sm:$0xff]
  %v223 = vld [vmem:[%s1 + $0x610] sm:$0xff]
  %v224 = vld [vmem:[%s1 + $0x618] sm:$0xff]
  %v225 = vld [vmem:[%s1 + $0x620] sm:$0xff]
  %v226 = vld [vmem:[%s1 + $0x628] sm:$0xff]
  %v227 = vld [vmem:[%s1 + $0x630] sm:$0xff]
  %v228 = vld [vmem:[%s1 + $0x638] sm:$0xff]
  %v229 = vld [vmem:[%s1 + $0x640] sm:$0xff]
  %v230 = vld [vmem:[%s1 + $0x648] sm:$0xff]
  %v231 = vld [vmem:[%s1 + $0x650] sm:$0xff]
  %v232 = vld [vmem:[%s1 + $0x658] sm:$0xff]
  %v233 = vld [vmem:[%s1 + $0x660] sm:$0xff]
  %v234 = vld [vmem:[%s1 + $0x668] sm:$0xff]
  %v235 = vld [vmem:[%s1 + $0x670] sm:$0xff]
  %v236 = vld [vmem:[%s1 + $0x678] sm:$0xff]
  %v237 = vld [vmem:[%s1 + $0x680] sm:$0xff]
  %v238 = vld [vmem:[%s1 + $0x688] sm:$0xff]
  %v239 = vld [vmem:[%s1 + $0x690] sm:$0xff]
  %v240 = vld [vmem:[%s1 + $0x698] sm:$0xff]
  %v241 = vld [vmem:[%s1 + $0x6a0] sm:$0xff]
  %v242 = vld [vmem:[%s1 + $0x6a8] sm:$0xff]
  %v243 = vld [vmem:[%s1 + $0x6b0] sm:$0xff]
  %v244 = vld [vmem:[%s1 + $0x6b8] sm:$0xff]
  %v245 = vld [vmem:[%s1 + $0x6c0] sm:$0xff]
  %v246 = vld [vmem:[%s1 + $0x6c8] sm:$0xff]
  %v247 = vld [vmem:[%s1 + $0x6d0] sm:$0xff]
  %v248 = vld [vmem:[%s1 + $0x6d8] sm:$0xff]
  %v249 = vld [vmem:[%s1 + $0x6e0] sm:$0xff]
  %v250 = vld [vmem:[%s1 + $0x6e8] sm:$0xff]
  %v251 = vld [vmem:[%s1 + $0x6f0] sm:$0xff]
  %v252 = vld [vmem:[%s1 + $0x6f8] sm:$0xff]
  %v253 = vld [vmem:[%s1 + $0x700] sm:$0xff]
  %v254 = vld [vmem:[%s1 + $0x708] sm:$0xff]
  %v255 = vld [vmem:[%s1 + $0x710] sm:$0xff]
  %v256 = vld [vmem:[%s1 + $0x718] sm:$0xff]
  %v257 = vld [vmem:[%s1 + $0x720] sm:$0xff]
  %v258 = vld [vmem:[%s1 + $0x728] sm:$0xff]
  %v259 = vld [vmem:[%s1 + $0x730] sm:$0xff]
  %v260 = vld [vmem:[%s1 + $0x738] sm:$0xff]
  %v261 = vld [vmem:[%s1 + $0x740] sm:$0xff]
  %v262 = vld [vmem:[%s1 + $0x748] sm:$0xff]
  %v263 = vld [vmem:[%s1 + $0x750] sm:$0xff]
  %v264 = vld [vmem:[%s1 + $0x758] sm:$0xff]
  %v265 = vld [vmem:[%s1 + $0x760] sm:$0xff]
  %v266 = vld [vmem:[%s1 + $0x768] sm:$0xff]
  %v267 = vld [vmem:[%s1 + $0x770] sm:$0xff]
  %v268 = vld [vmem:[%s1 + $0x778] sm:$0xff]
  %v269 = vld [vmem:[%s1 + $0x780] sm:$0xff]
  %v270 = vld [vmem:[%s1 + $0x788] sm:$0xff]
  %v271 = vld [vmem:[%s1 + $0x790] sm:$0xff]
  %v272 = vld [vmem:[%s1 + $0x798] sm:$0xff]
  %v273 = vld [vmem:[%s1 + $0x7a0] sm:$0x33]
  %v274 = vld [vmem:[%s1 + $0x7a8] sm:$0x33]
  %v275 = vld [vmem:[%s2] sm:$0xf]
  %v277 = vperm.slane %v275, 0
  %v278 = vperm.slane %v275, 1
  %v279 = vperm.slane %v275, 2
  %v280 = vperm.slane %v275, 3
  %v293 = vunpack.c.l.b16 %v21
  %v294 = vunpack.c.h.b16 %v21
  %v295 = vunpack.c.l.b16 %v22
  %v296 = vunpack.c.h.b16 %v22
  %v297 = vunpack.c.l.b16 %v23
  %v298 = vunpack.c.h.b16 %v23
  %v299 = vunpack.c.l.b16 %v24
  %v300 = vunpack.c.h.b16 %v24
  %v301 = vunpack.c.l.b16 %v25
  %v302 = vunpack.c.h.b16 %v25
  %v303 = vunpack.c.l.b16 %v26
  %v304 = vunpack.c.h.b16 %v26
  %v305 = vunpack.c.l.b16 %v27
  %v306 = vunpack.c.h.b16 %v27
  %v307 = vunpack.c.l.b16 %v28
  %v308 = vunpack.c.h.b16 %v28
  %v309 = vpack.c.b16 %v301, %v293
  %v310 = vpack.c.b16 %v302, %v294
  %v311 = vpack.c.b16 %v303, %v295
  %v312 = vpack.c.b16 %v304, %v296
  %v313 = vpack.c.b16 %v305, %v297
  %v314 = vpack.c.b16 %v306, %v298
  %v315 = vpack.c.b16 %v307, %v299
  %v316 = vpack.c.b16 %v308, %v300
  %v570 = vunpack.c.l.b16 %v29
  %v571 = vunpack.c.h.b16 %v29
  %v572 = vunpack.c.l.b16 %v30
  %v573 = vunpack.c.h.b16 %v30
  %v574 = vunpack.c.l.b16 %v31
  %v575 = vunpack.c.h.b16 %v31
  %v576 = vunpack.c.l.b16 %v32
  %v577 = vunpack.c.h.b16 %v32
  %v578 = vunpack.c.l.b16 %v33
  %v579 = vunpack.c.h.b16 %v33
  %v580 = vunpack.c.l.b16 %v34
  %v581 = vunpack.c.h.b16 %v34
  %v582 = vunpack.c.l.b16 %v35
  %v583 = vunpack.c.h.b16 %v35
  %v584 = vunpack.c.l.b16 %v36
  %v585 = vunpack.c.h.b16 %v36
  %v586 = vunpack.c.l.b16 %v37
  %v587 = vunpack.c.h.b16 %v37
  %v588 = vunpack.c.l.b16 %v38
  %v589 = vunpack.c.h.b16 %v38
  %v590 = vunpack.c.l.b16 %v39
  %v591 = vunpack.c.h.b16 %v39
  %v592 = vunpack.c.l.b16 %v40
  %v593 = vunpack.c.h.b16 %v40
  %v594 = vunpack.c.l.b16 %v41
  %v595 = vunpack.c.h.b16 %v41
  %v596 = vunpack.c.l.b16 %v42
  %v597 = vunpack.c.h.b16 %v42
  %v598 = vunpack.c.l.b16 %v43
  %v599 = vunpack.c.h.b16 %v43
  %v600 = vunpack.c.l.b16 %v44
  %v601 = vunpack.c.h.b16 %v44
  %v602 = vunpack.c.l.b16 %v45
  %v603 = vunpack.c.h.b16 %v45
  %v604 = vunpack.c.l.b16 %v46
  %v605 = vunpack.c.h.b16 %v46
  %v606 = vunpack.c.l.b16 %v47
  %v607 = vunpack.c.h.b16 %v47
  %v608 = vunpack.c.l.b16 %v48
  %v609 = vunpack.c.h.b16 %v48
  %v610 = vunpack.c.l.b16 %v49
  %v611 = vunpack.c.h.b16 %v49
  %v612 = vunpack.c.l.b16 %v50
  %v613 = vunpack.c.h.b16 %v50
  %v614 = vunpack.c.l.b16 %v51
  %v615 = vunpack.c.h.b16 %v51
  %v616 = vunpack.c.l.b16 %v52
  %v617 = vunpack.c.h.b16 %v52
  %v618 = vunpack.c.l.b16 %v53
  %v619 = vunpack.c.h.b16 %v53
  %v620 = vunpack.c.l.b16 %v54
  %v621 = vunpack.c.h.b16 %v54
  %v622 = vunpack.c.l.b16 %v55
  %v623 = vunpack.c.h.b16 %v55
  %v624 = vunpack.c.l.b16 %v56
  %v625 = vunpack.c.h.b16 %v56
  %v626 = vunpack.c.l.b16 %v57
  %v627 = vunpack.c.h.b16 %v57
  %v628 = vunpack.c.l.b16 %v58
  %v629 = vunpack.c.h.b16 %v58
  %v630 = vunpack.c.l.b16 %v59
  %v631 = vunpack.c.h.b16 %v59
  %v632 = vunpack.c.l.b16 %v60
  %v633 = vunpack.c.h.b16 %v60
  %v634 = vunpack.c.l.b16 %v61
  %v635 = vunpack.c.h.b16 %v61
  %v636 = vunpack.c.l.b16 %v62
  %v637 = vunpack.c.h.b16 %v62
  %v638 = vunpack.c.l.b16 %v63
  %v639 = vunpack.c.h.b16 %v63
  %v640 = vunpack.c.l.b16 %v64
  %v641 = vunpack.c.h.b16 %v64
  %v642 = vunpack.c.l.b16 %v65
  %v643 = vunpack.c.h.b16 %v65
  %v644 = vunpack.c.l.b16 %v66
  %v645 = vunpack.c.h.b16 %v66
  %v646 = vunpack.c.l.b16 %v67
  %v647 = vunpack.c.h.b16 %v67
  %v648 = vunpack.c.l.b16 %v68
  %v649 = vunpack.c.h.b16 %v68
  %v650 = vunpack.c.l.b16 %v69
  %v651 = vunpack.c.h.b16 %v69
  %v652 = vunpack.c.l.b16 %v70
  %v653 = vunpack.c.h.b16 %v70
  %v654 = vunpack.c.l.b16 %v71
  %v655 = vunpack.c.h.b16 %v71
  %v656 = vunpack.c.l.b16 %v72
  %v657 = vunpack.c.h.b16 %v72
  %v658 = vunpack.c.l.b16 %v73
  %v659 = vunpack.c.h.b16 %v73
  %v660 = vunpack.c.l.b16 %v74
  %v661 = vunpack.c.h.b16 %v74
  %v662 = vunpack.c.l.b16 %v75
  %v663 = vunpack.c.h.b16 %v75
  %v664 = vunpack.c.l.b16 %v76
  %v665 = vunpack.c.h.b16 %v76
  %v666 = vunpack.c.l.b16 %v77
  %v667 = vunpack.c.h.b16 %v77
  %v668 = vunpack.c.l.b16 %v78
  %v669 = vunpack.c.h.b16 %v78
  %v670 = vunpack.c.l.b16 %v79
  %v671 = vunpack.c.h.b16 %v79
  %v672 = vunpack.c.l.b16 %v80
  %v673 = vunpack.c.h.b16 %v80
  %v674 = vunpack.c.l.b16 %v81
  %v675 = vunpack.c.h.b16 %v81
  %v676 = vunpack.c.l.b16 %v82
  %v677 = vunpack.c.h.b16 %v82
  %v678 = vunpack.c.l.b16 %v83
  %v679 = vunpack.c.h.b16 %v83
  %v680 = vunpack.c.l.b16 %v84
  %v681 = vunpack.c.h.b16 %v84
  %v682 = vunpack.c.l.b16 %v85
  %v683 = vunpack.c.h.b16 %v85
  %v684 = vunpack.c.l.b16 %v86
  %v685 = vunpack.c.h.b16 %v86
  %v686 = vunpack.c.l.b16 %v87
  %v687 = vunpack.c.h.b16 %v87
  %v688 = vunpack.c.l.b16 %v88
  %v689 = vunpack.c.h.b16 %v88
  %v690 = vunpack.c.l.b16 %v89
  %v691 = vunpack.c.h.b16 %v89
  %v692 = vunpack.c.l.b16 %v90
  %v693 = vunpack.c.h.b16 %v90
  %v694 = vunpack.c.l.b16 %v91
  %v695 = vunpack.c.h.b16 %v91
  %v696 = vunpack.c.l.b16 %v92
  %v697 = vunpack.c.h.b16 %v92
  %v698 = vunpack.c.l.b16 %v93
  %v699 = vunpack.c.h.b16 %v93
  %v700 = vunpack.c.l.b16 %v94
  %v701 = vunpack.c.h.b16 %v94
  %v702 = vunpack.c.l.b16 %v95
  %v703 = vunpack.c.h.b16 %v95
  %v704 = vunpack.c.l.b16 %v96
  %v705 = vunpack.c.h.b16 %v96
  %v706 = vunpack.c.l.b16 %v97
  %v707 = vunpack.c.h.b16 %v97
  %v708 = vunpack.c.l.b16 %v98
  %v709 = vunpack.c.h.b16 %v98
  %v710 = vunpack.c.l.b16 %v99
  %v711 = vunpack.c.h.b16 %v99
  %v712 = vunpack.c.l.b16 %v100
  %v713 = vunpack.c.h.b16 %v100
  %v714 = vunpack.c.l.b16 %v101
  %v715 = vunpack.c.h.b16 %v101
  %v716 = vunpack.c.l.b16 %v102
  %v717 = vunpack.c.h.b16 %v102
  %v718 = vunpack.c.l.b16 %v103
  %v719 = vunpack.c.h.b16 %v103
  %v720 = vunpack.c.l.b16 %v104
  %v721 = vunpack.c.h.b16 %v104
  %v722 = vunpack.c.l.b16 %v105
  %v723 = vunpack.c.h.b16 %v105
  %v724 = vunpack.c.l.b16 %v106
  %v725 = vunpack.c.h.b16 %v106
  %v726 = vunpack.c.l.b16 %v107
  %v727 = vunpack.c.h.b16 %v107
  %v728 = vunpack.c.l.b16 %v108
  %v729 = vunpack.c.h.b16 %v108
  %v730 = vunpack.c.l.b16 %v109
  %v731 = vunpack.c.h.b16 %v109
  %v732 = vunpack.c.l.b16 %v110
  %v733 = vunpack.c.h.b16 %v110
  %v734 = vunpack.c.l.b16 %v111
  %v735 = vunpack.c.h.b16 %v111
  %v736 = vunpack.c.l.b16 %v112
  %v737 = vunpack.c.h.b16 %v112
  %v738 = vunpack.c.l.b16 %v113
  %v739 = vunpack.c.h.b16 %v113
  %v740 = vunpack.c.l.b16 %v114
  %v741 = vunpack.c.h.b16 %v114
  %v742 = vunpack.c.l.b16 %v115
  %v743 = vunpack.c.h.b16 %v115
  %v744 = vunpack.c.l.b16 %v116
  %v745 = vunpack.c.h.b16 %v116
  %v746 = vunpack.c.l.b16 %v117
  %v747 = vunpack.c.h.b16 %v117
  %v748 = vunpack.c.l.b16 %v118
  %v749 = vunpack.c.h.b16 %v118
  %v750 = vunpack.c.l.b16 %v119
  %v751 = vunpack.c.h.b16 %v119
  %v752 = vunpack.c.l.b16 %v120
  %v753 = vunpack.c.h.b16 %v120
  %v754 = vunpack.c.l.b16 %v121
  %v755 = vunpack.c.h.b16 %v121
  %v756 = vunpack.c.l.b16 %v122
  %v757 = vunpack.c.h.b16 %v122
  %v758 = vunpack.c.l.b16 %v123
  %v759 = vunpack.c.h.b16 %v123
  %v760 = vunpack.c.l.b16 %v124
  %v761 = vunpack.c.h.b16 %v124
  %v762 = vunpack.c.l.b16 %v125
  %v763 = vunpack.c.h.b16 %v125
  %v764 = vunpack.c.l.b16 %v126
  %v765 = vunpack.c.h.b16 %v126
  %v766 = vunpack.c.l.b16 %v127
  %v767 = vunpack.c.h.b16 %v127
  %v768 = vunpack.c.l.b16 %v128
  %v769 = vunpack.c.h.b16 %v128
  %v770 = vunpack.c.l.b16 %v129
  %v771 = vunpack.c.h.b16 %v129
  %v772 = vunpack.c.l.b16 %v130
  %v773 = vunpack.c.h.b16 %v130
  %v774 = vunpack.c.l.b16 %v131
  %v775 = vunpack.c.h.b16 %v131
  %v776 = vunpack.c.l.b16 %v132
  %v777 = vunpack.c.h.b16 %v132
  %v778 = vunpack.c.l.b16 %v133
  %v779 = vunpack.c.h.b16 %v133
  %v780 = vunpack.c.l.b16 %v134
  %v781 = vunpack.c.h.b16 %v134
  %v782 = vunpack.c.l.b16 %v135
  %v783 = vunpack.c.h.b16 %v135
  %v784 = vunpack.c.l.b16 %v136
  %v785 = vunpack.c.h.b16 %v136
  %v786 = vunpack.c.l.b16 %v137
  %v787 = vunpack.c.h.b16 %v137
  %v788 = vunpack.c.l.b16 %v138
  %v789 = vunpack.c.h.b16 %v138
  %v790 = vunpack.c.l.b16 %v139
  %v791 = vunpack.c.h.b16 %v139
  %v792 = vunpack.c.l.b16 %v140
  %v793 = vunpack.c.h.b16 %v140
  %v794 = vunpack.c.l.b16 %v141
  %v795 = vunpack.c.h.b16 %v141
  %v796 = vunpack.c.l.b16 %v142
  %v797 = vunpack.c.h.b16 %v142
  %v798 = vunpack.c.l.b16 %v143
  %v799 = vunpack.c.h.b16 %v143
  %v800 = vunpack.c.l.b16 %v144
  %v801 = vunpack.c.h.b16 %v144
  %v802 = vunpack.c.l.b16 %v145
  %v803 = vunpack.c.h.b16 %v145
  %v804 = vunpack.c.l.b16 %v146
  %v805 = vunpack.c.h.b16 %v146
  %v806 = vunpack.c.l.b16 %v147
  %v807 = vunpack.c.h.b16 %v147
  %v808 = vunpack.c.l.b16 %v148
  %v809 = vunpack.c.h.b16 %v148
  %v810 = vunpack.c.l.b16 %v149
  %v811 = vunpack.c.h.b16 %v149
  %v812 = vunpack.c.l.b16 %v150
  %v813 = vunpack.c.h.b16 %v150
  %v814 = vunpack.c.l.b16 %v151
  %v815 = vunpack.c.h.b16 %v151
  %v816 = vunpack.c.l.b16 %v152
  %v817 = vunpack.c.h.b16 %v152
  %v818 = vunpack.c.l.b16 %v153
  %v819 = vunpack.c.h.b16 %v153
  %v820 = vunpack.c.l.b16 %v154
  %v821 = vunpack.c.h.b16 %v154
  %v822 = vunpack.c.l.b16 %v155
  %v823 = vunpack.c.h.b16 %v155
  %v824 = vunpack.c.l.b16 %v156
  %v825 = vunpack.c.h.b16 %v156
  %v826 = vunpack.c.l.b16 %v157
  %v827 = vunpack.c.h.b16 %v157
  %v828 = vunpack.c.l.b16 %v158
  %v829 = vunpack.c.h.b16 %v158
  %v830 = vunpack.c.l.b16 %v159
  %v831 = vunpack.c.h.b16 %v159
  %v832 = vunpack.c.l.b16 %v160
  %v833 = vunpack.c.h.b16 %v160
  %v834 = vunpack.c.l.b16 %v161
  %v835 = vunpack.c.h.b16 %v161
  %v836 = vunpack.c.l.b16 %v162
  %v837 = vunpack.c.h.b16 %v162
  %v838 = vunpack.c.l.b16 %v163
  %v839 = vunpack.c.h.b16 %v163
  %v840 = vunpack.c.l.b16 %v164
  %v841 = vunpack.c.h.b16 %v164
  %v842 = vunpack.c.l.b16 %v165
  %v843 = vunpack.c.h.b16 %v165
  %v844 = vunpack.c.l.b16 %v166
  %v845 = vunpack.c.h.b16 %v166
  %v846 = vunpack.c.l.b16 %v167
  %v847 = vunpack.c.h.b16 %v167
  %v848 = vunpack.c.l.b16 %v168
  %v849 = vunpack.c.h.b16 %v168
  %v850 = vunpack.c.l.b16 %v169
  %v851 = vunpack.c.h.b16 %v169
  %v852 = vunpack.c.l.b16 %v170
  %v853 = vunpack.c.h.b16 %v170
  %v854 = vunpack.c.l.b16 %v171
  %v855 = vunpack.c.h.b16 %v171
  %v856 = vunpack.c.l.b16 %v172
  %v857 = vunpack.c.h.b16 %v172
  %v858 = vunpack.c.l.b16 %v173
  %v859 = vunpack.c.h.b16 %v173
  %v860 = vunpack.c.l.b16 %v174
  %v861 = vunpack.c.h.b16 %v174
  %v862 = vunpack.c.l.b16 %v175
  %v863 = vunpack.c.h.b16 %v175
  %v864 = vunpack.c.l.b16 %v176
  %v865 = vunpack.c.h.b16 %v176
  %v866 = vunpack.c.l.b16 %v177
  %v867 = vunpack.c.h.b16 %v177
  %v868 = vunpack.c.l.b16 %v178
  %v869 = vunpack.c.h.b16 %v178
  %v870 = vunpack.c.l.b16 %v179
  %v871 = vunpack.c.h.b16 %v179
  %v872 = vunpack.c.l.b16 %v180
  %v873 = vunpack.c.h.b16 %v180
  %v874 = vunpack.c.l.b16 %v181
  %v875 = vunpack.c.h.b16 %v181
  %v876 = vunpack.c.l.b16 %v182
  %v877 = vunpack.c.h.b16 %v182
  %v878 = vunpack.c.l.b16 %v183
  %v879 = vunpack.c.h.b16 %v183
  %v880 = vunpack.c.l.b16 %v184
  %v881 = vunpack.c.h.b16 %v184
  %v882 = vunpack.c.l.b16 %v185
  %v883 = vunpack.c.h.b16 %v185
  %v884 = vunpack.c.l.b16 %v186
  %v885 = vunpack.c.h.b16 %v186
  %v886 = vunpack.c.l.b16 %v187
  %v887 = vunpack.c.h.b16 %v187
  %v888 = vunpack.c.l.b16 %v188
  %v889 = vunpack.c.h.b16 %v188
  %v890 = vunpack.c.l.b16 %v189
  %v891 = vunpack.c.h.b16 %v189
  %v892 = vunpack.c.l.b16 %v190
  %v893 = vunpack.c.h.b16 %v190
  %v894 = vunpack.c.l.b16 %v191
  %v895 = vunpack.c.h.b16 %v191
  %v896 = vunpack.c.l.b16 %v192
  %v897 = vunpack.c.h.b16 %v192
  %v898 = vunpack.c.l.b16 %v193
  %v899 = vunpack.c.h.b16 %v193
  %v900 = vunpack.c.l.b16 %v194
  %v901 = vunpack.c.h.b16 %v194
  %v902 = vunpack.c.l.b16 %v195
  %v903 = vunpack.c.h.b16 %v195
  %v904 = vunpack.c.l.b16 %v196
  %v905 = vunpack.c.h.b16 %v196
  %v906 = vunpack.c.l.b16 %v197
  %v907 = vunpack.c.h.b16 %v197
  %v908 = vunpack.c.l.b16 %v198
  %v909 = vunpack.c.h.b16 %v198
  %v910 = vunpack.c.l.b16 %v199
  %v911 = vunpack.c.h.b16 %v199
  %v912 = vunpack.c.l.b16 %v200
  %v913 = vunpack.c.h.b16 %v200
  %v914 = vunpack.c.l.b16 %v201
  %v915 = vunpack.c.h.b16 %v201
  %v916 = vunpack.c.l.b16 %v202
  %v917 = vunpack.c.h.b16 %v202
  %v918 = vunpack.c.l.b16 %v203
  %v919 = vunpack.c.h.b16 %v203
  %v920 = vunpack.c.l.b16 %v204
  %v921 = vunpack.c.h.b16 %v204
  %v922 = vunpack.c.l.b16 %v205
  %v923 = vunpack.c.h.b16 %v205
  %v924 = vunpack.c.l.b16 %v206
  %v925 = vunpack.c.h.b16 %v206
  %v926 = vunpack.c.l.b16 %v207
  %v927 = vunpack.c.h.b16 %v207
  %v928 = vunpack.c.l.b16 %v208
  %v929 = vunpack.c.h.b16 %v208
  %v930 = vunpack.c.l.b16 %v209
  %v931 = vunpack.c.h.b16 %v209
  %v932 = vunpack.c.l.b16 %v210
  %v933 = vunpack.c.h.b16 %v210
  %v934 = vunpack.c.l.b16 %v211
  %v935 = vunpack.c.h.b16 %v211
  %v936 = vunpack.c.l.b16 %v212
  %v937 = vunpack.c.h.b16 %v212
  %v938 = vunpack.c.l.b16 %v213
  %v939 = vunpack.c.h.b16 %v213
  %v940 = vunpack.c.l.b16 %v214
  %v941 = vunpack.c.h.b16 %v214
  %v942 = vunpack.c.l.b16 %v215
  %v943 = vunpack.c.h.b16 %v215
  %v944 = vunpack.c.l.b16 %v216
  %v945 = vunpack.c.h.b16 %v216
  %v946 = vunpack.c.l.b16 %v217
  %v947 = vunpack.c.h.b16 %v217
  %v948 = vunpack.c.l.b16 %v218
  %v949 = vunpack.c.h.b16 %v218
  %v950 = vunpack.c.l.b16 %v219
  %v951 = vunpack.c.h.b16 %v219
  %v952 = vunpack.c.l.b16 %v220
  %v953 = vunpack.c.h.b16 %v220
  %v954 = vunpack.c.l.b16 %v221
  %v955 = vunpack.c.h.b16 %v221
  %v956 = vunpack.c.l.b16 %v222
  %v957 = vunpack.c.h.b16 %v222
  %v958 = vunpack.c.l.b16 %v223
  %v959 = vunpack.c.h.b16 %v223
  %v960 = vunpack.c.l.b16 %v224
  %v961 = vunpack.c.h.b16 %v224
  %v962 = vunpack.c.l.b16 %v225
  %v963 = vunpack.c.h.b16 %v225
  %v964 = vunpack.c.l.b16 %v226
  %v965 = vunpack.c.h.b16 %v226
  %v966 = vunpack.c.l.b16 %v227
  %v967 = vunpack.c.h.b16 %v227
  %v968 = vunpack.c.l.b16 %v228
  %v969 = vunpack.c.h.b16 %v228
  %v970 = vunpack.c.l.b16 %v229
  %v971 = vunpack.c.h.b16 %v229
  %v972 = vunpack.c.l.b16 %v230
  %v973 = vunpack.c.h.b16 %v230
  %v974 = vunpack.c.l.b16 %v231
  %v975 = vunpack.c.h.b16 %v231
  %v976 = vunpack.c.l.b16 %v232
  %v977 = vunpack.c.h.b16 %v232
  %v978 = vunpack.c.l.b16 %v233
  %v979 = vunpack.c.h.b16 %v233
  %v980 = vunpack.c.l.b16 %v234
  %v981 = vunpack.c.h.b16 %v234
  %v982 = vunpack.c.l.b16 %v235
  %v983 = vunpack.c.h.b16 %v235
  %v984 = vunpack.c.l.b16 %v236
  %v985 = vunpack.c.h.b16 %v236
  %v986 = vunpack.c.l.b16 %v237
  %v987 = vunpack.c.h.b16 %v237
  %v988 = vunpack.c.l.b16 %v238
  %v989 = vunpack.c.h.b16 %v238
  %v990 = vunpack.c.l.b16 %v239
  %v991 = vunpack.c.h.b16 %v239
  %v992 = vunpack.c.l.b16 %v240
  %v993 = vunpack.c.h.b16 %v240
  %v994 = vunpack.c.l.b16 %v241
  %v995 = vunpack.c.h.b16 %v241
  %v996 = vunpack.c.l.b16 %v242
  %v997 = vunpack.c.h.b16 %v242
  %v998 = vunpack.c.l.b16 %v243
  %v999 = vunpack.c.h.b16 %v243
  %v1000 = vunpack.c.l.b16 %v244
  %v1001 = vunpack.c.h.b16 %v244
  %v1002 = vunpack.c.l.b16 %v245
  %v1003 = vunpack.c.h.b16 %v245
  %v1004 = vunpack.c.l.b16 %v246
  %v1005 = vunpack.c.h.b16 %v246
  %v1006 = vunpack.c.l.b16 %v247
  %v1007 = vunpack.c.h.b16 %v247
  %v1008 = vunpack.c.l.b16 %v248
  %v1009 = vunpack.c.h.b16 %v248
  %v1010 = vunpack.c.l.b16 %v249
  %v1011 = vunpack.c.h.b16 %v249
  %v1012 = vunpack.c.l.b16 %v250
  %v1013 = vunpack.c.h.b16 %v250
  %v1014 = vunpack.c.l.b16 %v251
  %v1015 = vunpack.c.h.b16 %v251
  %v1016 = vunpack.c.l.b16 %v252
  %v1017 = vunpack.c.h.b16 %v252
  %v1018 = vunpack.c.l.b16 %v253
  %v1019 = vunpack.c.h.b16 %v253
  %v1020 = vunpack.c.l.b16 %v254
  %v1021 = vunpack.c.h.b16 %v254
  %v1022 = vunpack.c.l.b16 %v255
  %v1023 = vunpack.c.h.b16 %v255
  %v1024 = vunpack.c.l.b16 %v256
  %v1025 = vunpack.c.h.b16 %v256
  %v1026 = vunpack.c.l.b16 %v257
  %v1027 = vunpack.c.h.b16 %v257
  %v1028 = vunpack.c.l.b16 %v258
  %v1029 = vunpack.c.h.b16 %v258
  %v1030 = vunpack.c.l.b16 %v259
  %v1031 = vunpack.c.h.b16 %v259
  %v1032 = vunpack.c.l.b16 %v260
  %v1033 = vunpack.c.h.b16 %v260
  %v1034 = vunpack.c.l.b16 %v261
  %v1035 = vunpack.c.h.b16 %v261
  %v1036 = vunpack.c.l.b16 %v262
  %v1037 = vunpack.c.h.b16 %v262
  %v1038 = vunpack.c.l.b16 %v263
  %v1039 = vunpack.c.h.b16 %v263
  %v1040 = vunpack.c.l.b16 %v264
  %v1041 = vunpack.c.h.b16 %v264
  %v1042 = vunpack.c.l.b16 %v265
  %v1043 = vunpack.c.h.b16 %v265
  %v1044 = vunpack.c.l.b16 %v266
  %v1045 = vunpack.c.h.b16 %v266
  %v1046 = vunpack.c.l.b16 %v267
  %v1047 = vunpack.c.h.b16 %v267
  %v1048 = vunpack.c.l.b16 %v268
  %v1049 = vunpack.c.h.b16 %v268
  %v1050 = vunpack.c.l.b16 %v269
  %v1051 = vunpack.c.h.b16 %v269
  %v1052 = vunpack.c.l.b16 %v270
  %v1053 = vunpack.c.h.b16 %v270
  %v1054 = vunpack.c.l.b16 %v271
  %v1055 = vunpack.c.h.b16 %v271
  %v1056 = vunpack.c.l.b16 %v272
  %v1057 = vunpack.c.h.b16 %v272
  %v1058 = vunpack.c.l.b16 %v273
  %v1059 = vunpack.c.h.b16 %v273
  %v1060 = vunpack.c.l.b16 %v274
  %v1061 = vunpack.c.h.b16 %v274
  %v1062 = vpack.c.b16 %v574, %v570
  %v1063 = vpack.c.b16 %v575, %v571
  %v1064 = vpack.c.b16 %v576, %v572
  %v1065 = vpack.c.b16 %v577, %v573
  %v1066 = vpack.c.b16 %v582, %v578
  %v1067 = vpack.c.b16 %v583, %v579
  %v1068 = vpack.c.b16 %v584, %v580
  %v1069 = vpack.c.b16 %v585, %v581
  %v1070 = vpack.c.b16 %v590, %v586
  %v1071 = vpack.c.b16 %v591, %v587
  %v1072 = vpack.c.b16 %v592, %v588
  %v1073 = vpack.c.b16 %v593, %v589
  %v1074 = vpack.c.b16 %v598, %v594
  %v1075 = vpack.c.b16 %v599, %v595
  %v1076 = vpack.c.b16 %v600, %v596
  %v1077 = vpack.c.b16 %v601, %v597
  %v1078 = vpack.c.b16 %v606, %v602
  %v1079 = vpack.c.b16 %v607, %v603
  %v1080 = vpack.c.b16 %v608, %v604
  %v1081 = vpack.c.b16 %v609, %v605
  %v1082 = vpack.c.b16 %v614, %v610
  %v1083 = vpack.c.b16 %v615, %v611
  %v1084 = vpack.c.b16 %v616, %v612
  %v1085 = vpack.c.b16 %v617, %v613
  %v1086 = vpack.c.b16 %v622, %v618
  %v1087 = vpack.c.b16 %v623, %v619
  %v1088 = vpack.c.b16 %v624, %v620
  %v1089 = vpack.c.b16 %v625, %v621
  %v1090 = vpack.c.b16 %v630, %v626
  %v1091 = vpack.c.b16 %v631, %v627
  %v1092 = vpack.c.b16 %v632, %v628
  %v1093 = vpack.c.b16 %v633, %v629
  %v1094 = vpack.c.b16 %v638, %v634
  %v1095 = vpack.c.b16 %v639, %v635
  %v1096 = vpack.c.b16 %v640, %v636
  %v1097 = vpack.c.b16 %v641, %v637
  %v1098 = vpack.c.b16 %v646, %v642
  %v1099 = vpack.c.b16 %v647, %v643
  %v1100 = vpack.c.b16 %v648, %v644
  %v1101 = vpack.c.b16 %v649, %v645
  %v1102 = vpack.c.b16 %v654, %v650
  %v1103 = vpack.c.b16 %v655, %v651
  %v1104 = vpack.c.b16 %v656, %v652
  %v1105 = vpack.c.b16 %v657, %v653
  %v1106 = vpack.c.b16 %v662, %v658
  %v1107 = vpack.c.b16 %v663, %v659
  %v1108 = vpack.c.b16 %v664, %v660
  %v1109 = vpack.c.b16 %v665, %v661
  %v1110 = vpack.c.b16 %v670, %v666
  %v1111 = vpack.c.b16 %v671, %v667
  %v1112 = vpack.c.b16 %v672, %v668
  %v1113 = vpack.c.b16 %v673, %v669
  %v1114 = vpack.c.b16 %v678, %v674
  %v1115 = vpack.c.b16 %v679, %v675
  %v1116 = vpack.c.b16 %v680, %v676
  %v1117 = vpack.c.b16 %v681, %v677
  %v1118 = vpack.c.b16 %v686, %v682
  %v1119 = vpack.c.b16 %v687, %v683
  %v1120 = vpack.c.b16 %v688, %v684
  %v1121 = vpack.c.b16 %v689, %v685
  %v1122 = vpack.c.b16 %v694, %v690
  %v1123 = vpack.c.b16 %v695, %v691
  %v1124 = vpack.c.b16 %v696, %v692
  %v1125 = vpack.c.b16 %v697, %v693
  %v1126 = vpack.c.b16 %v702, %v698
  %v1127 = vpack.c.b16 %v703, %v699
  %v1128 = vpack.c.b16 %v704, %v700
  %v1129 = vpack.c.b16 %v705, %v701
  %v1130 = vpack.c.b16 %v710, %v706
  %v1131 = vpack.c.b16 %v711, %v707
  %v1132 = vpack.c.b16 %v712, %v708
  %v1133 = vpack.c.b16 %v713, %v709
  %v1134 = vpack.c.b16 %v718, %v714
  %v1135 = vpack.c.b16 %v719, %v715
  %v1136 = vpack.c.b16 %v720, %v716
  %v1137 = vpack.c.b16 %v721, %v717
  %v1138 = vpack.c.b16 %v726, %v722
  %v1139 = vpack.c.b16 %v727, %v723
  %v1140 = vpack.c.b16 %v728, %v724
  %v1141 = vpack.c.b16 %v729, %v725
  %v1142 = vpack.c.b16 %v734, %v730
  %v1143 = vpack.c.b16 %v735, %v731
  %v1144 = vpack.c.b16 %v736, %v732
  %v1145 = vpack.c.b16 %v737, %v733
  %v1146 = vpack.c.b16 %v742, %v738
  %v1147 = vpack.c.b16 %v743, %v739
  %v1148 = vpack.c.b16 %v744, %v740
  %v1149 = vpack.c.b16 %v745, %v741
  %v1150 = vpack.c.b16 %v750, %v746
  %v1151 = vpack.c.b16 %v751, %v747
  %v1152 = vpack.c.b16 %v752, %v748
  %v1153 = vpack.c.b16 %v753, %v749
  %v1154 = vpack.c.b16 %v758, %v754
  %v1155 = vpack.c.b16 %v759, %v755
  %v1156 = vpack.c.b16 %v760, %v756
  %v1157 = vpack.c.b16 %v761, %v757
  %v1158 = vpack.c.b16 %v766, %v762
  %v1159 = vpack.c.b16 %v767, %v763
  %v1160 = vpack.c.b16 %v768, %v764
  %v1161 = vpack.c.b16 %v769, %v765
  %v1162 = vpack.c.b16 %v774, %v770
  %v1163 = vpack.c.b16 %v775, %v771
  %v1164 = vpack.c.b16 %v776, %v772
  %v1165 = vpack.c.b16 %v777, %v773
  %v1166 = vpack.c.b16 %v782, %v778
  %v1167 = vpack.c.b16 %v783, %v779
  %v1168 = vpack.c.b16 %v784, %v780
  %v1169 = vpack.c.b16 %v785, %v781
  %v1170 = vpack.c.b16 %v790, %v786
  %v1171 = vpack.c.b16 %v791, %v787
  %v1172 = vpack.c.b16 %v792, %v788
  %v1173 = vpack.c.b16 %v793, %v789
  %v1174 = vpack.c.b16 %v798, %v794
  %v1175 = vpack.c.b16 %v799, %v795
  %v1176 = vpack.c.b16 %v800, %v796
  %v1177 = vpack.c.b16 %v801, %v797
  %v1178 = vpack.c.b16 %v806, %v802
  %v1179 = vpack.c.b16 %v807, %v803
  %v1180 = vpack.c.b16 %v808, %v804
  %v1181 = vpack.c.b16 %v809, %v805
  %v1182 = vpack.c.b16 %v814, %v810
  %v1183 = vpack.c.b16 %v815, %v811
  %v1184 = vpack.c.b16 %v816, %v812
  %v1185 = vpack.c.b16 %v817, %v813
  %v1186 = vpack.c.b16 %v822, %v818
  %v1187 = vpack.c.b16 %v823, %v819
  %v1188 = vpack.c.b16 %v824, %v820
  %v1189 = vpack.c.b16 %v825, %v821
  %v1190 = vpack.c.b16 %v830, %v826
  %v1191 = vpack.c.b16 %v831, %v827
  %v1192 = vpack.c.b16 %v832, %v828
  %v1193 = vpack.c.b16 %v833, %v829
  %v1194 = vpack.c.b16 %v838, %v834
  %v1195 = vpack.c.b16 %v839, %v835
  %v1196 = vpack.c.b16 %v840, %v836
  %v1197 = vpack.c.b16 %v841, %v837
  %v1198 = vpack.c.b16 %v846, %v842
  %v1199 = vpack.c.b16 %v847, %v843
  %v1200 = vpack.c.b16 %v848, %v844
  %v1201 = vpack.c.b16 %v849, %v845
  %v1202 = vpack.c.b16 %v854, %v850
  %v1203 = vpack.c.b16 %v855, %v851
  %v1204 = vpack.c.b16 %v856, %v852
  %v1205 = vpack.c.b16 %v857, %v853
  %v1206 = vpack.c.b16 %v862, %v858
  %v1207 = vpack.c.b16 %v863, %v859
  %v1208 = vpack.c.b16 %v864, %v860
  %v1209 = vpack.c.b16 %v865, %v861
  %v1210 = vpack.c.b16 %v870, %v866
  %v1211 = vpack.c.b16 %v871, %v867
  %v1212 = vpack.c.b16 %v872, %v868
  %v1213 = vpack.c.b16 %v873, %v869
  %v1214 = vpack.c.b16 %v878, %v874
  %v1215 = vpack.c.b16 %v879, %v875
  %v1216 = vpack.c.b16 %v880, %v876
  %v1217 = vpack.c.b16 %v881, %v877
  %v1218 = vpack.c.b16 %v886, %v882
  %v1219 = vpack.c.b16 %v887, %v883
  %v1220 = vpack.c.b16 %v888, %v884
  %v1221 = vpack.c.b16 %v889, %v885
  %v1222 = vpack.c.b16 %v894, %v890
  %v1223 = vpack.c.b16 %v895, %v891
  %v1224 = vpack.c.b16 %v896, %v892
  %v1225 = vpack.c.b16 %v897, %v893
  %v1226 = vpack.c.b16 %v902, %v898
  %v1227 = vpack.c.b16 %v903, %v899
  %v1228 = vpack.c.b16 %v904, %v900
  %v1229 = vpack.c.b16 %v905, %v901
  %v1230 = vpack.c.b16 %v910, %v906
  %v1231 = vpack.c.b16 %v911, %v907
  %v1232 = vpack.c.b16 %v912, %v908
  %v1233 = vpack.c.b16 %v913, %v909
  %v1234 = vpack.c.b16 %v918, %v914
  %v1235 = vpack.c.b16 %v919, %v915
  %v1236 = vpack.c.b16 %v920, %v916
  %v1237 = vpack.c.b16 %v921, %v917
  %v1238 = vpack.c.b16 %v926, %v922
  %v1239 = vpack.c.b16 %v927, %v923
  %v1240 = vpack.c.b16 %v928, %v924
  %v1241 = vpack.c.b16 %v929, %v925
  %v1242 = vpack.c.b16 %v934, %v930
  %v1243 = vpack.c.b16 %v935, %v931
  %v1244 = vpack.c.b16 %v936, %v932
  %v1245 = vpack.c.b16 %v937, %v933
  %v1246 = vpack.c.b16 %v942, %v938
  %v1247 = vpack.c.b16 %v943, %v939
  %v1248 = vpack.c.b16 %v944, %v940
  %v1249 = vpack.c.b16 %v945, %v941
  %v1250 = vpack.c.b16 %v950, %v946
  %v1251 = vpack.c.b16 %v951, %v947
  %v1252 = vpack.c.b16 %v952, %v948
  %v1253 = vpack.c.b16 %v953, %v949
  %v1254 = vpack.c.b16 %v958, %v954
  %v1255 = vpack.c.b16 %v959, %v955
  %v1256 = vpack.c.b16 %v960, %v956
  %v1257 = vpack.c.b16 %v961, %v957
  %v1258 = vpack.c.b16 %v966, %v962
  %v1259 = vpack.c.b16 %v967, %v963
  %v1260 = vpack.c.b16 %v968, %v964
  %v1261 = vpack.c.b16 %v969, %v965
  %v1262 = vpack.c.b16 %v974, %v970
  %v1263 = vpack.c.b16 %v975, %v971
  %v1264 = vpack.c.b16 %v976, %v972
  %v1265 = vpack.c.b16 %v977, %v973
  %v1266 = vpack.c.b16 %v982, %v978
  %v1267 = vpack.c.b16 %v983, %v979
  %v1268 = vpack.c.b16 %v984, %v980
  %v1269 = vpack.c.b16 %v985, %v981
  %v1270 = vpack.c.b16 %v990, %v986
  %v1271 = vpack.c.b16 %v991, %v987
  %v1272 = vpack.c.b16 %v992, %v988
  %v1273 = vpack.c.b16 %v993, %v989
  %v1274 = vpack.c.b16 %v998, %v994
  %v1275 = vpack.c.b16 %v999, %v995
  %v1276 = vpack.c.b16 %v1000, %v996
  %v1277 = vpack.c.b16 %v1001, %v997
  %v1278 = vpack.c.b16 %v1006, %v1002
  %v1279 = vpack.c.b16 %v1007, %v1003
  %v1280 = vpack.c.b16 %v1008, %v1004
  %v1281 = vpack.c.b16 %v1009, %v1005
  %v1282 = vpack.c.b16 %v1014, %v1010
  %v1283 = vpack.c.b16 %v1015, %v1011
  %v1284 = vpack.c.b16 %v1016, %v1012
  %v1285 = vpack.c.b16 %v1017, %v1013
  %v1286 = vpack.c.b16 %v1022, %v1018
  %v1287 = vpack.c.b16 %v1023, %v1019
  %v1288 = vpack.c.b16 %v1024, %v1020
  %v1289 = vpack.c.b16 %v1025, %v1021
  %v1290 = vpack.c.b16 %v1030, %v1026
  %v1291 = vpack.c.b16 %v1031, %v1027
  %v1292 = vpack.c.b16 %v1032, %v1028
  %v1293 = vpack.c.b16 %v1033, %v1029
  %v1294 = vpack.c.b16 %v1038, %v1034
  %v1295 = vpack.c.b16 %v1039, %v1035
  %v1296 = vpack.c.b16 %v1040, %v1036
  %v1297 = vpack.c.b16 %v1041, %v1037
  %v1298 = vpack.c.b16 %v1046, %v1042
  %v1299 = vpack.c.b16 %v1047, %v1043
  %v1300 = vpack.c.b16 %v1048, %v1044
  %v1301 = vpack.c.b16 %v1049, %v1045
  %v1302 = vpack.c.b16 %v1054, %v1050
  %v1303 = vpack.c.b16 %v1055, %v1051
  %v1304 = vpack.c.b16 %v1056, %v1052
  %v1305 = vpack.c.b16 %v1057, %v1053
  %v1306 = vpack.c.b16 %v1058, %v1058
  %v1307 = vpack.c.b16 %v1059, %v1059
  %v1308 = vpack.c.b16 %v1060, %v1060
  %v1309 = vpack.c.b16 %v1061, %v1061
  %vm1554 = vcmask 687104
  %v1556 = vsel %vm1554, %v316, 0
  %vm1558 = vcmask 1041408
  %v1560 = vsel %vm1558, %v1306, 0
  %v1563 = vsel %vm1558, %v1307, 0
  %v1566 = vsel %vm1558, %v1308, 0
  %v1569 = vsel %vm1558, %v1309, 0
  %1571 = vmatpush.bf16.msra.mxu0 %v1090
  %1572 = vmatpush.bf16.msra.mxu0 %v1086
  %1573 = vmatpush.bf16.msra.mxu0 %v1082
  %1574 = vmatpush.bf16.msra.mxu0 %v1078
  %1575 = vmatpush.bf16.msra.mxu0 %v1074
  %1576 = vmatpush.bf16.msra.mxu0 %v1070
  %1577 = vmatpush.bf16.msra.mxu0 %v1066
  %1578 = vmatpush.bf16.msra.mxu0 %v1062
  %1579 = vmatmul.bf16.gmra.mxu0 %v309
  %v1580 = vpop.f32.mrf.mxu0
  %v1581 = vadd.f32 %v277, %v1580
  %v1582 = vpop.f32.mrf.mxu0
  %v1583 = vadd.f32 %v277, %v1582
  %1584 = vdwg.mxu0
  %1585 = vmatpush.bf16.msra.mxu0 %v1122
  %1586 = vmatpush.bf16.msra.mxu0 %v1118
  %1587 = vmatpush.bf16.msra.mxu0 %v1114
  %1588 = vmatpush.bf16.msra.mxu0 %v1110
  %1589 = vmatpush.bf16.msra.mxu0 %v1106
  %1590 = vmatpush.bf16.msra.mxu0 %v1102
  %1591 = vmatpush.bf16.msra.mxu0 %v1098
  %1592 = vmatpush.bf16.msra.mxu0 %v1094
  %1593 = vmatmul.bf16.gmra.mxu0 %v310
  %v1594 = vpop.f32.mrf.mxu0
  %v1595 = vadd.f32 %v1581, %v1594
  %v1596 = vpop.f32.mrf.mxu0
  %v1597 = vadd.f32 %v1583, %v1596
  %1598 = vdwg.mxu0
  %1599 = vmatpush.bf16.msra.mxu0 %v1154
  %1600 = vmatpush.bf16.msra.mxu0 %v1150
  %1601 = vmatpush.bf16.msra.mxu0 %v1146
  %1602 = vmatpush.bf16.msra.mxu0 %v1142
  %1603 = vmatpush.bf16.msra.mxu0 %v1138
  %1604 = vmatpush.bf16.msra.mxu0 %v1134
  %1605 = vmatpush.bf16.msra.mxu0 %v1130
  %1606 = vmatpush.bf16.msra.mxu0 %v1126
  %1607 = vmatmul.bf16.gmra.mxu0 %v311
  %v1608 = vpop.f32.mrf.mxu0
  %v1609 = vadd.f32 %v1595, %v1608
  %v1610 = vpop.f32.mrf.mxu0
  %v1611 = vadd.f32 %v1597, %v1610
  %1612 = vdwg.mxu0
  %1613 = vmatpush.bf16.msra.mxu0 %v1186
  %1614 = vmatpush.bf16.msra.mxu0 %v1182
  %1615 = vmatpush.bf16.msra.mxu0 %v1178
  %1616 = vmatpush.bf16.msra.mxu0 %v1174
  %1617 = vmatpush.bf16.msra.mxu0 %v1170
  %1618 = vmatpush.bf16.msra.mxu0 %v1166
  %1619 = vmatpush.bf16.msra.mxu0 %v1162
  %1620 = vmatpush.bf16.msra.mxu0 %v1158
  %1621 = vmatmul.bf16.gmra.mxu0 %v312
  %v1622 = vpop.f32.mrf.mxu0
  %v1623 = vadd.f32 %v1609, %v1622
  %v1624 = vpop.f32.mrf.mxu0
  %v1625 = vadd.f32 %v1611, %v1624
  %1626 = vdwg.mxu0
  %1627 = vmatpush.bf16.msra.mxu0 %v1218
  %1628 = vmatpush.bf16.msra.mxu0 %v1214
  %1629 = vmatpush.bf16.msra.mxu0 %v1210
  %1630 = vmatpush.bf16.msra.mxu0 %v1206
  %1631 = vmatpush.bf16.msra.mxu0 %v1202
  %1632 = vmatpush.bf16.msra.mxu0 %v1198
  %1633 = vmatpush.bf16.msra.mxu0 %v1194
  %1634 = vmatpush.bf16.msra.mxu0 %v1190
  %1635 = vmatmul.bf16.gmra.mxu0 %v313
  %v1636 = vpop.f32.mrf.mxu0
  %v1637 = vadd.f32 %v1623, %v1636
  %v1638 = vpop.f32.mrf.mxu0
  %v1639 = vadd.f32 %v1625, %v1638
  %1640 = vdwg.mxu0
  %1641 = vmatpush.bf16.msra.mxu0 %v1250
  %1642 = vmatpush.bf16.msra.mxu0 %v1246
  %1643 = vmatpush.bf16.msra.mxu0 %v1242
  %1644 = vmatpush.bf16.msra.mxu0 %v1238
  %1645 = vmatpush.bf16.msra.mxu0 %v1234
  %1646 = vmatpush.bf16.msra.mxu0 %v1230
  %1647 = vmatpush.bf16.msra.mxu0 %v1226
  %1648 = vmatpush.bf16.msra.mxu0 %v1222
  %1649 = vmatmul.bf16.gmra.mxu0 %v314
  %v1650 = vpop.f32.mrf.mxu0
  %v1651 = vadd.f32 %v1637, %v1650
  %v1652 = vpop.f32.mrf.mxu0
  %v1653 = vadd.f32 %v1639, %v1652
  %1654 = vdwg.mxu0
  %1655 = vmatpush.bf16.msra.mxu0 %v1282
  %1656 = vmatpush.bf16.msra.mxu0 %v1278
  %1657 = vmatpush.bf16.msra.mxu0 %v1274
  %1658 = vmatpush.bf16.msra.mxu0 %v1270
  %1659 = vmatpush.bf16.msra.mxu0 %v1266
  %1660 = vmatpush.bf16.msra.mxu0 %v1262
  %1661 = vmatpush.bf16.msra.mxu0 %v1258
  %1662 = vmatpush.bf16.msra.mxu0 %v1254
  %1663 = vmatmul.bf16.gmra.mxu0 %v315
  %v1664 = vpop.f32.mrf.mxu0
  %v1665 = vadd.f32 %v1651, %v1664
  %v1666 = vpop.f32.mrf.mxu0
  %v1667 = vadd.f32 %v1653, %v1666
  %1668 = vdwg.mxu0
  %1669 = vmatpush.bf16.msra.mxu0 0
  %1670 = vmatpush.bf16.msra.mxu0 0
  %1671 = vmatpush.bf16.msra.mxu0 %v1560
  %1672 = vmatpush.bf16.msra.mxu0 %v1302
  %1673 = vmatpush.bf16.msra.mxu0 %v1298
  %1674 = vmatpush.bf16.msra.mxu0 %v1294
  %1675 = vmatpush.bf16.msra.mxu0 %v1290
  %1676 = vmatpush.bf16.msra.mxu0 %v1286
  %1677 = vmatmul.bf16.gmra.mxu0 %v1556
  %v1678 = vpop.f32.mrf.mxu0
  %v1679 = vadd.f32 %v1665, %v1678
  %v1680 = vpop.f32.mrf.mxu0
  %v1681 = vadd.f32 %v1667, %v1680
  %1682 = vdwg.mxu0
  %1683 = vmatpush.bf16.msra.mxu0 %v1091
  %1684 = vmatpush.bf16.msra.mxu0 %v1087
  %1685 = vmatpush.bf16.msra.mxu0 %v1083
  %1686 = vmatpush.bf16.msra.mxu0 %v1079
  %1687 = vmatpush.bf16.msra.mxu0 %v1075
  %1688 = vmatpush.bf16.msra.mxu0 %v1071
  %1689 = vmatpush.bf16.msra.mxu0 %v1067
  %1690 = vmatpush.bf16.msra.mxu0 %v1063
  %1691 = vmatmul.bf16.gmra.mxu0 %v309
  %v1692 = vpop.f32.mrf.mxu0
  %v1693 = vadd.f32 %v278, %v1692
  %v1694 = vpop.f32.mrf.mxu0
  %v1695 = vadd.f32 %v278, %v1694
  %1696 = vdwg.mxu0
  %1697 = vmatpush.bf16.msra.mxu0 %v1123
  %1698 = vmatpush.bf16.msra.mxu0 %v1119
  %1699 = vmatpush.bf16.msra.mxu0 %v1115
  %1700 = vmatpush.bf16.msra.mxu0 %v1111
  %1701 = vmatpush.bf16.msra.mxu0 %v1107
  %1702 = vmatpush.bf16.msra.mxu0 %v1103
  %1703 = vmatpush.bf16.msra.mxu0 %v1099
  %1704 = vmatpush.bf16.msra.mxu0 %v1095
  %1705 = vmatmul.bf16.gmra.mxu0 %v310
  %v1706 = vpop.f32.mrf.mxu0
  %v1707 = vadd.f32 %v1693, %v1706
  %v1708 = vpop.f32.mrf.mxu0
  %v1709 = vadd.f32 %v1695, %v1708
  %1710 = vdwg.mxu0
  %1711 = vmatpush.bf16.msra.mxu0 %v1155
  %1712 = vmatpush.bf16.msra.mxu0 %v1151
  %1713 = vmatpush.bf16.msra.mxu0 %v1147
  %1714 = vmatpush.bf16.msra.mxu0 %v1143
  %1715 = vmatpush.bf16.msra.mxu0 %v1139
  %1716 = vmatpush.bf16.msra.mxu0 %v1135
  %1717 = vmatpush.bf16.msra.mxu0 %v1131
  %1718 = vmatpush.bf16.msra.mxu0 %v1127
  %1719 = vmatmul.bf16.gmra.mxu0 %v311
  %v1720 = vpop.f32.mrf.mxu0
  %v1721 = vadd.f32 %v1707, %v1720
  %v1722 = vpop.f32.mrf.mxu0
  %v1723 = vadd.f32 %v1709, %v1722
  %1724 = vdwg.mxu0
  %1725 = vmatpush.bf16.msra.mxu0 %v1187
  %1726 = vmatpush.bf16.msra.mxu0 %v1183
  %1727 = vmatpush.bf16.msra.mxu0 %v1179
  %1728 = vmatpush.bf16.msra.mxu0 %v1175
  %1729 = vmatpush.bf16.msra.mxu0 %v1171
  %1730 = vmatpush.bf16.msra.mxu0 %v1167
  %1731 = vmatpush.bf16.msra.mxu0 %v1163
  %1732 = vmatpush.bf16.msra.mxu0 %v1159
  %1733 = vmatmul.bf16.gmra.mxu0 %v312
  %v1734 = vpop.f32.mrf.mxu0
  %v1735 = vadd.f32 %v1721, %v1734
  %v1736 = vpop.f32.mrf.mxu0
  %v1737 = vadd.f32 %v1723, %v1736
  %1738 = vdwg.mxu0
  %1739 = vmatpush.bf16.msra.mxu0 %v1219
  %1740 = vmatpush.bf16.msra.mxu0 %v1215
  %1741 = vmatpush.bf16.msra.mxu0 %v1211
  %1742 = vmatpush.bf16.msra.mxu0 %v1207
  %1743 = vmatpush.bf16.msra.mxu0 %v1203
  %1744 = vmatpush.bf16.msra.mxu0 %v1199
  %1745 = vmatpush.bf16.msra.mxu0 %v1195
  %1746 = vmatpush.bf16.msra.mxu0 %v1191
  %1747 = vmatmul.bf16.gmra.mxu0 %v313
  %v1748 = vpop.f32.mrf.mxu0
  %v1749 = vadd.f32 %v1735, %v1748
  %v1750 = vpop.f32.mrf.mxu0
  %v1751 = vadd.f32 %v1737, %v1750
  %1752 = vdwg.mxu0
  %1753 = vmatpush.bf16.msra.mxu0 %v1251
  %1754 = vmatpush.bf16.msra.mxu0 %v1247
  %1755 = vmatpush.bf16.msra.mxu0 %v1243
  %1756 = vmatpush.bf16.msra.mxu0 %v1239
  %1757 = vmatpush.bf16.msra.mxu0 %v1235
  %1758 = vmatpush.bf16.msra.mxu0 %v1231
  %1759 = vmatpush.bf16.msra.mxu0 %v1227
  %1760 = vmatpush.bf16.msra.mxu0 %v1223
  %1761 = vmatmul.bf16.gmra.mxu0 %v314
  %v1762 = vpop.f32.mrf.mxu0
  %v1763 = vadd.f32 %v1749, %v1762
  %v1764 = vpop.f32.mrf.mxu0
  %v1765 = vadd.f32 %v1751, %v1764
  %1766 = vdwg.mxu0
  %1767 = vmatpush.bf16.msra.mxu0 %v1283
  %1768 = vmatpush.bf16.msra.mxu0 %v1279
  %1769 = vmatpush.bf16.msra.mxu0 %v1275
  %1770 = vmatpush.bf16.msra.mxu0 %v1271
  %1771 = vmatpush.bf16.msra.mxu0 %v1267
  %1772 = vmatpush.bf16.msra.mxu0 %v1263
  %1773 = vmatpush.bf16.msra.mxu0 %v1259
  %1774 = vmatpush.bf16.msra.mxu0 %v1255
  %1775 = vmatmul.bf16.gmra.mxu0 %v315
  %v1776 = vpop.f32.mrf.mxu0
  %v1777 = vadd.f32 %v1763, %v1776
  %v1778 = vpop.f32.mrf.mxu0
  %v1779 = vadd.f32 %v1765, %v1778
  %1780 = vdwg.mxu0
  %1781 = vmatpush.bf16.msra.mxu0 0
  %1782 = vmatpush.bf16.msra.mxu0 0
  %1783 = vmatpush.bf16.msra.mxu0 %v1563
  %1784 = vmatpush.bf16.msra.mxu0 %v1303
  %1785 = vmatpush.bf16.msra.mxu0 %v1299
  %1786 = vmatpush.bf16.msra.mxu0 %v1295
  %1787 = vmatpush.bf16.msra.mxu0 %v1291
  %1788 = vmatpush.bf16.msra.mxu0 %v1287
  %1789 = vmatmul.bf16.gmra.mxu0 %v1556
  %v1790 = vpop.f32.mrf.mxu0
  %v1791 = vadd.f32 %v1777, %v1790
  %v1792 = vpop.f32.mrf.mxu0
  %v1793 = vadd.f32 %v1779, %v1792
  %1794 = vdwg.mxu0
  %1795 = vmatpush.bf16.msra.mxu0 %v1092
  %1796 = vmatpush.bf16.msra.mxu0 %v1088
  %1797 = vmatpush.bf16.msra.mxu0 %v1084
  %1798 = vmatpush.bf16.msra.mxu0 %v1080
  %1799 = vmatpush.bf16.msra.mxu0 %v1076
  %1800 = vmatpush.bf16.msra.mxu0 %v1072
  %1801 = vmatpush.bf16.msra.mxu0 %v1068
  %1802 = vmatpush.bf16.msra.mxu0 %v1064
  %1803 = vmatmul.bf16.gmra.mxu0 %v309
  %v1804 = vpop.f32.mrf.mxu0
  %v1805 = vadd.f32 %v279, %v1804
  %v1806 = vpop.f32.mrf.mxu0
  %v1807 = vadd.f32 %v279, %v1806
  %1808 = vdwg.mxu0
  %1809 = vmatpush.bf16.msra.mxu0 %v1124
  %1810 = vmatpush.bf16.msra.mxu0 %v1120
  %1811 = vmatpush.bf16.msra.mxu0 %v1116
  %1812 = vmatpush.bf16.msra.mxu0 %v1112
  %1813 = vmatpush.bf16.msra.mxu0 %v1108
  %1814 = vmatpush.bf16.msra.mxu0 %v1104
  %1815 = vmatpush.bf16.msra.mxu0 %v1100
  %1816 = vmatpush.bf16.msra.mxu0 %v1096
  %1817 = vmatmul.bf16.gmra.mxu0 %v310
  %v1818 = vpop.f32.mrf.mxu0
  %v1819 = vadd.f32 %v1805, %v1818
  %v1820 = vpop.f32.mrf.mxu0
  %v1821 = vadd.f32 %v1807, %v1820
  %1822 = vdwg.mxu0
  %1823 = vmatpush.bf16.msra.mxu0 %v1156
  %1824 = vmatpush.bf16.msra.mxu0 %v1152
  %1825 = vmatpush.bf16.msra.mxu0 %v1148
  %1826 = vmatpush.bf16.msra.mxu0 %v1144
  %1827 = vmatpush.bf16.msra.mxu0 %v1140
  %1828 = vmatpush.bf16.msra.mxu0 %v1136
  %1829 = vmatpush.bf16.msra.mxu0 %v1132
  %1830 = vmatpush.bf16.msra.mxu0 %v1128
  %1831 = vmatmul.bf16.gmra.mxu0 %v311
  %v1832 = vpop.f32.mrf.mxu0
  %v1833 = vadd.f32 %v1819, %v1832
  %v1834 = vpop.f32.mrf.mxu0
  %v1835 = vadd.f32 %v1821, %v1834
  %1836 = vdwg.mxu0
  %1837 = vmatpush.bf16.msra.mxu0 %v1188
  %1838 = vmatpush.bf16.msra.mxu0 %v1184
  %1839 = vmatpush.bf16.msra.mxu0 %v1180
  %1840 = vmatpush.bf16.msra.mxu0 %v1176
  %1841 = vmatpush.bf16.msra.mxu0 %v1172
  %1842 = vmatpush.bf16.msra.mxu0 %v1168
  %1843 = vmatpush.bf16.msra.mxu0 %v1164
  %1844 = vmatpush.bf16.msra.mxu0 %v1160
  %1845 = vmatmul.bf16.gmra.mxu0 %v312
  %v1846 = vpop.f32.mrf.mxu0
  %v1847 = vadd.f32 %v1833, %v1846
  %v1848 = vpop.f32.mrf.mxu0
  %v1849 = vadd.f32 %v1835, %v1848
  %1850 = vdwg.mxu0
  %1851 = vmatpush.bf16.msra.mxu0 %v1220
  %1852 = vmatpush.bf16.msra.mxu0 %v1216
  %1853 = vmatpush.bf16.msra.mxu0 %v1212
  %1854 = vmatpush.bf16.msra.mxu0 %v1208
  %1855 = vmatpush.bf16.msra.mxu0 %v1204
  %1856 = vmatpush.bf16.msra.mxu0 %v1200
  %1857 = vmatpush.bf16.msra.mxu0 %v1196
  %1858 = vmatpush.bf16.msra.mxu0 %v1192
  %1859 = vmatmul.bf16.gmra.mxu0 %v313
  %v1860 = vpop.f32.mrf.mxu0
  %v1861 = vadd.f32 %v1847, %v1860
  %v1862 = vpop.f32.mrf.mxu0
  %v1863 = vadd.f32 %v1849, %v1862
  %1864 = vdwg.mxu0
  %1865 = vmatpush.bf16.msra.mxu0 %v1252
  %1866 = vmatpush.bf16.msra.mxu0 %v1248
  %1867 = vmatpush.bf16.msra.mxu0 %v1244
  %1868 = vmatpush.bf16.msra.mxu0 %v1240
  %1869 = vmatpush.bf16.msra.mxu0 %v1236
  %1870 = vmatpush.bf16.msra.mxu0 %v1232
  %1871 = vmatpush.bf16.msra.mxu0 %v1228
  %1872 = vmatpush.bf16.msra.mxu0 %v1224
  %1873 = vmatmul.bf16.gmra.mxu0 %v314
  %v1874 = vpop.f32.mrf.mxu0
  %v1875 = vadd.f32 %v1861, %v1874
  %v1876 = vpop.f32.mrf.mxu0
  %v1877 = vadd.f32 %v1863, %v1876
  %1878 = vdwg.mxu0
  %1879 = vmatpush.bf16.msra.mxu0 %v1284
  %1880 = vmatpush.bf16.msra.mxu0 %v1280
  %1881 = vmatpush.bf16.msra.mxu0 %v1276
  %1882 = vmatpush.bf16.msra.mxu0 %v1272
  %1883 = vmatpush.bf16.msra.mxu0 %v1268
  %1884 = vmatpush.bf16.msra.mxu0 %v1264
  %1885 = vmatpush.bf16.msra.mxu0 %v1260
  %1886 = vmatpush.bf16.msra.mxu0 %v1256
  %1887 = vmatmul.bf16.gmra.mxu0 %v315
  %v1888 = vpop.f32.mrf.mxu0
  %v1889 = vadd.f32 %v1875, %v1888
  %v1890 = vpop.f32.mrf.mxu0
  %v1891 = vadd.f32 %v1877, %v1890
  %1892 = vdwg.mxu0
  %1893 = vmatpush.bf16.msra.mxu0 0
  %1894 = vmatpush.bf16.msra.mxu0 0
  %1895 = vmatpush.bf16.msra.mxu0 %v1566
  %1896 = vmatpush.bf16.msra.mxu0 %v1304
  %1897 = vmatpush.bf16.msra.mxu0 %v1300
  %1898 = vmatpush.bf16.msra.mxu0 %v1296
  %1899 = vmatpush.bf16.msra.mxu0 %v1292
  %1900 = vmatpush.bf16.msra.mxu0 %v1288
  %1901 = vmatmul.bf16.gmra.mxu0 %v1556
  %v1902 = vpop.f32.mrf.mxu0
  %v1903 = vadd.f32 %v1889, %v1902
  %v1904 = vpop.f32.mrf.mxu0
  %v1905 = vadd.f32 %v1891, %v1904
  %1906 = vdwg.mxu0
  %1907 = vmatpush.bf16.msra.mxu0 %v1093
  %1908 = vmatpush.bf16.msra.mxu0 %v1089
  %1909 = vmatpush.bf16.msra.mxu0 %v1085
  %1910 = vmatpush.bf16.msra.mxu0 %v1081
  %1911 = vmatpush.bf16.msra.mxu0 %v1077
  %1912 = vmatpush.bf16.msra.mxu0 %v1073
  %1913 = vmatpush.bf16.msra.mxu0 %v1069
  %1914 = vmatpush.bf16.msra.mxu0 %v1065
  %1915 = vmatmul.bf16.gmra.mxu0 %v309
  %v1916 = vpop.f32.mrf.mxu0
  %v1917 = vadd.f32 %v280, %v1916
  %v1918 = vpop.f32.mrf.mxu0
  %v1919 = vadd.f32 %v280, %v1918
  %1920 = vdwg.mxu0
  %1921 = vmatpush.bf16.msra.mxu0 %v1125
  %1922 = vmatpush.bf16.msra.mxu0 %v1121
  %1923 = vmatpush.bf16.msra.mxu0 %v1117
  %1924 = vmatpush.bf16.msra.mxu0 %v1113
  %1925 = vmatpush.bf16.msra.mxu0 %v1109
  %1926 = vmatpush.bf16.msra.mxu0 %v1105
  %1927 = vmatpush.bf16.msra.mxu0 %v1101
  %1928 = vmatpush.bf16.msra.mxu0 %v1097
  %1929 = vmatmul.bf16.gmra.mxu0 %v310
  %v1930 = vpop.f32.mrf.mxu0
  %v1931 = vadd.f32 %v1917, %v1930
  %v1932 = vpop.f32.mrf.mxu0
  %v1933 = vadd.f32 %v1919, %v1932
  %1934 = vdwg.mxu0
  %1935 = vmatpush.bf16.msra.mxu0 %v1157
  %1936 = vmatpush.bf16.msra.mxu0 %v1153
  %1937 = vmatpush.bf16.msra.mxu0 %v1149
  %1938 = vmatpush.bf16.msra.mxu0 %v1145
  %1939 = vmatpush.bf16.msra.mxu0 %v1141
  %1940 = vmatpush.bf16.msra.mxu0 %v1137
  %1941 = vmatpush.bf16.msra.mxu0 %v1133
  %1942 = vmatpush.bf16.msra.mxu0 %v1129
  %1943 = vmatmul.bf16.gmra.mxu0 %v311
  %v1944 = vpop.f32.mrf.mxu0
  %v1945 = vadd.f32 %v1931, %v1944
  %v1946 = vpop.f32.mrf.mxu0
  %v1947 = vadd.f32 %v1933, %v1946
  %1948 = vdwg.mxu0
  %1949 = vmatpush.bf16.msra.mxu0 %v1189
  %1950 = vmatpush.bf16.msra.mxu0 %v1185
  %1951 = vmatpush.bf16.msra.mxu0 %v1181
  %1952 = vmatpush.bf16.msra.mxu0 %v1177
  %1953 = vmatpush.bf16.msra.mxu0 %v1173
  %1954 = vmatpush.bf16.msra.mxu0 %v1169
  %1955 = vmatpush.bf16.msra.mxu0 %v1165
  %1956 = vmatpush.bf16.msra.mxu0 %v1161
  %1957 = vmatmul.bf16.gmra.mxu0 %v312
  %v1958 = vpop.f32.mrf.mxu0
  %v1959 = vadd.f32 %v1945, %v1958
  %v1960 = vpop.f32.mrf.mxu0
  %v1961 = vadd.f32 %v1947, %v1960
  %1962 = vdwg.mxu0
  %1963 = vmatpush.bf16.msra.mxu0 %v1221
  %1964 = vmatpush.bf16.msra.mxu0 %v1217
  %1965 = vmatpush.bf16.msra.mxu0 %v1213
  %1966 = vmatpush.bf16.msra.mxu0 %v1209
  %1967 = vmatpush.bf16.msra.mxu0 %v1205
  %1968 = vmatpush.bf16.msra.mxu0 %v1201
  %1969 = vmatpush.bf16.msra.mxu0 %v1197
  %1970 = vmatpush.bf16.msra.mxu0 %v1193
  %1971 = vmatmul.bf16.gmra.mxu0 %v313
  %v1972 = vpop.f32.mrf.mxu0
  %v1973 = vadd.f32 %v1959, %v1972
  %v1974 = vpop.f32.mrf.mxu0
  %v1975 = vadd.f32 %v1961, %v1974
  %1976 = vdwg.mxu0
  %1977 = vmatpush.bf16.msra.mxu0 %v1253
  %1978 = vmatpush.bf16.msra.mxu0 %v1249
  %1979 = vmatpush.bf16.msra.mxu0 %v1245
  %1980 = vmatpush.bf16.msra.mxu0 %v1241
  %1981 = vmatpush.bf16.msra.mxu0 %v1237
  %1982 = vmatpush.bf16.msra.mxu0 %v1233
  %1983 = vmatpush.bf16.msra.mxu0 %v1229
  %1984 = vmatpush.bf16.msra.mxu0 %v1225
  %1985 = vmatmul.bf16.gmra.mxu0 %v314
  %v1986 = vpop.f32.mrf.mxu0
  %v1987 = vadd.f32 %v1973, %v1986
  %v1988 = vpop.f32.mrf.mxu0
  %v1989 = vadd.f32 %v1975, %v1988
  %1990 = vdwg.mxu0
  %1991 = vmatpush.bf16.msra.mxu0 %v1285
  %1992 = vmatpush.bf16.msra.mxu0 %v1281
  %1993 = vmatpush.bf16.msra.mxu0 %v1277
  %1994 = vmatpush.bf16.msra.mxu0 %v1273
  %1995 = vmatpush.bf16.msra.mxu0 %v1269
  %1996 = vmatpush.bf16.msra.mxu0 %v1265
  %1997 = vmatpush.bf16.msra.mxu0 %v1261
  %1998 = vmatpush.bf16.msra.mxu0 %v1257
  %1999 = vmatmul.bf16.gmra.mxu0 %v315
  %v2000 = vpop.f32.mrf.mxu0
  %v2001 = vadd.f32 %v1987, %v2000
  %v2002 = vpop.f32.mrf.mxu0
  %v2003 = vadd.f32 %v1989, %v2002
  %2004 = vdwg.mxu0
  %2005 = vmatpush.bf16.msra.mxu0 0
  %2006 = vmatpush.bf16.msra.mxu0 0
  %2007 = vmatpush.bf16.msra.mxu0 %v1569
  %2008 = vmatpush.bf16.msra.mxu0 %v1305
  %2009 = vmatpush.bf16.msra.mxu0 %v1301
  %2010 = vmatpush.bf16.msra.mxu0 %v1297
  %2011 = vmatpush.bf16.msra.mxu0 %v1293
  %2012 = vmatpush.bf16.msra.mxu0 %v1289
  %2013 = vmatmul.bf16.gmra.mxu0 %v1556
  %v2014 = vpop.f32.mrf.mxu0
  %v2015 = vadd.f32 %v2001, %v2014
  %v2016 = vpop.f32.mrf.mxu0
  %v2017 = vadd.f32 %v2003, %v2016
  %2018 = vdwg.mxu0
  %v2019 = vmax.f32 %v1679, 0.0
  %v2020 = vmax.f32 %v1791, 0.0
  %v2021 = vmax.f32 %v1903, 0.0
  %v2022 = vmax.f32 %v2015, 0.0
  %v2023 = vmax.f32 %v1681, 0.0
  %v2024 = vmax.f32 %v1793, 0.0
  %v2025 = vmax.f32 %v1905, 0.0
  %v2026 = vmax.f32 %v2017, 0.0
  %v2027 = vpack.c.bf16 %v2023, %v2019
  %v2028 = vpack.c.bf16 %v2024, %v2020
  %v2029 = vpack.c.bf16 %v2025, %v2021
  %v2030 = vpack.c.bf16 %v2026, %v2022
  %v2031 = vld [vmem:[%s3] sm:$0xf]
  %v2032 = vld [vmem:[%s3 + $0x4] sm:$0xf]
  %v2033 = vld [vmem:[%s3 + $0x8] sm:$0xf]
  %v2034 = vld [vmem:[%s3 + $0xc] sm:$0xf]
  %v2035 = vld [vmem:[%s3 + $0x10] sm:$0xf]
  %v2036 = vld [vmem:[%s3 + $0x14] sm:$0xf]
  %v2037 = vld [vmem:[%s3 + $0x18] sm:$0xf]
  %v2038 = vld [vmem:[%s3 + $0x1c] sm:$0xf]
  %v2039 = vld [vmem:[%s3 + $0x20] sm:$0xf]
  %v2040 = vld [vmem:[%s3 + $0x24] sm:$0xf]
  %v2041 = vld [vmem:[%s3 + $0x28] sm:$0xf]
  %v2042 = vld [vmem:[%s3 + $0x2c] sm:$0xf]
  %v2043 = vld [vmem:[%s3 + $0x30] sm:$0xf]
  %v2044 = vld [vmem:[%s3 + $0x34] sm:$0xf]
  %v2045 = vld [vmem:[%s3 + $0x38] sm:$0xf]
  %v2046 = vld [vmem:[%s3 + $0x3c] sm:$0xf]
  %v2047 = vld [vmem:[%s3 + $0x40] sm:$0xf]
  %v2048 = vld [vmem:[%s3 + $0x44] sm:$0xf]
  %v2049 = vld [vmem:[%s3 + $0x48] sm:$0xf]
  %v2050 = vld [vmem:[%s3 + $0x4c] sm:$0xf]
  %v2051 = vld [vmem:[%s3 + $0x50] sm:$0xf]
  %v2052 = vld [vmem:[%s3 + $0x54] sm:$0xf]
  %v2053 = vld [vmem:[%s3 + $0x58] sm:$0xf]
  %v2054 = vld [vmem:[%s3 + $0x5c] sm:$0xf]
  %v2055 = vld [vmem:[%s3 + $0x60] sm:$0xf]
  %v2056 = vld [vmem:[%s3 + $0x64] sm:$0xf]
  %v2057 = vld [vmem:[%s3 + $0x68] sm:$0xf]
  %v2058 = vld [vmem:[%s3 + $0x6c] sm:$0xf]
  %v2059 = vld [vmem:[%s3 + $0x70] sm:$0xf]
  %v2060 = vld [vmem:[%s3 + $0x74] sm:$0xf]
  %v2061 = vld [vmem:[%s3 + $0x78] sm:$0xf]
  %v2062 = vld [vmem:[%s3 + $0x7c] sm:$0xf]
  %v2063 = vld [vmem:[%s3 + $0x80] sm:$0xf]
  %v2064 = vld [vmem:[%s3 + $0x84] sm:$0xf]
  %v2065 = vld [vmem:[%s3 + $0x88] sm:$0xf]
  %v2066 = vld [vmem:[%s3 + $0x8c] sm:$0xf]
  %v2067 = vld [vmem:[%s3 + $0x90] sm:$0xf]
  %v2068 = vld [vmem:[%s3 + $0x94] sm:$0xf]
  %v2069 = vld [vmem:[%s3 + $0x98] sm:$0xf]
  %v2070 = vld [vmem:[%s3 + $0x9c] sm:$0xf]
  %v2071 = vld [vmem:[%s3 + $0xa0] sm:$0xf]
  %v2072 = vld [vmem:[%s3 + $0xa4] sm:$0xf]
  %v2073 = vld [vmem:[%s3 + $0xa8] sm:$0xf]
  %v2074 = vld [vmem:[%s3 + $0xac] sm:$0xf]
  %v2075 = vld [vmem:[%s3 + $0xb0] sm:$0xf]
  %v2076 = vld [vmem:[%s3 + $0xb4] sm:$0xf]
  %v2077 = vld [vmem:[%s3 + $0xb8] sm:$0xf]
  %v2078 = vld [vmem:[%s3 + $0xbc] sm:$0xf]
  %v2079 = vld [vmem:[%s3 + $0xc0] sm:$0xf]
  %v2080 = vld [vmem:[%s3 + $0xc4] sm:$0xf]
  %v2081 = vld [vmem:[%s3 + $0xc8] sm:$0xf]
  %v2082 = vld [vmem:[%s3 + $0xcc] sm:$0xf]
  %v2083 = vld [vmem:[%s3 + $0xd0] sm:$0xf]
  %v2084 = vld [vmem:[%s3 + $0xd4] sm:$0xf]
  %v2085 = vld [vmem:[%s3 + $0xd8] sm:$0xf]
  %v2086 = vld [vmem:[%s3 + $0xdc] sm:$0xf]
  %v2087 = vld [vmem:[%s3 + $0xe0] sm:$0xf]
  %v2088 = vld [vmem:[%s3 + $0xe4] sm:$0xf]
  %v2089 = vld [vmem:[%s3 + $0xe8] sm:$0xf]
  %v2090 = vld [vmem:[%s3 + $0xec] sm:$0xf]
  %v2091 = vld [vmem:[%s3 + $0xf0] sm:$0xf]
  %v2092 = vld [vmem:[%s3 + $0xf4] sm:$0xf]
  %v2093 = vld [vmem:[%s3 + $0xf8] sm:$0xf]
  %v2094 = vld [vmem:[%s3 + $0xfc] sm:$0xf]
  %v2095 = vld [vmem:[%s4] sm:$0x1]
  %v2097 = vperm.slane %v2095, 0
  %v2163 = vunpack.c.l.b16 %v2031
  %v2164 = vunpack.c.l.b16 %v2032
  %v2165 = vunpack.c.l.b16 %v2033
  %v2166 = vunpack.c.l.b16 %v2034
  %v2167 = vunpack.c.l.b16 %v2035
  %v2168 = vunpack.c.l.b16 %v2036
  %v2169 = vunpack.c.l.b16 %v2037
  %v2170 = vunpack.c.l.b16 %v2038
  %v2171 = vunpack.c.l.b16 %v2039
  %v2172 = vunpack.c.l.b16 %v2040
  %v2173 = vunpack.c.l.b16 %v2041
  %v2174 = vunpack.c.l.b16 %v2042
  %v2175 = vunpack.c.l.b16 %v2043
  %v2176 = vunpack.c.l.b16 %v2044
  %v2177 = vunpack.c.l.b16 %v2045
  %v2178 = vunpack.c.l.b16 %v2046
  %v2179 = vunpack.c.l.b16 %v2047
  %v2180 = vunpack.c.l.b16 %v2048
  %v2181 = vunpack.c.l.b16 %v2049
  %v2182 = vunpack.c.l.b16 %v2050
  %v2183 = vunpack.c.l.b16 %v2051
  %v2184 = vunpack.c.l.b16 %v2052
  %v2185 = vunpack.c.l.b16 %v2053
  %v2186 = vunpack.c.l.b16 %v2054
  %v2187 = vunpack.c.l.b16 %v2055
  %v2188 = vunpack.c.l.b16 %v2056
  %v2189 = vunpack.c.l.b16 %v2057
  %v2190 = vunpack.c.l.b16 %v2058
  %v2191 = vunpack.c.l.b16 %v2059
  %v2192 = vunpack.c.l.b16 %v2060
  %v2193 = vunpack.c.l.b16 %v2061
  %v2194 = vunpack.c.l.b16 %v2062
  %v2195 = vunpack.c.l.b16 %v2063
  %v2196 = vunpack.c.l.b16 %v2064
  %v2197 = vunpack.c.l.b16 %v2065
  %v2198 = vunpack.c.l.b16 %v2066
  %v2199 = vunpack.c.l.b16 %v2067
  %v2200 = vunpack.c.l.b16 %v2068
  %v2201 = vunpack.c.l.b16 %v2069
  %v2202 = vunpack.c.l.b16 %v2070
  %v2203 = vunpack.c.l.b16 %v2071
  %v2204 = vunpack.c.l.b16 %v2072
  %v2205 = vunpack.c.l.b16 %v2073
  %v2206 = vunpack.c.l.b16 %v2074
  %v2207 = vunpack.c.l.b16 %v2075
  %v2208 = vunpack.c.l.b16 %v2076
  %v2209 = vunpack.c.l.b16 %v2077
  %v2210 = vunpack.c.l.b16 %v2078
  %v2211 = vunpack.c.l.b16 %v2079
  %v2212 = vunpack.c.l.b16 %v2080
  %v2213 = vunpack.c.l.b16 %v2081
  %v2214 = vunpack.c.l.b16 %v2082
  %v2215 = vunpack.c.l.b16 %v2083
  %v2216 = vunpack.c.l.b16 %v2084
  %v2217 = vunpack.c.l.b16 %v2085
  %v2218 = vunpack.c.l.b16 %v2086
  %v2219 = vunpack.c.l.b16 %v2087
  %v2220 = vunpack.c.l.b16 %v2088
  %v2221 = vunpack.c.l.b16 %v2089
  %v2222 = vunpack.c.l.b16 %v2090
  %v2223 = vunpack.c.l.b16 %v2091
  %v2224 = vunpack.c.l.b16 %v2092
  %v2225 = vunpack.c.l.b16 %v2093
  %v2226 = vunpack.c.l.b16 %v2094
  %v2227 = vpack.c.b16 %v2164, %v2163
  %v2228 = vpack.c.b16 %v2166, %v2165
  %v2229 = vpack.c.b16 %v2168, %v2167
  %v2230 = vpack.c.b16 %v2170, %v2169
  %v2231 = vpack.c.b16 %v2172, %v2171
  %v2232 = vpack.c.b16 %v2174, %v2173
  %v2233 = vpack.c.b16 %v2176, %v2175
  %v2234 = vpack.c.b16 %v2178, %v2177
  %v2235 = vpack.c.b16 %v2180, %v2179
  %v2236 = vpack.c.b16 %v2182, %v2181
  %v2237 = vpack.c.b16 %v2184, %v2183
  %v2238 = vpack.c.b16 %v2186, %v2185
  %v2239 = vpack.c.b16 %v2188, %v2187
  %v2240 = vpack.c.b16 %v2190, %v2189
  %v2241 = vpack.c.b16 %v2192, %v2191
  %v2242 = vpack.c.b16 %v2194, %v2193
  %v2243 = vpack.c.b16 %v2196, %v2195
  %v2244 = vpack.c.b16 %v2198, %v2197
  %v2245 = vpack.c.b16 %v2200, %v2199
  %v2246 = vpack.c.b16 %v2202, %v2201
  %v2247 = vpack.c.b16 %v2204, %v2203
  %v2248 = vpack.c.b16 %v2206, %v2205
  %v2249 = vpack.c.b16 %v2208, %v2207
  %v2250 = vpack.c.b16 %v2210, %v2209
  %v2251 = vpack.c.b16 %v2212, %v2211
  %v2252 = vpack.c.b16 %v2214, %v2213
  %v2253 = vpack.c.b16 %v2216, %v2215
  %v2254 = vpack.c.b16 %v2218, %v2217
  %v2255 = vpack.c.b16 %v2220, %v2219
  %v2256 = vpack.c.b16 %v2222, %v2221
  %v2257 = vpack.c.b16 %v2224, %v2223
  %v2258 = vpack.c.b16 %v2226, %v2225
  %2291 = vmatpush.bf16.msra.mxu0 %v2234
  %2292 = vmatpush.bf16.msra.mxu0 %v2233
  %2293 = vmatpush.bf16.msra.mxu0 %v2232
  %2294 = vmatpush.bf16.msra.mxu0 %v2231
  %2295 = vmatpush.bf16.msra.mxu0 %v2230
  %2296 = vmatpush.bf16.msra.mxu0 %v2229
  %2297 = vmatpush.bf16.msra.mxu0 %v2228
  %2298 = vmatpush.bf16.msra.mxu0 %v2227
  %2299 = vmatmul.bf16.gmra.mxu0 %v2027
  %v2300 = vpop.f32.mrf.mxu0
  %v2301 = vadd.f32 %v2097, %v2300
  %v2302 = vpop.f32.mrf.mxu0
  %v2303 = vadd.f32 %v2097, %v2302
  %2304 = vdwg.mxu0
  %2305 = vmatpush.bf16.msra.mxu0 %v2242
  %2306 = vmatpush.bf16.msra.mxu0 %v2241
  %2307 = vmatpush.bf16.msra.mxu0 %v2240
  %2308 = vmatpush.bf16.msra.mxu0 %v2239
  %2309 = vmatpush.bf16.msra.mxu0 %v2238
  %2310 = vmatpush.bf16.msra.mxu0 %v2237
  %2311 = vmatpush.bf16.msra.mxu0 %v2236
  %2312 = vmatpush.bf16.msra.mxu0 %v2235
  %2313 = vmatmul.bf16.gmra.mxu0 %v2028
  %v2314 = vpop.f32.mrf.mxu0
  %v2315 = vadd.f32 %v2301, %v2314
  %v2316 = vpop.f32.mrf.mxu0
  %v2317 = vadd.f32 %v2303, %v2316
  %2318 = vdwg.mxu0
  %2319 = vmatpush.bf16.msra.mxu0 %v2250
  %2320 = vmatpush.bf16.msra.mxu0 %v2249
  %2321 = vmatpush.bf16.msra.mxu0 %v2248
  %2322 = vmatpush.bf16.msra.mxu0 %v2247
  %2323 = vmatpush.bf16.msra.mxu0 %v2246
  %2324 = vmatpush.bf16.msra.mxu0 %v2245
  %2325 = vmatpush.bf16.msra.mxu0 %v2244
  %2326 = vmatpush.bf16.msra.mxu0 %v2243
  %2327 = vmatmul.bf16.gmra.mxu0 %v2029
  %v2328 = vpop.f32.mrf.mxu0
  %v2329 = vadd.f32 %v2315, %v2328
  %v2330 = vpop.f32.mrf.mxu0
  %v2331 = vadd.f32 %v2317, %v2330
  %2332 = vdwg.mxu0
  %2333 = vmatpush.bf16.msra.mxu0 %v2258
  %2334 = vmatpush.bf16.msra.mxu0 %v2257
  %2335 = vmatpush.bf16.msra.mxu0 %v2256
  %2336 = vmatpush.bf16.msra.mxu0 %v2255
  %2337 = vmatpush.bf16.msra.mxu0 %v2254
  %2338 = vmatpush.bf16.msra.mxu0 %v2253
  %2339 = vmatpush.bf16.msra.mxu0 %v2252
  %2340 = vmatpush.bf16.msra.mxu0 %v2251
  %2341 = vmatmul.bf16.gmra.mxu0 %v2030
  %v2342 = vpop.f32.mrf.mxu0
  %v2343 = vadd.f32 %v2329, %v2342
  %v2344 = vpop.f32.mrf.mxu0
  %v2345 = vadd.f32 %v2331, %v2344
  %2346 = vdwg.mxu0
  %2347 = vmax.xlane.f32.xlu0 %v2343
  %v2348 = vpop.xlane.xlu0 %2347
  %2349 = vmax.xlane.f32.xlu0 %v2345
  %v2350 = vpop.xlane.xlu0 %2349
  %v2351 = vsub.f32 %v2343, %v2348
  %v2352 = vsub.f32 %v2345, %v2350
  %v2353 = vmul.f32 %v2351, 1.442695
  %v2354 = vpow.pop %v2353
  %v2355 = vmul.f32 %v2352, 1.442695
  %v2356 = vpow.pop %v2355
  %2357 = vadd.xlane.f32.xlu0 %v2354
  %v2358 = vpop.xlane.xlu0 %2357
  %2359 = vadd.xlane.f32.xlu0 %v2356
  %v2360 = vpop.xlane.xlu0 %2359
  %v2361 = vlog2.pop %v2358
  %v2362 = vmul.f32 %v2361, 0.6931472
  %v2363 = vlog2.pop %v2360
  %v2364 = vmul.f32 %v2363, 0.6931472
  %v2365 = vsub.f32 %v2351, %v2362
  %v2366 = vsub.f32 %v2352, %v2364
  %2367 = vst [vmem:[%s5] sm:$0xff] %v2365
  %2368 = vst [vmem:[%s5 + $0x8] sm:$0xff] %v2366
  // Predicated region
  $region22: #{net_forward.5} parent=0 // pred_check
    _
  $region23: #{net_forward.5} parent=0 // pred_check_branch
    %2370 = sbr.rel (0) target = $region25
  $region24: #{net_forward.5} parent=0 // pred_region
    _
  $region25: #{net_forward.5} parent=0 // pred_fallthru
    _
  // Predicated region
  $region26: #{net_forward.5} parent=0 // pred_check
    _
  $region27: #{net_forward.5} parent=0 // pred_check_branch
    %2372 = sbr.rel (0) target = $region29
  $region28: #{net_forward.5} parent=0 // pred_region
    _
  $region29: #{net_forward.5} parent=0 // pred_fallthru
    _

</llo_original>
